<compile_context>
chip_gen: v7x
topology: tpu7x:2x2x1
jax: 0.10.0
libtpu: 0.0.40
codegen_flags: <defaults>
</compile_context>

<pallas_src>
import jax
import jax.numpy as jnp
from jax.experimental import pallas as pl
from jax.experimental.pallas import tpu as pltpu

N_DIM = 3          # input / output feature dim
L_DIM = 10         # transformer d_model
HIDDEN = 32        # dim_feedforward (module default 300; small test size)
NUM_LAYERS = 3
NUM_HEADS = 1      # single head -> head_dim == L_DIM
LN_EPS = 1e-5
NEG_INF = -1e30


def _layernorm(x, w, b):
    mu = jnp.mean(x, axis=-1, keepdims=True)
    var = jnp.mean((x - mu) ** 2, axis=-1, keepdims=True)
    return (x - mu) * jax.lax.rsqrt(var + LN_EPS) * w + b


def _leaky_relu(x, slope):
    return jnp.where(x >= 0, x, slope * x)


def gen_kernel(x_ref, kb_ref,
               emb_wt_ref, emb_b_ref,
               ipw_t_ref, ipb_ref, opw_t_ref, opb_ref,
               l1w_t_ref, l1b_ref, l2w_t_ref, l2b_ref,
               n1w_ref, n1b_ref, n2w_ref, n2b_ref,
               o2w_t_ref, o2b_ref, out_ref):
    B, S, _ = x_ref.shape
    d = L_DIM
    BS = B * S

    key_bias = kb_ref[...]                            # (B, 1, S), 0 / -1e30
    x = x_ref[...].reshape(BS, N_DIM)                 # whole-batch token slab

    # embedding: Linear(n_dim -> l_dim) over all B*S tokens in one matmul
    h = jnp.dot(x, emb_wt_ref[...],
                preferred_element_type=jnp.float32) + emb_b_ref[...]

    scale = 1.0 / jnp.sqrt(jnp.float32(d // NUM_HEADS))
    for l in range(NUM_LAYERS):
        # --- self-attention block (single head), post-norm encoder layer ---
        # fused QKV projection: one MXU push per layer
        qkv = jnp.dot(h, ipw_t_ref[l],
                      preferred_element_type=jnp.float32) + ipb_ref[l]
        q = (qkv[:, 0:d] * scale).reshape(B, S, d)
        k = qkv[:, d:2 * d].reshape(B, S, d)
        v = qkv[:, 2 * d:3 * d].reshape(B, S, d)

        scores = jnp.einsum('bqd,bkd->bqk', q, k,
                            preferred_element_type=jnp.float32) + key_bias
        scores = scores - jnp.max(scores, axis=-1, keepdims=True)
        e = jnp.exp(scores)
        p = e * pl.reciprocal(jnp.sum(e, axis=-1, keepdims=True), approx=True)
        attn = jnp.einsum('bqk,bkd->bqd', p, v,
                          preferred_element_type=jnp.float32).reshape(BS, d)
        attn = jnp.dot(attn, opw_t_ref[l],
                       preferred_element_type=jnp.float32) + opb_ref[l]

        h = _layernorm(h + attn, n1w_ref[l], n1b_ref[l])

        # --- feed-forward block with leaky_relu(0.2) activation ---
        ff = jnp.dot(h, l1w_t_ref[l],
                     preferred_element_type=jnp.float32) + l1b_ref[l]
        ff = _leaky_relu(ff, 0.2)
        ff = jnp.dot(ff, l2w_t_ref[l],
                     preferred_element_type=jnp.float32) + l2b_ref[l]

        h = _layernorm(h + ff, n2w_ref[l], n2b_ref[l])

    # no_hidden_gen == True path: out2 = Linear(l_dim -> n_dim)
    out = jnp.dot(h, o2w_t_ref[...],
                  preferred_element_type=jnp.float32) + o2b_ref[...]
    out_ref[...] = out.reshape(B, S, N_DIM)           # single whole-array store


def gen_forward(x, mask, params):
    """x: (B, S, n_dim) float32; mask: (B, S) bool (True = padded position)."""
    B, S, _ = x.shape
    nl = NUM_LAYERS

    # Precompute additive key-padding bias in the wrapper.
    key_bias = jnp.where(mask, jnp.float32(NEG_INF),
                         jnp.float32(0.0)).reshape(B, 1, S)

    # Layout plumbing in the wrapper: pre-transpose all weights to (in, out),
    # keep QKV fused as (l_dim, 3*l_dim), reshape biases / LN params to
    # broadcastable stacks.  The kernel then never transposes or slices weights
    # at unaligned sublane offsets.
    plist = [
        params["emb_w"].T,                              # (n_dim, l_dim)
        params["emb_b"].reshape(1, L_DIM),
        jnp.transpose(params["ipw"], (0, 2, 1)),        # (L, l_dim, 3*l_dim)
        params["ipb"].reshape(nl, 1, 3 * L_DIM),
        jnp.transpose(params["opw"], (0, 2, 1)),        # (L, l_dim, l_dim)
        params["opb"].reshape(nl, 1, L_DIM),
        jnp.transpose(params["l1w"], (0, 2, 1)),        # (L, l_dim, hidden)
        params["l1b"].reshape(nl, 1, HIDDEN),
        jnp.transpose(params["l2w"], (0, 2, 1)),        # (L, hidden, l_dim)
        params["l2b"].reshape(nl, 1, L_DIM),
        params["n1w"].reshape(nl, 1, L_DIM),
        params["n1b"].reshape(nl, 1, L_DIM),
        params["n2w"].reshape(nl, 1, L_DIM),
        params["n2b"].reshape(nl, 1, L_DIM),
        params["o2w"].T,                                # (l_dim, n_dim)
        params["o2b"].reshape(1, N_DIM),
    ]

    vmem_spec = pl.BlockSpec(memory_space=pltpu.MemorySpace.VMEM)
    n_inputs = 2 + len(plist)

    # Single kernel invocation, no grid: everything (a few KiB) lives in VMEM.
    return pl.pallas_call(
        gen_kernel,
        out_shape=jax.ShapeDtypeStruct((B, S, N_DIM), jnp.float32),
        in_specs=[vmem_spec] * n_inputs,
        out_specs=vmem_spec,
    )(x.astype(jnp.float32), key_bias, *plist)


def init_params(key):
    """PyTorch-style parameter shapes: Linear weights are (out_features, in_features)."""
    def lin(k, out_f, in_f):
        bound = 1.0 / float(in_f) ** 0.5
        kw, kb = jax.random.split(k)
        w = jax.random.uniform(kw, (out_f, in_f), jnp.float32, -bound, bound)
        b = jax.random.uniform(kb, (out_f,), jnp.float32, -bound, bound)
        return w, b

    k_emb, k_layers, k_out2 = jax.random.split(key, 3)
    emb_w, emb_b = lin(k_emb, L_DIM, N_DIM)
    o2w, o2b = lin(k_out2, N_DIM, L_DIM)

    stacks = {n: [] for n in ("ipw", "ipb", "opw", "opb",
                              "l1w", "l1b", "l2w", "l2b",
                              "n1w", "n1b", "n2w", "n2b")}
    for lk in jax.random.split(k_layers, NUM_LAYERS):
        k1, k2, k3, k4 = jax.random.split(lk, 4)
        ipw, ipb = lin(k1, 3 * L_DIM, L_DIM)
        opw, opb = lin(k2, L_DIM, L_DIM)
        l1w, l1b = lin(k3, HIDDEN, L_DIM)
        l2w, l2b = lin(k4, L_DIM, HIDDEN)
        n1w, n1b = jnp.ones((L_DIM,), jnp.float32), jnp.zeros((L_DIM,), jnp.float32)
        n2w, n2b = jnp.ones((L_DIM,), jnp.float32), jnp.zeros((L_DIM,), jnp.float32)
        for name, val in (("ipw", ipw), ("ipb", ipb), ("opw", opw), ("opb", opb),
                          ("l1w", l1w), ("l1b", l1b), ("l2w", l2w), ("l2b", l2b),
                          ("n1w", n1w), ("n1b", n1b), ("n2w", n2w), ("n2b", n2b)):
            stacks[name].append(val)

    params = {n: jnp.stack(v) for n, v in stacks.items()}
    params["emb_w"] = emb_w
    params["emb_b"] = emb_b
    params["o2w"] = o2w
    params["o2b"] = o2b
    return params


if __name__ == "__main__":
    B, S = 2, 8
    key = jax.random.PRNGKey(0)
    k_x, k_p = jax.random.split(key)

    x = jax.random.normal(k_x, (B, S, N_DIM), jnp.float32)
    # key padding mask: True = padded position (last two tokens of each sequence)
    mask = jnp.zeros((B, S), jnp.bool_).at[:, S - 2:].set(True)

    params = init_params(k_p)
    out = gen_forward(x, mask, params)
    out = jax.block_until_ready(out)
    assert out.shape == (B, S, N_DIM)
    assert bool(jnp.all(jnp.isfinite(out)))
    print("KERNEL_OK")
</pallas_src>

<mosaic_0001>
module attributes {stable_mosaic.version = 11 : i64} {
  func.func @gen_kernel(%arg0: memref<2x8x3xf32, #tpu.memory_space<vmem>>, %arg1: memref<2x1x8xf32, #tpu.memory_space<vmem>>, %arg2: memref<3x10xf32, #tpu.memory_space<vmem>>, %arg3: memref<1x10xf32, #tpu.memory_space<vmem>>, %arg4: memref<3x10x30xf32, #tpu.memory_space<vmem>>, %arg5: memref<3x1x30xf32, #tpu.memory_space<vmem>>, %arg6: memref<3x10x10xf32, #tpu.memory_space<vmem>>, %arg7: memref<3x1x10xf32, #tpu.memory_space<vmem>>, %arg8: memref<3x10x32xf32, #tpu.memory_space<vmem>>, %arg9: memref<3x1x32xf32, #tpu.memory_space<vmem>>, %arg10: memref<3x32x10xf32, #tpu.memory_space<vmem>>, %arg11: memref<3x1x10xf32, #tpu.memory_space<vmem>>, %arg12: memref<3x1x10xf32, #tpu.memory_space<vmem>>, %arg13: memref<3x1x10xf32, #tpu.memory_space<vmem>>, %arg14: memref<3x1x10xf32, #tpu.memory_space<vmem>>, %arg15: memref<3x1x10xf32, #tpu.memory_space<vmem>>, %arg16: memref<10x3xf32, #tpu.memory_space<vmem>>, %arg17: memref<1x3xf32, #tpu.memory_space<vmem>>, %arg18: memref<2x8x3xf32, #tpu.memory_space<vmem>>) attributes {dimension_semantics = [], scalar_prefetch = 0 : i64, scratch_operands = 0 : i64, tpu.core_type = #tpu.core_type<tc>} {
    %c0 = arith.constant 0 : index
    %c0_0 = arith.constant 0 : index
    %c0_1 = arith.constant 0 : index
    %0 = vector.load %arg1[%c0, %c0_0, %c0_1] : memref<2x1x8xf32, #tpu.memory_space<vmem>>, vector<2x1x8xf32>
    %c0_2 = arith.constant 0 : index
    %c0_3 = arith.constant 0 : index
    %c0_4 = arith.constant 0 : index
    %1 = vector.load %arg0[%c0_2, %c0_3, %c0_4] : memref<2x8x3xf32, #tpu.memory_space<vmem>>, vector<2x8x3xf32>
    %2 = vector.shape_cast %1 : vector<2x8x3xf32> to vector<16x3xf32>
    %c0_5 = arith.constant 0 : index
    %c0_6 = arith.constant 0 : index
    %3 = vector.load %arg2[%c0_5, %c0_6] : memref<3x10xf32, #tpu.memory_space<vmem>>, vector<3x10xf32>
    %cst = arith.constant dense<0.000000e+00> : vector<16x10xf32>
    %4 = tpu.matmul %2, %3, %cst {dimension_numbers = #tpu.dot_dimension_numbers<[1], [0], [0], [1], [0, 0, 1, 1], [], []>} : vector<16x3xf32>, vector<3x10xf32>, vector<16x10xf32> -> vector<16x10xf32>
    %c0_7 = arith.constant 0 : index
    %c0_8 = arith.constant 0 : index
    %5 = vector.load %arg3[%c0_7, %c0_8] : memref<1x10xf32, #tpu.memory_space<vmem>>, vector<1x10xf32>
    %6 = vector.broadcast %5 : vector<1x10xf32> to vector<16x10xf32>
    %7 = arith.addf %4, %6 : vector<16x10xf32>
    %cst_9 = arith.constant 1.000000e+01 : f32
    %8 = math.sqrt %cst_9 : f32
    %cst_10 = arith.constant 1.000000e+00 : f32
    %9 = arith.divf %cst_10, %8 : f32
    %c0_11 = arith.constant 0 : index
    %c0_12 = arith.constant 0 : index
    %c0_13 = arith.constant 0 : index
    %10 = vector.load %arg4[%c0_11, %c0_12, %c0_13] : memref<3x10x30xf32, #tpu.memory_space<vmem>>, vector<1x10x30xf32>
    %11 = vector.shape_cast %10 : vector<1x10x30xf32> to vector<10x30xf32>
    %cst_14 = arith.constant dense<0.000000e+00> : vector<16x30xf32>
    %12 = tpu.matmul %7, %11, %cst_14 {dimension_numbers = #tpu.dot_dimension_numbers<[1], [0], [0], [1], [0, 0, 1, 1], [], []>} : vector<16x10xf32>, vector<10x30xf32>, vector<16x30xf32> -> vector<16x30xf32>
    %c0_15 = arith.constant 0 : index
    %c0_16 = arith.constant 0 : index
    %c0_17 = arith.constant 0 : index
    %13 = vector.load %arg5[%c0_15, %c0_16, %c0_17] : memref<3x1x30xf32, #tpu.memory_space<vmem>>, vector<1x1x30xf32>
    %14 = vector.shape_cast %13 : vector<1x1x30xf32> to vector<1x30xf32>
    %15 = vector.broadcast %14 : vector<1x30xf32> to vector<16x30xf32>
    %16 = arith.addf %12, %15 : vector<16x30xf32>
    %17 = vector.extract_strided_slice %16 {offsets = [0, 0], sizes = [16, 10], strides = [1, 1]} : vector<16x30xf32> to vector<16x10xf32>
    %18 = vector.broadcast %9 : f32 to vector<16x10xf32>
    %19 = arith.mulf %17, %18 : vector<16x10xf32>
    %20 = vector.shape_cast %19 : vector<16x10xf32> to vector<2x8x10xf32>
    %21 = vector.extract_strided_slice %16 {offsets = [0, 10], sizes = [16, 10], strides = [1, 1]} : vector<16x30xf32> to vector<16x10xf32>
    %22 = vector.shape_cast %21 : vector<16x10xf32> to vector<2x8x10xf32>
    %23 = vector.extract_strided_slice %16 {offsets = [0, 20], sizes = [16, 10], strides = [1, 1]} : vector<16x30xf32> to vector<16x10xf32>
    %24 = vector.shape_cast %23 : vector<16x10xf32> to vector<2x8x10xf32>
    "tpu.trace_start"() <{level = 10 : i32, message = "bqd,bkd->bqk"}> : () -> ()
    %cst_18 = arith.constant dense<0.000000e+00> : vector<2x8x8xf32>
    %25 = tpu.matmul %20, %22, %cst_18 {dimension_numbers = #tpu.dot_dimension_numbers<[2], [2], [1], [1], [0, 0, 0, 1, 1, 1], [0], [0]>} : vector<2x8x10xf32>, vector<2x8x10xf32>, vector<2x8x8xf32> -> vector<2x8x8xf32>
    "tpu.trace_stop"() : () -> ()
    %26 = vector.broadcast %0 : vector<2x1x8xf32> to vector<2x8x8xf32>
    %27 = arith.addf %25, %26 : vector<2x8x8xf32>
    %cst_19 = arith.constant dense<0xFF800000> : vector<2x8xf32>
    %28 = vector.multi_reduction <maximumf>, %27, %cst_19 [2] : vector<2x8x8xf32> to vector<2x8xf32>
    %29 = vector.shape_cast %28 : vector<2x8xf32> to vector<2x8x1xf32>
    %30 = vector.broadcast %29 : vector<2x8x1xf32> to vector<2x8x8xf32>
    %31 = arith.subf %27, %30 : vector<2x8x8xf32>
    %32 = math.exp %31 : vector<2x8x8xf32>
    %cst_20 = arith.constant dense<0.000000e+00> : vector<2x8xf32>
    %33 = vector.multi_reduction <add>, %32, %cst_20 [2] : vector<2x8x8xf32> to vector<2x8xf32>
    %34 = vector.shape_cast %33 : vector<2x8xf32> to vector<2x8x1xf32>
    %35 = tpu.reciprocal %34 {approx = true} : vector<2x8x1xf32> -> vector<2x8x1xf32>
    %36 = vector.broadcast %35 : vector<2x8x1xf32> to vector<2x8x8xf32>
    %37 = arith.mulf %32, %36 : vector<2x8x8xf32>
    "tpu.trace_start"() <{level = 10 : i32, message = "bqk,bkd->bqd"}> : () -> ()
    %cst_21 = arith.constant dense<0.000000e+00> : vector<2x8x10xf32>
    %38 = tpu.matmul %37, %24, %cst_21 {dimension_numbers = #tpu.dot_dimension_numbers<[2], [1], [1], [2], [0, 0, 0, 1, 1, 2], [0], [0]>} : vector<2x8x8xf32>, vector<2x8x10xf32>, vector<2x8x10xf32> -> vector<2x8x10xf32>
    "tpu.trace_stop"() : () -> ()
    %39 = vector.shape_cast %38 : vector<2x8x10xf32> to vector<16x10xf32>
    %c0_22 = arith.constant 0 : index
    %c0_23 = arith.constant 0 : index
    %c0_24 = arith.constant 0 : index
    %40 = vector.load %arg6[%c0_22, %c0_23, %c0_24] : memref<3x10x10xf32, #tpu.memory_space<vmem>>, vector<1x10x10xf32>
    %41 = vector.shape_cast %40 : vector<1x10x10xf32> to vector<10x10xf32>
    %cst_25 = arith.constant dense<0.000000e+00> : vector<16x10xf32>
    %42 = tpu.matmul %39, %41, %cst_25 {dimension_numbers = #tpu.dot_dimension_numbers<[1], [0], [0], [1], [0, 0, 1, 1], [], []>} : vector<16x10xf32>, vector<10x10xf32>, vector<16x10xf32> -> vector<16x10xf32>
    %c0_26 = arith.constant 0 : index
    %c0_27 = arith.constant 0 : index
    %c0_28 = arith.constant 0 : index
    %43 = vector.load %arg7[%c0_26, %c0_27, %c0_28] : memref<3x1x10xf32, #tpu.memory_space<vmem>>, vector<1x1x10xf32>
    %44 = vector.shape_cast %43 : vector<1x1x10xf32> to vector<1x10xf32>
    %45 = vector.broadcast %44 : vector<1x10xf32> to vector<16x10xf32>
    %46 = arith.addf %42, %45 : vector<16x10xf32>
    %47 = arith.addf %7, %46 : vector<16x10xf32>
    %c0_29 = arith.constant 0 : index
    %c0_30 = arith.constant 0 : index
    %c0_31 = arith.constant 0 : index
    %48 = vector.load %arg12[%c0_29, %c0_30, %c0_31] : memref<3x1x10xf32, #tpu.memory_space<vmem>>, vector<1x1x10xf32>
    %49 = vector.shape_cast %48 : vector<1x1x10xf32> to vector<1x10xf32>
    %c0_32 = arith.constant 0 : index
    %c0_33 = arith.constant 0 : index
    %c0_34 = arith.constant 0 : index
    %50 = vector.load %arg13[%c0_32, %c0_33, %c0_34] : memref<3x1x10xf32, #tpu.memory_space<vmem>>, vector<1x1x10xf32>
    %51 = vector.shape_cast %50 : vector<1x1x10xf32> to vector<1x10xf32>
    %cst_35 = arith.constant dense<0.000000e+00> : vector<16xf32>
    %52 = vector.multi_reduction <add>, %47, %cst_35 [1] : vector<16x10xf32> to vector<16xf32>
    %53 = vector.shape_cast %52 : vector<16xf32> to vector<16x1xf32>
    %cst_36 = arith.constant 1.000000e+01 : f32
    %54 = vector.broadcast %cst_36 : f32 to vector<16x1xf32>
    %55 = arith.divf %53, %54 : vector<16x1xf32>
    %56 = vector.broadcast %55 : vector<16x1xf32> to vector<16x10xf32>
    %57 = arith.subf %47, %56 : vector<16x10xf32>
    %58 = arith.mulf %57, %57 : vector<16x10xf32>
    %cst_37 = arith.constant dense<0.000000e+00> : vector<16xf32>
    %59 = vector.multi_reduction <add>, %58, %cst_37 [1] : vector<16x10xf32> to vector<16xf32>
    %60 = vector.shape_cast %59 : vector<16xf32> to vector<16x1xf32>
    %cst_38 = arith.constant 1.000000e+01 : f32
    %61 = vector.broadcast %cst_38 : f32 to vector<16x1xf32>
    %62 = arith.divf %60, %61 : vector<16x1xf32>
    %63 = vector.broadcast %55 : vector<16x1xf32> to vector<16x10xf32>
    %64 = arith.subf %47, %63 : vector<16x10xf32>
    %cst_39 = arith.constant 9.99999974E-6 : f32
    %65 = vector.broadcast %cst_39 : f32 to vector<16x1xf32>
    %66 = arith.addf %62, %65 : vector<16x1xf32>
    %67 = math.rsqrt %66 : vector<16x1xf32>
    %68 = vector.broadcast %67 : vector<16x1xf32> to vector<16x10xf32>
    %69 = arith.mulf %64, %68 : vector<16x10xf32>
    %70 = vector.broadcast %49 : vector<1x10xf32> to vector<16x10xf32>
    %71 = arith.mulf %69, %70 : vector<16x10xf32>
    %72 = vector.broadcast %51 : vector<1x10xf32> to vector<16x10xf32>
    %73 = arith.addf %71, %72 : vector<16x10xf32>
    %c0_40 = arith.constant 0 : index
    %c0_41 = arith.constant 0 : index
    %c0_42 = arith.constant 0 : index
    %74 = vector.load %arg8[%c0_40, %c0_41, %c0_42] : memref<3x10x32xf32, #tpu.memory_space<vmem>>, vector<1x10x32xf32>
    %75 = vector.shape_cast %74 : vector<1x10x32xf32> to vector<10x32xf32>
    %cst_43 = arith.constant dense<0.000000e+00> : vector<16x32xf32>
    %76 = tpu.matmul %73, %75, %cst_43 {dimension_numbers = #tpu.dot_dimension_numbers<[1], [0], [0], [1], [0, 0, 1, 1], [], []>} : vector<16x10xf32>, vector<10x32xf32>, vector<16x32xf32> -> vector<16x32xf32>
    %c0_44 = arith.constant 0 : index
    %c0_45 = arith.constant 0 : index
    %c0_46 = arith.constant 0 : index
    %77 = vector.load %arg9[%c0_44, %c0_45, %c0_46] : memref<3x1x32xf32, #tpu.memory_space<vmem>>, vector<1x1x32xf32>
    %78 = vector.shape_cast %77 : vector<1x1x32xf32> to vector<1x32xf32>
    %79 = vector.broadcast %78 : vector<1x32xf32> to vector<16x32xf32>
    %80 = arith.addf %76, %79 : vector<16x32xf32>
    %cst_47 = arith.constant 0.000000e+00 : f32
    %81 = vector.broadcast %cst_47 : f32 to vector<16x32xf32>
    %82 = arith.cmpf oge, %80, %81 : vector<16x32xf32>
    %cst_48 = arith.constant 2.000000e-01 : f32
    %83 = vector.broadcast %cst_48 : f32 to vector<16x32xf32>
    %84 = arith.mulf %83, %80 : vector<16x32xf32>
    %85 = arith.select %82, %80, %84 : vector<16x32xi1>, vector<16x32xf32>
    %c0_49 = arith.constant 0 : index
    %c0_50 = arith.constant 0 : index
    %c0_51 = arith.constant 0 : index
    %86 = vector.load %arg10[%c0_49, %c0_50, %c0_51] : memref<3x32x10xf32, #tpu.memory_space<vmem>>, vector<1x32x10xf32>
    %87 = vector.shape_cast %86 : vector<1x32x10xf32> to vector<32x10xf32>
    %cst_52 = arith.constant dense<0.000000e+00> : vector<16x10xf32>
    %88 = tpu.matmul %85, %87, %cst_52 {dimension_numbers = #tpu.dot_dimension_numbers<[1], [0], [0], [1], [0, 0, 1, 1], [], []>} : vector<16x32xf32>, vector<32x10xf32>, vector<16x10xf32> -> vector<16x10xf32>
    %c0_53 = arith.constant 0 : index
    %c0_54 = arith.constant 0 : index
    %c0_55 = arith.constant 0 : index
    %89 = vector.load %arg11[%c0_53, %c0_54, %c0_55] : memref<3x1x10xf32, #tpu.memory_space<vmem>>, vector<1x1x10xf32>
    %90 = vector.shape_cast %89 : vector<1x1x10xf32> to vector<1x10xf32>
    %91 = vector.broadcast %90 : vector<1x10xf32> to vector<16x10xf32>
    %92 = arith.addf %88, %91 : vector<16x10xf32>
    %93 = arith.addf %73, %92 : vector<16x10xf32>
    %c0_56 = arith.constant 0 : index
    %c0_57 = arith.constant 0 : index
    %c0_58 = arith.constant 0 : index
    %94 = vector.load %arg14[%c0_56, %c0_57, %c0_58] : memref<3x1x10xf32, #tpu.memory_space<vmem>>, vector<1x1x10xf32>
    %95 = vector.shape_cast %94 : vector<1x1x10xf32> to vector<1x10xf32>
    %c0_59 = arith.constant 0 : index
    %c0_60 = arith.constant 0 : index
    %c0_61 = arith.constant 0 : index
    %96 = vector.load %arg15[%c0_59, %c0_60, %c0_61] : memref<3x1x10xf32, #tpu.memory_space<vmem>>, vector<1x1x10xf32>
    %97 = vector.shape_cast %96 : vector<1x1x10xf32> to vector<1x10xf32>
    %cst_62 = arith.constant dense<0.000000e+00> : vector<16xf32>
    %98 = vector.multi_reduction <add>, %93, %cst_62 [1] : vector<16x10xf32> to vector<16xf32>
    %99 = vector.shape_cast %98 : vector<16xf32> to vector<16x1xf32>
    %cst_63 = arith.constant 1.000000e+01 : f32
    %100 = vector.broadcast %cst_63 : f32 to vector<16x1xf32>
    %101 = arith.divf %99, %100 : vector<16x1xf32>
    %102 = vector.broadcast %101 : vector<16x1xf32> to vector<16x10xf32>
    %103 = arith.subf %93, %102 : vector<16x10xf32>
    %104 = arith.mulf %103, %103 : vector<16x10xf32>
    %cst_64 = arith.constant dense<0.000000e+00> : vector<16xf32>
    %105 = vector.multi_reduction <add>, %104, %cst_64 [1] : vector<16x10xf32> to vector<16xf32>
    %106 = vector.shape_cast %105 : vector<16xf32> to vector<16x1xf32>
    %cst_65 = arith.constant 1.000000e+01 : f32
    %107 = vector.broadcast %cst_65 : f32 to vector<16x1xf32>
    %108 = arith.divf %106, %107 : vector<16x1xf32>
    %109 = vector.broadcast %101 : vector<16x1xf32> to vector<16x10xf32>
    %110 = arith.subf %93, %109 : vector<16x10xf32>
    %cst_66 = arith.constant 9.99999974E-6 : f32
    %111 = vector.broadcast %cst_66 : f32 to vector<16x1xf32>
    %112 = arith.addf %108, %111 : vector<16x1xf32>
    %113 = math.rsqrt %112 : vector<16x1xf32>
    %114 = vector.broadcast %113 : vector<16x1xf32> to vector<16x10xf32>
    %115 = arith.mulf %110, %114 : vector<16x10xf32>
    %116 = vector.broadcast %95 : vector<1x10xf32> to vector<16x10xf32>
    %117 = arith.mulf %115, %116 : vector<16x10xf32>
    %118 = vector.broadcast %97 : vector<1x10xf32> to vector<16x10xf32>
    %119 = arith.addf %117, %118 : vector<16x10xf32>
    %c1 = arith.constant 1 : index
    %c0_67 = arith.constant 0 : index
    %c0_68 = arith.constant 0 : index
    %120 = vector.load %arg4[%c1, %c0_67, %c0_68] : memref<3x10x30xf32, #tpu.memory_space<vmem>>, vector<1x10x30xf32>
    %121 = vector.shape_cast %120 : vector<1x10x30xf32> to vector<10x30xf32>
    %cst_69 = arith.constant dense<0.000000e+00> : vector<16x30xf32>
    %122 = tpu.matmul %119, %121, %cst_69 {dimension_numbers = #tpu.dot_dimension_numbers<[1], [0], [0], [1], [0, 0, 1, 1], [], []>} : vector<16x10xf32>, vector<10x30xf32>, vector<16x30xf32> -> vector<16x30xf32>
    %c1_70 = arith.constant 1 : index
    %c0_71 = arith.constant 0 : index
    %c0_72 = arith.constant 0 : index
    %123 = vector.load %arg5[%c1_70, %c0_71, %c0_72] : memref<3x1x30xf32, #tpu.memory_space<vmem>>, vector<1x1x30xf32>
    %124 = vector.shape_cast %123 : vector<1x1x30xf32> to vector<1x30xf32>
    %125 = vector.broadcast %124 : vector<1x30xf32> to vector<16x30xf32>
    %126 = arith.addf %122, %125 : vector<16x30xf32>
    %127 = vector.extract_strided_slice %126 {offsets = [0, 0], sizes = [16, 10], strides = [1, 1]} : vector<16x30xf32> to vector<16x10xf32>
    %128 = vector.broadcast %9 : f32 to vector<16x10xf32>
    %129 = arith.mulf %127, %128 : vector<16x10xf32>
    %130 = vector.shape_cast %129 : vector<16x10xf32> to vector<2x8x10xf32>
    %131 = vector.extract_strided_slice %126 {offsets = [0, 10], sizes = [16, 10], strides = [1, 1]} : vector<16x30xf32> to vector<16x10xf32>
    %132 = vector.shape_cast %131 : vector<16x10xf32> to vector<2x8x10xf32>
    %133 = vector.extract_strided_slice %126 {offsets = [0, 20], sizes = [16, 10], strides = [1, 1]} : vector<16x30xf32> to vector<16x10xf32>
    %134 = vector.shape_cast %133 : vector<16x10xf32> to vector<2x8x10xf32>
    "tpu.trace_start"() <{level = 10 : i32, message = "bqd,bkd->bqk"}> : () -> ()
    %cst_73 = arith.constant dense<0.000000e+00> : vector<2x8x8xf32>
    %135 = tpu.matmul %130, %132, %cst_73 {dimension_numbers = #tpu.dot_dimension_numbers<[2], [2], [1], [1], [0, 0, 0, 1, 1, 1], [0], [0]>} : vector<2x8x10xf32>, vector<2x8x10xf32>, vector<2x8x8xf32> -> vector<2x8x8xf32>
    "tpu.trace_stop"() : () -> ()
    %136 = vector.broadcast %0 : vector<2x1x8xf32> to vector<2x8x8xf32>
    %137 = arith.addf %135, %136 : vector<2x8x8xf32>
    %cst_74 = arith.constant dense<0xFF800000> : vector<2x8xf32>
    %138 = vector.multi_reduction <maximumf>, %137, %cst_74 [2] : vector<2x8x8xf32> to vector<2x8xf32>
    %139 = vector.shape_cast %138 : vector<2x8xf32> to vector<2x8x1xf32>
    %140 = vector.broadcast %139 : vector<2x8x1xf32> to vector<2x8x8xf32>
    %141 = arith.subf %137, %140 : vector<2x8x8xf32>
    %142 = math.exp %141 : vector<2x8x8xf32>
    %cst_75 = arith.constant dense<0.000000e+00> : vector<2x8xf32>
    %143 = vector.multi_reduction <add>, %142, %cst_75 [2] : vector<2x8x8xf32> to vector<2x8xf32>
    %144 = vector.shape_cast %143 : vector<2x8xf32> to vector<2x8x1xf32>
    %145 = tpu.reciprocal %144 {approx = true} : vector<2x8x1xf32> -> vector<2x8x1xf32>
    %146 = vector.broadcast %145 : vector<2x8x1xf32> to vector<2x8x8xf32>
    %147 = arith.mulf %142, %146 : vector<2x8x8xf32>
    "tpu.trace_start"() <{level = 10 : i32, message = "bqk,bkd->bqd"}> : () -> ()
    %cst_76 = arith.constant dense<0.000000e+00> : vector<2x8x10xf32>
    %148 = tpu.matmul %147, %134, %cst_76 {dimension_numbers = #tpu.dot_dimension_numbers<[2], [1], [1], [2], [0, 0, 0, 1, 1, 2], [0], [0]>} : vector<2x8x8xf32>, vector<2x8x10xf32>, vector<2x8x10xf32> -> vector<2x8x10xf32>
    "tpu.trace_stop"() : () -> ()
    %149 = vector.shape_cast %148 : vector<2x8x10xf32> to vector<16x10xf32>
    %c1_77 = arith.constant 1 : index
    %c0_78 = arith.constant 0 : index
    %c0_79 = arith.constant 0 : index
    %150 = vector.load %arg6[%c1_77, %c0_78, %c0_79] : memref<3x10x10xf32, #tpu.memory_space<vmem>>, vector<1x10x10xf32>
    %151 = vector.shape_cast %150 : vector<1x10x10xf32> to vector<10x10xf32>
    %cst_80 = arith.constant dense<0.000000e+00> : vector<16x10xf32>
    %152 = tpu.matmul %149, %151, %cst_80 {dimension_numbers = #tpu.dot_dimension_numbers<[1], [0], [0], [1], [0, 0, 1, 1], [], []>} : vector<16x10xf32>, vector<10x10xf32>, vector<16x10xf32> -> vector<16x10xf32>
    %c1_81 = arith.constant 1 : index
    %c0_82 = arith.constant 0 : index
    %c0_83 = arith.constant 0 : index
    %153 = vector.load %arg7[%c1_81, %c0_82, %c0_83] : memref<3x1x10xf32, #tpu.memory_space<vmem>>, vector<1x1x10xf32>
    %154 = vector.shape_cast %153 : vector<1x1x10xf32> to vector<1x10xf32>
    %155 = vector.broadcast %154 : vector<1x10xf32> to vector<16x10xf32>
    %156 = arith.addf %152, %155 : vector<16x10xf32>
    %157 = arith.addf %119, %156 : vector<16x10xf32>
    %c1_84 = arith.constant 1 : index
    %c0_85 = arith.constant 0 : index
    %c0_86 = arith.constant 0 : index
    %158 = vector.load %arg12[%c1_84, %c0_85, %c0_86] : memref<3x1x10xf32, #tpu.memory_space<vmem>>, vector<1x1x10xf32>
    %159 = vector.shape_cast %158 : vector<1x1x10xf32> to vector<1x10xf32>
    %c1_87 = arith.constant 1 : index
    %c0_88 = arith.constant 0 : index
    %c0_89 = arith.constant 0 : index
    %160 = vector.load %arg13[%c1_87, %c0_88, %c0_89] : memref<3x1x10xf32, #tpu.memory_space<vmem>>, vector<1x1x10xf32>
    %161 = vector.shape_cast %160 : vector<1x1x10xf32> to vector<1x10xf32>
    %cst_90 = arith.constant dense<0.000000e+00> : vector<16xf32>
    %162 = vector.multi_reduction <add>, %157, %cst_90 [1] : vector<16x10xf32> to vector<16xf32>
    %163 = vector.shape_cast %162 : vector<16xf32> to vector<16x1xf32>
    %cst_91 = arith.constant 1.000000e+01 : f32
    %164 = vector.broadcast %cst_91 : f32 to vector<16x1xf32>
    %165 = arith.divf %163, %164 : vector<16x1xf32>
    %166 = vector.broadcast %165 : vector<16x1xf32> to vector<16x10xf32>
    %167 = arith.subf %157, %166 : vector<16x10xf32>
    %168 = arith.mulf %167, %167 : vector<16x10xf32>
    %cst_92 = arith.constant dense<0.000000e+00> : vector<16xf32>
    %169 = vector.multi_reduction <add>, %168, %cst_92 [1] : vector<16x10xf32> to vector<16xf32>
    %170 = vector.shape_cast %169 : vector<16xf32> to vector<16x1xf32>
    %cst_93 = arith.constant 1.000000e+01 : f32
    %171 = vector.broadcast %cst_93 : f32 to vector<16x1xf32>
    %172 = arith.divf %170, %171 : vector<16x1xf32>
    %173 = vector.broadcast %165 : vector<16x1xf32> to vector<16x10xf32>
    %174 = arith.subf %157, %173 : vector<16x10xf32>
    %cst_94 = arith.constant 9.99999974E-6 : f32
    %175 = vector.broadcast %cst_94 : f32 to vector<16x1xf32>
    %176 = arith.addf %172, %175 : vector<16x1xf32>
    %177 = math.rsqrt %176 : vector<16x1xf32>
    %178 = vector.broadcast %177 : vector<16x1xf32> to vector<16x10xf32>
    %179 = arith.mulf %174, %178 : vector<16x10xf32>
    %180 = vector.broadcast %159 : vector<1x10xf32> to vector<16x10xf32>
    %181 = arith.mulf %179, %180 : vector<16x10xf32>
    %182 = vector.broadcast %161 : vector<1x10xf32> to vector<16x10xf32>
    %183 = arith.addf %181, %182 : vector<16x10xf32>
    %c1_95 = arith.constant 1 : index
    %c0_96 = arith.constant 0 : index
    %c0_97 = arith.constant 0 : index
    %184 = vector.load %arg8[%c1_95, %c0_96, %c0_97] : memref<3x10x32xf32, #tpu.memory_space<vmem>>, vector<1x10x32xf32>
    %185 = vector.shape_cast %184 : vector<1x10x32xf32> to vector<10x32xf32>
    %cst_98 = arith.constant dense<0.000000e+00> : vector<16x32xf32>
    %186 = tpu.matmul %183, %185, %cst_98 {dimension_numbers = #tpu.dot_dimension_numbers<[1], [0], [0], [1], [0, 0, 1, 1], [], []>} : vector<16x10xf32>, vector<10x32xf32>, vector<16x32xf32> -> vector<16x32xf32>
    %c1_99 = arith.constant 1 : index
    %c0_100 = arith.constant 0 : index
    %c0_101 = arith.constant 0 : index
    %187 = vector.load %arg9[%c1_99, %c0_100, %c0_101] : memref<3x1x32xf32, #tpu.memory_space<vmem>>, vector<1x1x32xf32>
    %188 = vector.shape_cast %187 : vector<1x1x32xf32> to vector<1x32xf32>
    %189 = vector.broadcast %188 : vector<1x32xf32> to vector<16x32xf32>
    %190 = arith.addf %186, %189 : vector<16x32xf32>
    %cst_102 = arith.constant 0.000000e+00 : f32
    %191 = vector.broadcast %cst_102 : f32 to vector<16x32xf32>
    %192 = arith.cmpf oge, %190, %191 : vector<16x32xf32>
    %cst_103 = arith.constant 2.000000e-01 : f32
    %193 = vector.broadcast %cst_103 : f32 to vector<16x32xf32>
    %194 = arith.mulf %193, %190 : vector<16x32xf32>
    %195 = arith.select %192, %190, %194 : vector<16x32xi1>, vector<16x32xf32>
    %c1_104 = arith.constant 1 : index
    %c0_105 = arith.constant 0 : index
    %c0_106 = arith.constant 0 : index
    %196 = vector.load %arg10[%c1_104, %c0_105, %c0_106] : memref<3x32x10xf32, #tpu.memory_space<vmem>>, vector<1x32x10xf32>
    %197 = vector.shape_cast %196 : vector<1x32x10xf32> to vector<32x10xf32>
    %cst_107 = arith.constant dense<0.000000e+00> : vector<16x10xf32>
    %198 = tpu.matmul %195, %197, %cst_107 {dimension_numbers = #tpu.dot_dimension_numbers<[1], [0], [0], [1], [0, 0, 1, 1], [], []>} : vector<16x32xf32>, vector<32x10xf32>, vector<16x10xf32> -> vector<16x10xf32>
    %c1_108 = arith.constant 1 : index
    %c0_109 = arith.constant 0 : index
    %c0_110 = arith.constant 0 : index
    %199 = vector.load %arg11[%c1_108, %c0_109, %c0_110] : memref<3x1x10xf32, #tpu.memory_space<vmem>>, vector<1x1x10xf32>
    %200 = vector.shape_cast %199 : vector<1x1x10xf32> to vector<1x10xf32>
    %201 = vector.broadcast %200 : vector<1x10xf32> to vector<16x10xf32>
    %202 = arith.addf %198, %201 : vector<16x10xf32>
    %203 = arith.addf %183, %202 : vector<16x10xf32>
    %c1_111 = arith.constant 1 : index
    %c0_112 = arith.constant 0 : index
    %c0_113 = arith.constant 0 : index
    %204 = vector.load %arg14[%c1_111, %c0_112, %c0_113] : memref<3x1x10xf32, #tpu.memory_space<vmem>>, vector<1x1x10xf32>
    %205 = vector.shape_cast %204 : vector<1x1x10xf32> to vector<1x10xf32>
    %c1_114 = arith.constant 1 : index
    %c0_115 = arith.constant 0 : index
    %c0_116 = arith.constant 0 : index
    %206 = vector.load %arg15[%c1_114, %c0_115, %c0_116] : memref<3x1x10xf32, #tpu.memory_space<vmem>>, vector<1x1x10xf32>
    %207 = vector.shape_cast %206 : vector<1x1x10xf32> to vector<1x10xf32>
    %cst_117 = arith.constant dense<0.000000e+00> : vector<16xf32>
    %208 = vector.multi_reduction <add>, %203, %cst_117 [1] : vector<16x10xf32> to vector<16xf32>
    %209 = vector.shape_cast %208 : vector<16xf32> to vector<16x1xf32>
    %cst_118 = arith.constant 1.000000e+01 : f32
    %210 = vector.broadcast %cst_118 : f32 to vector<16x1xf32>
    %211 = arith.divf %209, %210 : vector<16x1xf32>
    %212 = vector.broadcast %211 : vector<16x1xf32> to vector<16x10xf32>
    %213 = arith.subf %203, %212 : vector<16x10xf32>
    %214 = arith.mulf %213, %213 : vector<16x10xf32>
    %cst_119 = arith.constant dense<0.000000e+00> : vector<16xf32>
    %215 = vector.multi_reduction <add>, %214, %cst_119 [1] : vector<16x10xf32> to vector<16xf32>
    %216 = vector.shape_cast %215 : vector<16xf32> to vector<16x1xf32>
    %cst_120 = arith.constant 1.000000e+01 : f32
    %217 = vector.broadcast %cst_120 : f32 to vector<16x1xf32>
    %218 = arith.divf %216, %217 : vector<16x1xf32>
    %219 = vector.broadcast %211 : vector<16x1xf32> to vector<16x10xf32>
    %220 = arith.subf %203, %219 : vector<16x10xf32>
    %cst_121 = arith.constant 9.99999974E-6 : f32
    %221 = vector.broadcast %cst_121 : f32 to vector<16x1xf32>
    %222 = arith.addf %218, %221 : vector<16x1xf32>
    %223 = math.rsqrt %222 : vector<16x1xf32>
    %224 = vector.broadcast %223 : vector<16x1xf32> to vector<16x10xf32>
    %225 = arith.mulf %220, %224 : vector<16x10xf32>
    %226 = vector.broadcast %205 : vector<1x10xf32> to vector<16x10xf32>
    %227 = arith.mulf %225, %226 : vector<16x10xf32>
    %228 = vector.broadcast %207 : vector<1x10xf32> to vector<16x10xf32>
    %229 = arith.addf %227, %228 : vector<16x10xf32>
    %c2 = arith.constant 2 : index
    %c0_122 = arith.constant 0 : index
    %c0_123 = arith.constant 0 : index
    %230 = vector.load %arg4[%c2, %c0_122, %c0_123] : memref<3x10x30xf32, #tpu.memory_space<vmem>>, vector<1x10x30xf32>
    %231 = vector.shape_cast %230 : vector<1x10x30xf32> to vector<10x30xf32>
    %cst_124 = arith.constant dense<0.000000e+00> : vector<16x30xf32>
    %232 = tpu.matmul %229, %231, %cst_124 {dimension_numbers = #tpu.dot_dimension_numbers<[1], [0], [0], [1], [0, 0, 1, 1], [], []>} : vector<16x10xf32>, vector<10x30xf32>, vector<16x30xf32> -> vector<16x30xf32>
    %c2_125 = arith.constant 2 : index
    %c0_126 = arith.constant 0 : index
    %c0_127 = arith.constant 0 : index
    %233 = vector.load %arg5[%c2_125, %c0_126, %c0_127] : memref<3x1x30xf32, #tpu.memory_space<vmem>>, vector<1x1x30xf32>
    %234 = vector.shape_cast %233 : vector<1x1x30xf32> to vector<1x30xf32>
    %235 = vector.broadcast %234 : vector<1x30xf32> to vector<16x30xf32>
    %236 = arith.addf %232, %235 : vector<16x30xf32>
    %237 = vector.extract_strided_slice %236 {offsets = [0, 0], sizes = [16, 10], strides = [1, 1]} : vector<16x30xf32> to vector<16x10xf32>
    %238 = vector.broadcast %9 : f32 to vector<16x10xf32>
    %239 = arith.mulf %237, %238 : vector<16x10xf32>
    %240 = vector.shape_cast %239 : vector<16x10xf32> to vector<2x8x10xf32>
    %241 = vector.extract_strided_slice %236 {offsets = [0, 10], sizes = [16, 10], strides = [1, 1]} : vector<16x30xf32> to vector<16x10xf32>
    %242 = vector.shape_cast %241 : vector<16x10xf32> to vector<2x8x10xf32>
    %243 = vector.extract_strided_slice %236 {offsets = [0, 20], sizes = [16, 10], strides = [1, 1]} : vector<16x30xf32> to vector<16x10xf32>
    %244 = vector.shape_cast %243 : vector<16x10xf32> to vector<2x8x10xf32>
    "tpu.trace_start"() <{level = 10 : i32, message = "bqd,bkd->bqk"}> : () -> ()
    %cst_128 = arith.constant dense<0.000000e+00> : vector<2x8x8xf32>
    %245 = tpu.matmul %240, %242, %cst_128 {dimension_numbers = #tpu.dot_dimension_numbers<[2], [2], [1], [1], [0, 0, 0, 1, 1, 1], [0], [0]>} : vector<2x8x10xf32>, vector<2x8x10xf32>, vector<2x8x8xf32> -> vector<2x8x8xf32>
    "tpu.trace_stop"() : () -> ()
    %246 = vector.broadcast %0 : vector<2x1x8xf32> to vector<2x8x8xf32>
    %247 = arith.addf %245, %246 : vector<2x8x8xf32>
    %cst_129 = arith.constant dense<0xFF800000> : vector<2x8xf32>
    %248 = vector.multi_reduction <maximumf>, %247, %cst_129 [2] : vector<2x8x8xf32> to vector<2x8xf32>
    %249 = vector.shape_cast %248 : vector<2x8xf32> to vector<2x8x1xf32>
    %250 = vector.broadcast %249 : vector<2x8x1xf32> to vector<2x8x8xf32>
    %251 = arith.subf %247, %250 : vector<2x8x8xf32>
    %252 = math.exp %251 : vector<2x8x8xf32>
    %cst_130 = arith.constant dense<0.000000e+00> : vector<2x8xf32>
    %253 = vector.multi_reduction <add>, %252, %cst_130 [2] : vector<2x8x8xf32> to vector<2x8xf32>
    %254 = vector.shape_cast %253 : vector<2x8xf32> to vector<2x8x1xf32>
    %255 = tpu.reciprocal %254 {approx = true} : vector<2x8x1xf32> -> vector<2x8x1xf32>
    %256 = vector.broadcast %255 : vector<2x8x1xf32> to vector<2x8x8xf32>
    %257 = arith.mulf %252, %256 : vector<2x8x8xf32>
    "tpu.trace_start"() <{level = 10 : i32, message = "bqk,bkd->bqd"}> : () -> ()
    %cst_131 = arith.constant dense<0.000000e+00> : vector<2x8x10xf32>
    %258 = tpu.matmul %257, %244, %cst_131 {dimension_numbers = #tpu.dot_dimension_numbers<[2], [1], [1], [2], [0, 0, 0, 1, 1, 2], [0], [0]>} : vector<2x8x8xf32>, vector<2x8x10xf32>, vector<2x8x10xf32> -> vector<2x8x10xf32>
    "tpu.trace_stop"() : () -> ()
    %259 = vector.shape_cast %258 : vector<2x8x10xf32> to vector<16x10xf32>
    %c2_132 = arith.constant 2 : index
    %c0_133 = arith.constant 0 : index
    %c0_134 = arith.constant 0 : index
    %260 = vector.load %arg6[%c2_132, %c0_133, %c0_134] : memref<3x10x10xf32, #tpu.memory_space<vmem>>, vector<1x10x10xf32>
    %261 = vector.shape_cast %260 : vector<1x10x10xf32> to vector<10x10xf32>
    %cst_135 = arith.constant dense<0.000000e+00> : vector<16x10xf32>
    %262 = tpu.matmul %259, %261, %cst_135 {dimension_numbers = #tpu.dot_dimension_numbers<[1], [0], [0], [1], [0, 0, 1, 1], [], []>} : vector<16x10xf32>, vector<10x10xf32>, vector<16x10xf32> -> vector<16x10xf32>
    %c2_136 = arith.constant 2 : index
    %c0_137 = arith.constant 0 : index
    %c0_138 = arith.constant 0 : index
    %263 = vector.load %arg7[%c2_136, %c0_137, %c0_138] : memref<3x1x10xf32, #tpu.memory_space<vmem>>, vector<1x1x10xf32>
    %264 = vector.shape_cast %263 : vector<1x1x10xf32> to vector<1x10xf32>
    %265 = vector.broadcast %264 : vector<1x10xf32> to vector<16x10xf32>
    %266 = arith.addf %262, %265 : vector<16x10xf32>
    %267 = arith.addf %229, %266 : vector<16x10xf32>
    %c2_139 = arith.constant 2 : index
    %c0_140 = arith.constant 0 : index
    %c0_141 = arith.constant 0 : index
    %268 = vector.load %arg12[%c2_139, %c0_140, %c0_141] : memref<3x1x10xf32, #tpu.memory_space<vmem>>, vector<1x1x10xf32>
    %269 = vector.shape_cast %268 : vector<1x1x10xf32> to vector<1x10xf32>
    %c2_142 = arith.constant 2 : index
    %c0_143 = arith.constant 0 : index
    %c0_144 = arith.constant 0 : index
    %270 = vector.load %arg13[%c2_142, %c0_143, %c0_144] : memref<3x1x10xf32, #tpu.memory_space<vmem>>, vector<1x1x10xf32>
    %271 = vector.shape_cast %270 : vector<1x1x10xf32> to vector<1x10xf32>
    %cst_145 = arith.constant dense<0.000000e+00> : vector<16xf32>
    %272 = vector.multi_reduction <add>, %267, %cst_145 [1] : vector<16x10xf32> to vector<16xf32>
    %273 = vector.shape_cast %272 : vector<16xf32> to vector<16x1xf32>
    %cst_146 = arith.constant 1.000000e+01 : f32
    %274 = vector.broadcast %cst_146 : f32 to vector<16x1xf32>
    %275 = arith.divf %273, %274 : vector<16x1xf32>
    %276 = vector.broadcast %275 : vector<16x1xf32> to vector<16x10xf32>
    %277 = arith.subf %267, %276 : vector<16x10xf32>
    %278 = arith.mulf %277, %277 : vector<16x10xf32>
    %cst_147 = arith.constant dense<0.000000e+00> : vector<16xf32>
    %279 = vector.multi_reduction <add>, %278, %cst_147 [1] : vector<16x10xf32> to vector<16xf32>
    %280 = vector.shape_cast %279 : vector<16xf32> to vector<16x1xf32>
    %cst_148 = arith.constant 1.000000e+01 : f32
    %281 = vector.broadcast %cst_148 : f32 to vector<16x1xf32>
    %282 = arith.divf %280, %281 : vector<16x1xf32>
    %283 = vector.broadcast %275 : vector<16x1xf32> to vector<16x10xf32>
    %284 = arith.subf %267, %283 : vector<16x10xf32>
    %cst_149 = arith.constant 9.99999974E-6 : f32
    %285 = vector.broadcast %cst_149 : f32 to vector<16x1xf32>
    %286 = arith.addf %282, %285 : vector<16x1xf32>
    %287 = math.rsqrt %286 : vector<16x1xf32>
    %288 = vector.broadcast %287 : vector<16x1xf32> to vector<16x10xf32>
    %289 = arith.mulf %284, %288 : vector<16x10xf32>
    %290 = vector.broadcast %269 : vector<1x10xf32> to vector<16x10xf32>
    %291 = arith.mulf %289, %290 : vector<16x10xf32>
    %292 = vector.broadcast %271 : vector<1x10xf32> to vector<16x10xf32>
    %293 = arith.addf %291, %292 : vector<16x10xf32>
    %c2_150 = arith.constant 2 : index
    %c0_151 = arith.constant 0 : index
    %c0_152 = arith.constant 0 : index
    %294 = vector.load %arg8[%c2_150, %c0_151, %c0_152] : memref<3x10x32xf32, #tpu.memory_space<vmem>>, vector<1x10x32xf32>
    %295 = vector.shape_cast %294 : vector<1x10x32xf32> to vector<10x32xf32>
    %cst_153 = arith.constant dense<0.000000e+00> : vector<16x32xf32>
    %296 = tpu.matmul %293, %295, %cst_153 {dimension_numbers = #tpu.dot_dimension_numbers<[1], [0], [0], [1], [0, 0, 1, 1], [], []>} : vector<16x10xf32>, vector<10x32xf32>, vector<16x32xf32> -> vector<16x32xf32>
    %c2_154 = arith.constant 2 : index
    %c0_155 = arith.constant 0 : index
    %c0_156 = arith.constant 0 : index
    %297 = vector.load %arg9[%c2_154, %c0_155, %c0_156] : memref<3x1x32xf32, #tpu.memory_space<vmem>>, vector<1x1x32xf32>
    %298 = vector.shape_cast %297 : vector<1x1x32xf32> to vector<1x32xf32>
    %299 = vector.broadcast %298 : vector<1x32xf32> to vector<16x32xf32>
    %300 = arith.addf %296, %299 : vector<16x32xf32>
    %cst_157 = arith.constant 0.000000e+00 : f32
    %301 = vector.broadcast %cst_157 : f32 to vector<16x32xf32>
    %302 = arith.cmpf oge, %300, %301 : vector<16x32xf32>
    %cst_158 = arith.constant 2.000000e-01 : f32
    %303 = vector.broadcast %cst_158 : f32 to vector<16x32xf32>
    %304 = arith.mulf %303, %300 : vector<16x32xf32>
    %305 = arith.select %302, %300, %304 : vector<16x32xi1>, vector<16x32xf32>
    %c2_159 = arith.constant 2 : index
    %c0_160 = arith.constant 0 : index
    %c0_161 = arith.constant 0 : index
    %306 = vector.load %arg10[%c2_159, %c0_160, %c0_161] : memref<3x32x10xf32, #tpu.memory_space<vmem>>, vector<1x32x10xf32>
    %307 = vector.shape_cast %306 : vector<1x32x10xf32> to vector<32x10xf32>
    %cst_162 = arith.constant dense<0.000000e+00> : vector<16x10xf32>
    %308 = tpu.matmul %305, %307, %cst_162 {dimension_numbers = #tpu.dot_dimension_numbers<[1], [0], [0], [1], [0, 0, 1, 1], [], []>} : vector<16x32xf32>, vector<32x10xf32>, vector<16x10xf32> -> vector<16x10xf32>
    %c2_163 = arith.constant 2 : index
    %c0_164 = arith.constant 0 : index
    %c0_165 = arith.constant 0 : index
    %309 = vector.load %arg11[%c2_163, %c0_164, %c0_165] : memref<3x1x10xf32, #tpu.memory_space<vmem>>, vector<1x1x10xf32>
    %310 = vector.shape_cast %309 : vector<1x1x10xf32> to vector<1x10xf32>
    %311 = vector.broadcast %310 : vector<1x10xf32> to vector<16x10xf32>
    %312 = arith.addf %308, %311 : vector<16x10xf32>
    %313 = arith.addf %293, %312 : vector<16x10xf32>
    %c2_166 = arith.constant 2 : index
    %c0_167 = arith.constant 0 : index
    %c0_168 = arith.constant 0 : index
    %314 = vector.load %arg14[%c2_166, %c0_167, %c0_168] : memref<3x1x10xf32, #tpu.memory_space<vmem>>, vector<1x1x10xf32>
    %315 = vector.shape_cast %314 : vector<1x1x10xf32> to vector<1x10xf32>
    %c2_169 = arith.constant 2 : index
    %c0_170 = arith.constant 0 : index
    %c0_171 = arith.constant 0 : index
    %316 = vector.load %arg15[%c2_169, %c0_170, %c0_171] : memref<3x1x10xf32, #tpu.memory_space<vmem>>, vector<1x1x10xf32>
    %317 = vector.shape_cast %316 : vector<1x1x10xf32> to vector<1x10xf32>
    %cst_172 = arith.constant dense<0.000000e+00> : vector<16xf32>
    %318 = vector.multi_reduction <add>, %313, %cst_172 [1] : vector<16x10xf32> to vector<16xf32>
    %319 = vector.shape_cast %318 : vector<16xf32> to vector<16x1xf32>
    %cst_173 = arith.constant 1.000000e+01 : f32
    %320 = vector.broadcast %cst_173 : f32 to vector<16x1xf32>
    %321 = arith.divf %319, %320 : vector<16x1xf32>
    %322 = vector.broadcast %321 : vector<16x1xf32> to vector<16x10xf32>
    %323 = arith.subf %313, %322 : vector<16x10xf32>
    %324 = arith.mulf %323, %323 : vector<16x10xf32>
    %cst_174 = arith.constant dense<0.000000e+00> : vector<16xf32>
    %325 = vector.multi_reduction <add>, %324, %cst_174 [1] : vector<16x10xf32> to vector<16xf32>
    %326 = vector.shape_cast %325 : vector<16xf32> to vector<16x1xf32>
    %cst_175 = arith.constant 1.000000e+01 : f32
    %327 = vector.broadcast %cst_175 : f32 to vector<16x1xf32>
    %328 = arith.divf %326, %327 : vector<16x1xf32>
    %329 = vector.broadcast %321 : vector<16x1xf32> to vector<16x10xf32>
    %330 = arith.subf %313, %329 : vector<16x10xf32>
    %cst_176 = arith.constant 9.99999974E-6 : f32
    %331 = vector.broadcast %cst_176 : f32 to vector<16x1xf32>
    %332 = arith.addf %328, %331 : vector<16x1xf32>
    %333 = math.rsqrt %332 : vector<16x1xf32>
    %334 = vector.broadcast %333 : vector<16x1xf32> to vector<16x10xf32>
    %335 = arith.mulf %330, %334 : vector<16x10xf32>
    %336 = vector.broadcast %315 : vector<1x10xf32> to vector<16x10xf32>
    %337 = arith.mulf %335, %336 : vector<16x10xf32>
    %338 = vector.broadcast %317 : vector<1x10xf32> to vector<16x10xf32>
    %339 = arith.addf %337, %338 : vector<16x10xf32>
    %c0_177 = arith.constant 0 : index
    %c0_178 = arith.constant 0 : index
    %340 = vector.load %arg16[%c0_177, %c0_178] : memref<10x3xf32, #tpu.memory_space<vmem>>, vector<10x3xf32>
    %cst_179 = arith.constant dense<0.000000e+00> : vector<16x3xf32>
    %341 = tpu.matmul %339, %340, %cst_179 {dimension_numbers = #tpu.dot_dimension_numbers<[1], [0], [0], [1], [0, 0, 1, 1], [], []>} : vector<16x10xf32>, vector<10x3xf32>, vector<16x3xf32> -> vector<16x3xf32>
    %c0_180 = arith.constant 0 : index
    %c0_181 = arith.constant 0 : index
    %342 = vector.load %arg17[%c0_180, %c0_181] : memref<1x3xf32, #tpu.memory_space<vmem>>, vector<1x3xf32>
    %343 = vector.broadcast %342 : vector<1x3xf32> to vector<16x3xf32>
    %344 = arith.addf %341, %343 : vector<16x3xf32>
    %345 = vector.shape_cast %344 : vector<16x3xf32> to vector<2x8x3xf32>
    %c0_182 = arith.constant 0 : index
    %c0_183 = arith.constant 0 : index
    %c0_184 = arith.constant 0 : index
    %346 = vector.load %arg18[%c0_182, %c0_183, %c0_184] : memref<2x8x3xf32, #tpu.memory_space<vmem>>, vector<2x8x3xf32>
    tpu.vector_store %arg18[%c0_182, %c0_183, %c0_184], %345 {strides = array<i32>} : memref<2x8x3xf32, #tpu.memory_space<vmem>>, vector<2x8x3xf32>,
    return
  }
}

</mosaic_0001>

<llo_original>
// kernel: tpu_custom_call.1
$region0: #{tpu_custom_call.1}
  #allocation0 [shape = 'u32[]', space=smem, size = 0x4, offset = 0x4, fixed_abs, tag = 'smem constant byte address 0x4 - core index']
  #allocation1 [shape = 'u32[144,128]{1,0:T(1,128)}', space=vmem, size = 0x12000, scoped, tag = 'internal scratch']
  %s0 = inlined_call_operand.vmem [shape: f32[2,8,3], index: 0, kind: input, shape index: {}]
  %s1 = inlined_call_operand.vmem [shape: f32[2,1,8], index: 1, kind: input, shape index: {}]
  %s2 = inlined_call_operand.vmem [shape: f32[3,10], index: 2, kind: input, shape index: {}]
  %s3 = inlined_call_operand.vmem [shape: f32[1,10], index: 3, kind: input, shape index: {}]
  %s4 = inlined_call_operand.vmem [shape: f32[3,10,30], index: 4, kind: input, shape index: {}]
  %s5 = inlined_call_operand.vmem [shape: f32[3,1,30], index: 5, kind: input, shape index: {}]
  %s6 = inlined_call_operand.vmem [shape: f32[3,10,10], index: 6, kind: input, shape index: {}]
  %s7 = inlined_call_operand.vmem [shape: f32[3,1,10], index: 7, kind: input, shape index: {}]
  %s8 = inlined_call_operand.vmem [shape: f32[3,10,32], index: 8, kind: input, shape index: {}]
  %s9 = inlined_call_operand.vmem [shape: f32[3,1,32], index: 9, kind: input, shape index: {}]
  %s10 = inlined_call_operand.vmem [shape: f32[3,32,10], index: 10, kind: input, shape index: {}]
  %s11 = inlined_call_operand.vmem [shape: f32[3,1,10], index: 11, kind: input, shape index: {}]
  %s12 = inlined_call_operand.vmem [shape: f32[3,1,10], index: 12, kind: input, shape index: {}]
  %s13 = inlined_call_operand.vmem [shape: f32[3,1,10], index: 13, kind: input, shape index: {}]
  %s14 = inlined_call_operand.vmem [shape: f32[3,1,10], index: 14, kind: input, shape index: {}]
  %s15 = inlined_call_operand.vmem [shape: f32[3,1,10], index: 15, kind: input, shape index: {}]
  %s16 = inlined_call_operand.vmem [shape: f32[10,3], index: 16, kind: input, shape index: {}]
  %s17 = inlined_call_operand.vmem [shape: f32[1,3], index: 17, kind: input, shape index: {}]
  %s18 = inlined_call_operand.vmem [shape: f32[2,8,3], index: 18, kind: output, shape index: {}]
  %s19 = sld [smem:[#allocation0]]
  $region82: #{tpu_custom_call.1} parent=0
    _
  %s21 = ssub.s32 1, %s19
  %s22 = scalar_select 0, %s21, %s19
  // Predicated region
  $region2: #{tpu_custom_call.1} parent=0 // pred_check
    _
  $region3: #{tpu_custom_call.1} parent=0 // pred_check_branch
    %24 = sbr.rel (0) target = $region5
  $region4: #{tpu_custom_call.1} parent=0 // pred_region
    _
  $region5: #{tpu_custom_call.1} parent=0 // pred_fallthru
    _
  // Predicated region
  $region6: #{tpu_custom_call.1} parent=0 // pred_check
    _
  $region7: #{tpu_custom_call.1} parent=0 // pred_check_branch
    %26 = sbr.rel (0) target = $region9
  $region8: #{tpu_custom_call.1} parent=0 // pred_region
    _
  $region9: #{tpu_custom_call.1} parent=0 // pred_fallthru
    _
  // Predicated region
  $region10: #{tpu_custom_call.1} parent=0 // pred_check
    _
  $region11: #{tpu_custom_call.1} parent=0 // pred_check_branch
    %28 = sbr.rel (0) target = $region13
  $region12: #{tpu_custom_call.1} parent=0 // pred_region
    _
  $region13: #{tpu_custom_call.1} parent=0 // pred_fallthru
    _
  // Predicated region
  $region14: #{tpu_custom_call.1} parent=0 // pred_check
    _
  $region15: #{tpu_custom_call.1} parent=0 // pred_check_branch
    %30 = sbr.rel (0) target = $region17
  $region16: #{tpu_custom_call.1} parent=0 // pred_region
    _
  $region17: #{tpu_custom_call.1} parent=0 // pred_fallthru
    _
  // Predicated region
  $region18: #{tpu_custom_call.1} parent=0 // pred_check
    _
  $region19: #{tpu_custom_call.1} parent=0 // pred_check_branch
    %32 = sbr.rel (0) target = $region21
  $region20: #{tpu_custom_call.1} parent=0 // pred_region
    _
  $region21: #{tpu_custom_call.1} parent=0 // pred_fallthru
    _
  // Predicated region
  $region22: #{tpu_custom_call.1} parent=0 // pred_check
    _
  $region23: #{tpu_custom_call.1} parent=0 // pred_check_branch
    %34 = sbr.rel (0) target = $region25
  $region24: #{tpu_custom_call.1} parent=0 // pred_region
    _
  $region25: #{tpu_custom_call.1} parent=0 // pred_fallthru
    _
  // Predicated region
  $region26: #{tpu_custom_call.1} parent=0 // pred_check
    _
  $region27: #{tpu_custom_call.1} parent=0 // pred_check_branch
    %36 = sbr.rel (0) target = $region29
  $region28: #{tpu_custom_call.1} parent=0 // pred_region
    _
  $region29: #{tpu_custom_call.1} parent=0 // pred_fallthru
    _
  // Predicated region
  $region30: #{tpu_custom_call.1} parent=0 // pred_check
    _
  $region31: #{tpu_custom_call.1} parent=0 // pred_check_branch
    %38 = sbr.rel (0) target = $region33
  $region32: #{tpu_custom_call.1} parent=0 // pred_region
    _
  $region33: #{tpu_custom_call.1} parent=0 // pred_fallthru
    _
  // Predicated region
  $region34: #{tpu_custom_call.1} parent=0 // pred_check
    _
  $region35: #{tpu_custom_call.1} parent=0 // pred_check_branch
    %40 = sbr.rel (0) target = $region37
  $region36: #{tpu_custom_call.1} parent=0 // pred_region
    _
  $region37: #{tpu_custom_call.1} parent=0 // pred_fallthru
    _
  // Predicated region
  $region38: #{tpu_custom_call.1} parent=0 // pred_check
    _
  $region39: #{tpu_custom_call.1} parent=0 // pred_check_branch
    %42 = sbr.rel (0) target = $region41
  $region40: #{tpu_custom_call.1} parent=0 // pred_region
    _
  $region41: #{tpu_custom_call.1} parent=0 // pred_fallthru
    _
  // Predicated region
  $region42: #{tpu_custom_call.1} parent=0 // pred_check
    _
  $region43: #{tpu_custom_call.1} parent=0 // pred_check_branch
    %44 = sbr.rel (0) target = $region45
  $region44: #{tpu_custom_call.1} parent=0 // pred_region
    _
  $region45: #{tpu_custom_call.1} parent=0 // pred_fallthru
    _
  // Predicated region
  $region46: #{tpu_custom_call.1} parent=0 // pred_check
    _
  $region47: #{tpu_custom_call.1} parent=0 // pred_check_branch
    %46 = sbr.rel (0) target = $region49
  $region48: #{tpu_custom_call.1} parent=0 // pred_region
    _
  $region49: #{tpu_custom_call.1} parent=0 // pred_fallthru
    _
  // Predicated region
  $region50: #{tpu_custom_call.1} parent=0 // pred_check
    _
  $region51: #{tpu_custom_call.1} parent=0 // pred_check_branch
    %48 = sbr.rel (0) target = $region53
  $region52: #{tpu_custom_call.1} parent=0 // pred_region
    _
  $region53: #{tpu_custom_call.1} parent=0 // pred_fallthru
    _
  // Predicated region
  $region54: #{tpu_custom_call.1} parent=0 // pred_check
    _
  $region55: #{tpu_custom_call.1} parent=0 // pred_check_branch
    %50 = sbr.rel (0) target = $region57
  $region56: #{tpu_custom_call.1} parent=0 // pred_region
    _
  $region57: #{tpu_custom_call.1} parent=0 // pred_fallthru
    _
  // Predicated region
  $region58: #{tpu_custom_call.1} parent=0 // pred_check
    _
  $region59: #{tpu_custom_call.1} parent=0 // pred_check_branch
    %52 = sbr.rel (0) target = $region61
  $region60: #{tpu_custom_call.1} parent=0 // pred_region
    _
  $region61: #{tpu_custom_call.1} parent=0 // pred_fallthru
    _
  // Predicated region
  $region62: #{tpu_custom_call.1} parent=0 // pred_check
    _
  $region63: #{tpu_custom_call.1} parent=0 // pred_check_branch
    %54 = sbr.rel (0) target = $region65
  $region64: #{tpu_custom_call.1} parent=0 // pred_region
    _
  $region65: #{tpu_custom_call.1} parent=0 // pred_fallthru
    _
  // Predicated region
  $region66: #{tpu_custom_call.1} parent=0 // pred_check
    _
  $region67: #{tpu_custom_call.1} parent=0 // pred_check_branch
    %56 = sbr.rel (0) target = $region69
  $region68: #{tpu_custom_call.1} parent=0 // pred_region
    _
  $region69: #{tpu_custom_call.1} parent=0 // pred_fallthru
    _
  // Predicated region
  $region70: #{tpu_custom_call.1} parent=0 // pred_check
    _
  $region71: #{tpu_custom_call.1} parent=0 // pred_check_branch
    %58 = sbr.rel (0) target = $region73
  $region72: #{tpu_custom_call.1} parent=0 // pred_region
    _
  $region73: #{tpu_custom_call.1} parent=0 // pred_fallthru
    _
  %v59 = vld [vmem:[%s1] sm:$0x1]
  %v60 = vld [vmem:[%s1 + $0x1] sm:$0x1]
  %v61 = vld [vmem:[%s0] sm:$0xff]
  %v62 = vld [vmem:[%s0 + $0x8] sm:$0xff]
  %v63 = vld [vmem:[%s2] sm:$0x7]
  %v64 = vld [vmem:[%s3] sm:$0x1]
  %v66 = vlaneseq
  %v67 = vshrl.u32 %v66, 7
  %v68 = vsub.s32 0, %v67
  %v69 = vrot.slane %v64, %v68
  %vm71 = vcmask 23552
  %v73 = vsel %vm71, %v61, 0
  %v76 = vsel %vm71, %v62, 0
  %vm78 = vcmask 1042432
  %v80 = vsel %vm78, %v63, 0
  %82 = vmatprep.subr.mxu0 0.0
  %83 = vmatpush1.msra.mxu0 %v80
  %84 = vmatprep.subr.mxu0 0.0
  %85 = vmatpush1.msra.mxu0 0.0
  %86 = vmatprep.subr.mxu0 0.0
  %87 = vmatpush1.msra.mxu0 0.0
  %88 = vmatprep.subr.mxu0 0.0
  %89 = vmatpush1.msra.mxu0 0.0
  %90 = vmatprep.subr.mxu0 0.0
  %91 = vmatpush1.msra.mxu0 0.0
  %92 = vmatprep.subr.mxu0 0.0
  %93 = vmatpush1.msra.mxu0 0.0
  %94 = vmatprep.subr.mxu0 0.0
  %95 = vmatpush1.msra.mxu0 0.0
  %96 = vmatprep.subr.mxu0 0.0
  %97 = vmatpush1.msra.mxu0 0.0
  %98 = vmatprep.subr.mxu0 0.0
  %99 = vmatpush1.msra.mxu0 0.0
  %100 = vmatprep.subr.mxu0 0.0
  %101 = vmatpush1.msra.mxu0 0.0
  %102 = vmatprep.subr.mxu0 0.0
  %103 = vmatpush1.msra.mxu0 0.0
  %104 = vmatprep.subr.mxu0 0.0
  %105 = vmatpush1.msra.mxu0 0.0
  %106 = vmatprep.subr.mxu0 0.0
  %107 = vmatpush1.msra.mxu0 0.0
  %108 = vmatprep.subr.mxu0 0.0
  %109 = vmatpush1.msra.mxu0 0.0
  %110 = vmatprep.subr.mxu0 0.0
  %111 = vmatpush1.msra.mxu0 0.0
  %112 = vmatprep.subr.mxu0 0.0
  %113 = vmatpush1.msra.mxu0 0.0
  %114 = vmatprep.subr.mxu0 0.0
  %115 = vmatpush1.msra.mxu0 0.0
  %116 = vmatprep.subr.mxu0 0.0
  %117 = vmatpush1.msra.mxu0 0.0
  %118 = vmatprep.subr.mxu0 0.0
  %119 = vmatpush1.msra.mxu0 0.0
  %120 = vmatprep.subr.mxu0 0.0
  %121 = vmatpush1.msra.mxu0 0.0
  %122 = vmatprep.subr.mxu0 0.0
  %123 = vmatpush1.msra.mxu0 0.0
  %124 = vmatprep.subr.mxu0 0.0
  %125 = vmatpush1.msra.mxu0 0.0
  %126 = vmatprep.subr.mxu0 0.0
  %127 = vmatpush1.msra.mxu0 0.0
  %128 = vmatprep.subr.mxu0 0.0
  %129 = vmatpush1.msra.mxu0 0.0
  %130 = vmatprep.subr.mxu0 0.0
  %131 = vmatpush1.msra.mxu0 0.0
  %132 = vmatprep.subr.mxu0 0.0
  %133 = vmatpush1.msra.mxu0 0.0
  %134 = vmatprep.subr.mxu0 0.0
  %135 = vmatpush1.msra.mxu0 0.0
  %136 = vmatprep.subr.mxu0 0.0
  %137 = vmatpush1.msra.mxu0 0.0
  %138 = vmatprep.subr.mxu0 0.0
  %139 = vmatpush1.msra.mxu0 0.0
  %140 = vmatprep.subr.mxu0 0.0
  %141 = vmatpush1.msra.mxu0 0.0
  %142 = vmatprep.subr.mxu0 0.0
  %143 = vmatpush1.msra.mxu0 0.0
  %144 = vmatprep.subr.mxu0 0.0
  %145 = vmatpush1.msra.mxu0 0.0
  %146 = vmatprep.mubr.f32.mxu0 0.0
  %147 = vmatmul.mubr.f32.gmra.mrb[0].mxu0 %v73
  %v148 = vpop.f32.mrb[0].mxu0
  %v149 = vadd.f32 %v69, %v148
  %v150 = vpop.f32.mrb[0].mxu0
  %151 = vmatprep.mubr.f32.mxu0 0.0
  %152 = vmatmul.mubr.f32.gmra.mrb[0].mxu0 %v76
  %v153 = vpop.f32.mrb[0].mxu0
  %v154 = vadd.f32 %v69, %v153
  %v155 = vpop.f32.mrb[0].mxu0
  %156 = vdwg.mxu0
  %v157 = vld [vmem:[%s4] sm:$0xff]
  %v158 = vld [vmem:[%s4 + $0x8] sm:$0x3]
  %v159 = vld [vmem:[%s5] sm:$0x1]
  %v161 = vlaneseq
  %v162 = vshrl.u32 %v161, 7
  %v163 = vsub.s32 0, %v162
  %v164 = vrot.slane %v159, %v163
  %vm166 = vcmask 80896
  %v168 = vsel %vm166, %v149, 0
  %v171 = vsel %vm166, %v154, 0
  %vm173 = vcmask 1041408
  %v175 = vsel %vm173, %v158, 0
  %177 = vmatprep.subr.mxu0 0.0
  %178 = vmatpush1.msra.mxu0 %v157
  %179 = vmatprep.subr.mxu0 0.0
  %180 = vmatpush1.msra.mxu0 %v175
  %181 = vmatprep.subr.mxu0 0.0
  %182 = vmatpush1.msra.mxu0 0.0
  %183 = vmatprep.subr.mxu0 0.0
  %184 = vmatpush1.msra.mxu0 0.0
  %185 = vmatprep.subr.mxu0 0.0
  %186 = vmatpush1.msra.mxu0 0.0
  %187 = vmatprep.subr.mxu0 0.0
  %188 = vmatpush1.msra.mxu0 0.0
  %189 = vmatprep.subr.mxu0 0.0
  %190 = vmatpush1.msra.mxu0 0.0
  %191 = vmatprep.subr.mxu0 0.0
  %192 = vmatpush1.msra.mxu0 0.0
  %193 = vmatprep.subr.mxu0 0.0
  %194 = vmatpush1.msra.mxu0 0.0
  %195 = vmatprep.subr.mxu0 0.0
  %196 = vmatpush1.msra.mxu0 0.0
  %197 = vmatprep.subr.mxu0 0.0
  %198 = vmatpush1.msra.mxu0 0.0
  %199 = vmatprep.subr.mxu0 0.0
  %200 = vmatpush1.msra.mxu0 0.0
  %201 = vmatprep.subr.mxu0 0.0
  %202 = vmatpush1.msra.mxu0 0.0
  %203 = vmatprep.subr.mxu0 0.0
  %204 = vmatpush1.msra.mxu0 0.0
  %205 = vmatprep.subr.mxu0 0.0
  %206 = vmatpush1.msra.mxu0 0.0
  %207 = vmatprep.subr.mxu0 0.0
  %208 = vmatpush1.msra.mxu0 0.0
  %209 = vmatprep.subr.mxu0 0.0
  %210 = vmatpush1.msra.mxu0 0.0
  %211 = vmatprep.subr.mxu0 0.0
  %212 = vmatpush1.msra.mxu0 0.0
  %213 = vmatprep.subr.mxu0 0.0
  %214 = vmatpush1.msra.mxu0 0.0
  %215 = vmatprep.subr.mxu0 0.0
  %216 = vmatpush1.msra.mxu0 0.0
  %217 = vmatprep.subr.mxu0 0.0
  %218 = vmatpush1.msra.mxu0 0.0
  %219 = vmatprep.subr.mxu0 0.0
  %220 = vmatpush1.msra.mxu0 0.0
  %221 = vmatprep.subr.mxu0 0.0
  %222 = vmatpush1.msra.mxu0 0.0
  %223 = vmatprep.subr.mxu0 0.0
  %224 = vmatpush1.msra.mxu0 0.0
  %225 = vmatprep.subr.mxu0 0.0
  %226 = vmatpush1.msra.mxu0 0.0
  %227 = vmatprep.subr.mxu0 0.0
  %228 = vmatpush1.msra.mxu0 0.0
  %229 = vmatprep.subr.mxu0 0.0
  %230 = vmatpush1.msra.mxu0 0.0
  %231 = vmatprep.subr.mxu0 0.0
  %232 = vmatpush1.msra.mxu0 0.0
  %233 = vmatprep.subr.mxu0 0.0
  %234 = vmatpush1.msra.mxu0 0.0
  %235 = vmatprep.subr.mxu0 0.0
  %236 = vmatpush1.msra.mxu0 0.0
  %237 = vmatprep.subr.mxu0 0.0
  %238 = vmatpush1.msra.mxu0 0.0
  %239 = vmatprep.subr.mxu0 0.0
  %240 = vmatpush1.msra.mxu0 0.0
  %241 = vmatprep.mubr.f32.mxu0 0.0
  %242 = vmatmul.mubr.f32.gmra.mrb[0].mxu0 %v168
  %v243 = vpop.f32.mrb[0].mxu0
  %v244 = vadd.f32 %v164, %v243
  %v245 = vpop.f32.mrb[0].mxu0
  %246 = vmatprep.mubr.f32.mxu0 0.0
  %247 = vmatmul.mubr.f32.gmra.mrb[0].mxu0 %v171
  %v248 = vpop.f32.mrb[0].mxu0
  %v249 = vadd.f32 %v164, %v248
  %v250 = vpop.f32.mrb[0].mxu0
  %251 = vdwg.mxu0
  %v252 = vmul.f32 %v244, 0.31622776
  %v253 = vmul.f32 %v249, 0.31622776
  %v256 = vlaneseq
  %v257 = vshrl.u32 %v256, 7
  %v258 = vsub.s32 0, %v257
  %v259 = vrot.slane %v59, %v258
  %v260 = vlaneseq
  %v261 = vshrl.u32 %v260, 7
  %v262 = vsub.s32 0, %v261
  %v263 = vrot.slane %v60, %v262
  %267 = vrot.lane.b32.xlu0 %v244, 118
  %v268 = vpop.permute.xlu0 %267
  %v270 = vsel %vm166, %v252, 0
  %v272 = vsel %vm166, %v268, 0
  %274 = vmatprep.subr.mxu0 0.0
  %275 = vmatpush1.xpose.msra.mxu0 %v272
  %276 = vmatprep.subr.mxu0 0.0
  %277 = vmatpush1.xpose.msra.mxu0 0.0
  %278 = vmatprep.subr.mxu0 0.0
  %279 = vmatpush1.xpose.msra.mxu0 0.0
  %280 = vmatprep.subr.mxu0 0.0
  %281 = vmatpush1.xpose.msra.mxu0 0.0
  %282 = vmatprep.subr.mxu0 0.0
  %283 = vmatpush1.xpose.msra.mxu0 0.0
  %284 = vmatprep.subr.mxu0 0.0
  %285 = vmatpush1.xpose.msra.mxu0 0.0
  %286 = vmatprep.subr.mxu0 0.0
  %287 = vmatpush1.xpose.msra.mxu0 0.0
  %288 = vmatprep.subr.mxu0 0.0
  %289 = vmatpush1.xpose.msra.mxu0 0.0
  %290 = vmatprep.subr.mxu0 0.0
  %291 = vmatpush1.xpose.msra.mxu0 0.0
  %292 = vmatprep.subr.mxu0 0.0
  %293 = vmatpush1.xpose.msra.mxu0 0.0
  %294 = vmatprep.subr.mxu0 0.0
  %295 = vmatpush1.xpose.msra.mxu0 0.0
  %296 = vmatprep.subr.mxu0 0.0
  %297 = vmatpush1.xpose.msra.mxu0 0.0
  %298 = vmatprep.subr.mxu0 0.0
  %299 = vmatpush1.xpose.msra.mxu0 0.0
  %300 = vmatprep.subr.mxu0 0.0
  %301 = vmatpush1.xpose.msra.mxu0 0.0
  %302 = vmatprep.subr.mxu0 0.0
  %303 = vmatpush1.xpose.msra.mxu0 0.0
  %304 = vmatprep.subr.mxu0 0.0
  %305 = vmatpush1.xpose.msra.mxu0 0.0
  %306 = vmatprep.subr.mxu0 0.0
  %307 = vmatpush1.xpose.msra.mxu0 0.0
  %308 = vmatprep.subr.mxu0 0.0
  %309 = vmatpush1.xpose.msra.mxu0 0.0
  %310 = vmatprep.subr.mxu0 0.0
  %311 = vmatpush1.xpose.msra.mxu0 0.0
  %312 = vmatprep.subr.mxu0 0.0
  %313 = vmatpush1.xpose.msra.mxu0 0.0
  %314 = vmatprep.subr.mxu0 0.0
  %315 = vmatpush1.xpose.msra.mxu0 0.0
  %316 = vmatprep.subr.mxu0 0.0
  %317 = vmatpush1.xpose.msra.mxu0 0.0
  %318 = vmatprep.subr.mxu0 0.0
  %319 = vmatpush1.xpose.msra.mxu0 0.0
  %320 = vmatprep.subr.mxu0 0.0
  %321 = vmatpush1.xpose.msra.mxu0 0.0
  %322 = vmatprep.subr.mxu0 0.0
  %323 = vmatpush1.xpose.msra.mxu0 0.0
  %324 = vmatprep.subr.mxu0 0.0
  %325 = vmatpush1.xpose.msra.mxu0 0.0
  %326 = vmatprep.subr.mxu0 0.0
  %327 = vmatpush1.xpose.msra.mxu0 0.0
  %328 = vmatprep.subr.mxu0 0.0
  %329 = vmatpush1.xpose.msra.mxu0 0.0
  %330 = vmatprep.subr.mxu0 0.0
  %331 = vmatpush1.xpose.msra.mxu0 0.0
  %332 = vmatprep.subr.mxu0 0.0
  %333 = vmatpush1.xpose.msra.mxu0 0.0
  %334 = vmatprep.subr.mxu0 0.0
  %335 = vmatpush1.xpose.msra.mxu0 0.0
  %336 = vmatprep.subr.mxu0 0.0
  %337 = vmatpush1.xpose.msra.mxu0 0.0
  %338 = vmatprep.mubr.f32.mxu0 0.0
  %339 = vmatmul.mubr.f32.gmra.mrb[0].mxu0 %v270
  %v340 = vpop.f32.mrb[0].mxu0
  %v341 = vadd.f32 %v259, %v340
  %v342 = vpop.f32.mrb[0].mxu0
  %343 = vdwg.mxu0
  %345 = vrot.lane.b32.xlu0 %v249, 118
  %v346 = vpop.permute.xlu0 %345
  %v348 = vsel %vm166, %v253, 0
  %v350 = vsel %vm166, %v346, 0
  %352 = vmatprep.subr.mxu0 0.0
  %353 = vmatpush1.xpose.msra.mxu0 %v350
  %354 = vmatprep.subr.mxu0 0.0
  %355 = vmatpush1.xpose.msra.mxu0 0.0
  %356 = vmatprep.subr.mxu0 0.0
  %357 = vmatpush1.xpose.msra.mxu0 0.0
  %358 = vmatprep.subr.mxu0 0.0
  %359 = vmatpush1.xpose.msra.mxu0 0.0
  %360 = vmatprep.subr.mxu0 0.0
  %361 = vmatpush1.xpose.msra.mxu0 0.0
  %362 = vmatprep.subr.mxu0 0.0
  %363 = vmatpush1.xpose.msra.mxu0 0.0
  %364 = vmatprep.subr.mxu0 0.0
  %365 = vmatpush1.xpose.msra.mxu0 0.0
  %366 = vmatprep.subr.mxu0 0.0
  %367 = vmatpush1.xpose.msra.mxu0 0.0
  %368 = vmatprep.subr.mxu0 0.0
  %369 = vmatpush1.xpose.msra.mxu0 0.0
  %370 = vmatprep.subr.mxu0 0.0
  %371 = vmatpush1.xpose.msra.mxu0 0.0
  %372 = vmatprep.subr.mxu0 0.0
  %373 = vmatpush1.xpose.msra.mxu0 0.0
  %374 = vmatprep.subr.mxu0 0.0
  %375 = vmatpush1.xpose.msra.mxu0 0.0
  %376 = vmatprep.subr.mxu0 0.0
  %377 = vmatpush1.xpose.msra.mxu0 0.0
  %378 = vmatprep.subr.mxu0 0.0
  %379 = vmatpush1.xpose.msra.mxu0 0.0
  %380 = vmatprep.subr.mxu0 0.0
  %381 = vmatpush1.xpose.msra.mxu0 0.0
  %382 = vmatprep.subr.mxu0 0.0
  %383 = vmatpush1.xpose.msra.mxu0 0.0
  %384 = vmatprep.subr.mxu0 0.0
  %385 = vmatpush1.xpose.msra.mxu0 0.0
  %386 = vmatprep.subr.mxu0 0.0
  %387 = vmatpush1.xpose.msra.mxu0 0.0
  %388 = vmatprep.subr.mxu0 0.0
  %389 = vmatpush1.xpose.msra.mxu0 0.0
  %390 = vmatprep.subr.mxu0 0.0
  %391 = vmatpush1.xpose.msra.mxu0 0.0
  %392 = vmatprep.subr.mxu0 0.0
  %393 = vmatpush1.xpose.msra.mxu0 0.0
  %394 = vmatprep.subr.mxu0 0.0
  %395 = vmatpush1.xpose.msra.mxu0 0.0
  %396 = vmatprep.subr.mxu0 0.0
  %397 = vmatpush1.xpose.msra.mxu0 0.0
  %398 = vmatprep.subr.mxu0 0.0
  %399 = vmatpush1.xpose.msra.mxu0 0.0
  %400 = vmatprep.subr.mxu0 0.0
  %401 = vmatpush1.xpose.msra.mxu0 0.0
  %402 = vmatprep.subr.mxu0 0.0
  %403 = vmatpush1.xpose.msra.mxu0 0.0
  %404 = vmatprep.subr.mxu0 0.0
  %405 = vmatpush1.xpose.msra.mxu0 0.0
  %406 = vmatprep.subr.mxu0 0.0
  %407 = vmatpush1.xpose.msra.mxu0 0.0
  %408 = vmatprep.subr.mxu0 0.0
  %409 = vmatpush1.xpose.msra.mxu0 0.0
  %410 = vmatprep.subr.mxu0 0.0
  %411 = vmatpush1.xpose.msra.mxu0 0.0
  %412 = vmatprep.subr.mxu0 0.0
  %413 = vmatpush1.xpose.msra.mxu0 0.0
  %414 = vmatprep.subr.mxu0 0.0
  %415 = vmatpush1.xpose.msra.mxu0 0.0
  %416 = vmatprep.mubr.f32.mxu0 0.0
  %417 = vmatmul.mubr.f32.gmra.mrb[0].mxu0 %v348
  %v418 = vpop.f32.mrb[0].mxu0
  %v419 = vadd.f32 %v263, %v418
  %v420 = vpop.f32.mrb[0].mxu0
  %421 = vdwg.mxu0
  %vm422 = vcmask 64512
  %v423 = vsel %vm422, %v341, -inf
  %424 = vmax.xlane.f32.xlu0 %v423
  %v425 = vpop.xlane.xlu0 %424
  %v426 = vsel %vm422, %v419, -inf
  %427 = vmax.xlane.f32.xlu0 %v426
  %v428 = vpop.xlane.xlu0 %427
  %v429 = vsub.f32 %v341, %v425
  %v430 = vsub.f32 %v419, %v428
  %v431 = vmul.f32 %v429, 1.442695
  %v432 = vpow.pop %v431
  %v433 = vmul.f32 %v430, 1.442695
  %v434 = vpow.pop %v433
  %v435 = vsel %vm422, %v432, 0.0
  %436 = vadd.xlane.f32.xlu0 %v435
  %v437 = vpop.xlane.xlu0 %436
  %v438 = vsel %vm422, %v434, 0.0
  %439 = vadd.xlane.f32.xlu0 %v438
  %v440 = vpop.xlane.xlu0 %439
  %v441 = vrcp.pop %v437
  %v442 = vrcp.pop %v440
  %v443 = vmul.f32 %v432, %v441
  %v444 = vmul.f32 %v434, %v442
  %445 = vrot.lane.b32.xlu0 %v244, 108
  %v446 = vpop.permute.xlu0 %445
  %v449 = vsel %vm422, %v443, 0
  %451 = vmatprep.subr.mxu0 0.0
  %452 = vmatpush1.msra.mxu0 %v446
  %453 = vmatprep.subr.mxu0 0.0
  %454 = vmatpush1.msra.mxu0 0.0
  %455 = vmatprep.subr.mxu0 0.0
  %456 = vmatpush1.msra.mxu0 0.0
  %457 = vmatprep.subr.mxu0 0.0
  %458 = vmatpush1.msra.mxu0 0.0
  %459 = vmatprep.subr.mxu0 0.0
  %460 = vmatpush1.msra.mxu0 0.0
  %461 = vmatprep.subr.mxu0 0.0
  %462 = vmatpush1.msra.mxu0 0.0
  %463 = vmatprep.subr.mxu0 0.0
  %464 = vmatpush1.msra.mxu0 0.0
  %465 = vmatprep.subr.mxu0 0.0
  %466 = vmatpush1.msra.mxu0 0.0
  %467 = vmatprep.subr.mxu0 0.0
  %468 = vmatpush1.msra.mxu0 0.0
  %469 = vmatprep.subr.mxu0 0.0
  %470 = vmatpush1.msra.mxu0 0.0
  %471 = vmatprep.subr.mxu0 0.0
  %472 = vmatpush1.msra.mxu0 0.0
  %473 = vmatprep.subr.mxu0 0.0
  %474 = vmatpush1.msra.mxu0 0.0
  %475 = vmatprep.subr.mxu0 0.0
  %476 = vmatpush1.msra.mxu0 0.0
  %477 = vmatprep.subr.mxu0 0.0
  %478 = vmatpush1.msra.mxu0 0.0
  %479 = vmatprep.subr.mxu0 0.0
  %480 = vmatpush1.msra.mxu0 0.0
  %481 = vmatprep.subr.mxu0 0.0
  %482 = vmatpush1.msra.mxu0 0.0
  %483 = vmatprep.subr.mxu0 0.0
  %484 = vmatpush1.msra.mxu0 0.0
  %485 = vmatprep.subr.mxu0 0.0
  %486 = vmatpush1.msra.mxu0 0.0
  %487 = vmatprep.subr.mxu0 0.0
  %488 = vmatpush1.msra.mxu0 0.0
  %489 = vmatprep.subr.mxu0 0.0
  %490 = vmatpush1.msra.mxu0 0.0
  %491 = vmatprep.subr.mxu0 0.0
  %492 = vmatpush1.msra.mxu0 0.0
  %493 = vmatprep.subr.mxu0 0.0
  %494 = vmatpush1.msra.mxu0 0.0
  %495 = vmatprep.subr.mxu0 0.0
  %496 = vmatpush1.msra.mxu0 0.0
  %497 = vmatprep.subr.mxu0 0.0
  %498 = vmatpush1.msra.mxu0 0.0
  %499 = vmatprep.subr.mxu0 0.0
  %500 = vmatpush1.msra.mxu0 0.0
  %501 = vmatprep.subr.mxu0 0.0
  %502 = vmatpush1.msra.mxu0 0.0
  %503 = vmatprep.subr.mxu0 0.0
  %504 = vmatpush1.msra.mxu0 0.0
  %505 = vmatprep.subr.mxu0 0.0
  %506 = vmatpush1.msra.mxu0 0.0
  %507 = vmatprep.subr.mxu0 0.0
  %508 = vmatpush1.msra.mxu0 0.0
  %509 = vmatprep.subr.mxu0 0.0
  %510 = vmatpush1.msra.mxu0 0.0
  %511 = vmatprep.subr.mxu0 0.0
  %512 = vmatpush1.msra.mxu0 0.0
  %513 = vmatprep.subr.mxu0 0.0
  %514 = vmatpush1.msra.mxu0 0.0
  %515 = vmatprep.mubr.f32.mxu0 0.0
  %516 = vmatmul.mubr.f32.gmra.mrb[0].mxu0 %v449
  %v517 = vpop.f32.mrb[0].mxu0
  %v518 = vadd.f32 0.0, %v517
  %v519 = vpop.f32.mrb[0].mxu0
  %520 = vdwg.mxu0
  %521 = vrot.lane.b32.xlu0 %v249, 108
  %v522 = vpop.permute.xlu0 %521
  %v525 = vsel %vm422, %v444, 0
  %527 = vmatprep.subr.mxu0 0.0
  %528 = vmatpush1.msra.mxu0 %v522
  %529 = vmatprep.subr.mxu0 0.0
  %530 = vmatpush1.msra.mxu0 0.0
  %531 = vmatprep.subr.mxu0 0.0
  %532 = vmatpush1.msra.mxu0 0.0
  %533 = vmatprep.subr.mxu0 0.0
  %534 = vmatpush1.msra.mxu0 0.0
  %535 = vmatprep.subr.mxu0 0.0
  %536 = vmatpush1.msra.mxu0 0.0
  %537 = vmatprep.subr.mxu0 0.0
  %538 = vmatpush1.msra.mxu0 0.0
  %539 = vmatprep.subr.mxu0 0.0
  %540 = vmatpush1.msra.mxu0 0.0
  %541 = vmatprep.subr.mxu0 0.0
  %542 = vmatpush1.msra.mxu0 0.0
  %543 = vmatprep.subr.mxu0 0.0
  %544 = vmatpush1.msra.mxu0 0.0
  %545 = vmatprep.subr.mxu0 0.0
  %546 = vmatpush1.msra.mxu0 0.0
  %547 = vmatprep.subr.mxu0 0.0
  %548 = vmatpush1.msra.mxu0 0.0
  %549 = vmatprep.subr.mxu0 0.0
  %550 = vmatpush1.msra.mxu0 0.0
  %551 = vmatprep.subr.mxu0 0.0
  %552 = vmatpush1.msra.mxu0 0.0
  %553 = vmatprep.subr.mxu0 0.0
  %554 = vmatpush1.msra.mxu0 0.0
  %555 = vmatprep.subr.mxu0 0.0
  %556 = vmatpush1.msra.mxu0 0.0
  %557 = vmatprep.subr.mxu0 0.0
  %558 = vmatpush1.msra.mxu0 0.0
  %559 = vmatprep.subr.mxu0 0.0
  %560 = vmatpush1.msra.mxu0 0.0
  %561 = vmatprep.subr.mxu0 0.0
  %562 = vmatpush1.msra.mxu0 0.0
  %563 = vmatprep.subr.mxu0 0.0
  %564 = vmatpush1.msra.mxu0 0.0
  %565 = vmatprep.subr.mxu0 0.0
  %566 = vmatpush1.msra.mxu0 0.0
  %567 = vmatprep.subr.mxu0 0.0
  %568 = vmatpush1.msra.mxu0 0.0
  %569 = vmatprep.subr.mxu0 0.0
  %570 = vmatpush1.msra.mxu0 0.0
  %571 = vmatprep.subr.mxu0 0.0
  %572 = vmatpush1.msra.mxu0 0.0
  %573 = vmatprep.subr.mxu0 0.0
  %574 = vmatpush1.msra.mxu0 0.0
  %575 = vmatprep.subr.mxu0 0.0
  %576 = vmatpush1.msra.mxu0 0.0
  %577 = vmatprep.subr.mxu0 0.0
  %578 = vmatpush1.msra.mxu0 0.0
  %579 = vmatprep.subr.mxu0 0.0
  %580 = vmatpush1.msra.mxu0 0.0
  %581 = vmatprep.subr.mxu0 0.0
  %582 = vmatpush1.msra.mxu0 0.0
  %583 = vmatprep.subr.mxu0 0.0
  %584 = vmatpush1.msra.mxu0 0.0
  %585 = vmatprep.subr.mxu0 0.0
  %586 = vmatpush1.msra.mxu0 0.0
  %587 = vmatprep.subr.mxu0 0.0
  %588 = vmatpush1.msra.mxu0 0.0
  %589 = vmatprep.subr.mxu0 0.0
  %590 = vmatpush1.msra.mxu0 0.0
  %591 = vmatprep.mubr.f32.mxu0 0.0
  %592 = vmatmul.mubr.f32.gmra.mrb[0].mxu0 %v525
  %v593 = vpop.f32.mrb[0].mxu0
  %v594 = vadd.f32 0.0, %v593
  %v595 = vpop.f32.mrb[0].mxu0
  %596 = vdwg.mxu0
  %v597 = vld [vmem:[%s6] sm:$0xff]
  %v598 = vld [vmem:[%s6 + $0x8] sm:$0x3]
  %v599 = vld [vmem:[%s7] sm:$0x1]
  %v601 = vlaneseq
  %v602 = vshrl.u32 %v601, 7
  %v603 = vsub.s32 0, %v602
  %v604 = vrot.slane %v599, %v603
  %v607 = vsel %vm166, %v518, 0
  %v610 = vsel %vm166, %v594, 0
  %v613 = vsel %vm173, %v598, 0
  %615 = vmatprep.subr.mxu0 0.0
  %616 = vmatpush1.msra.mxu0 %v597
  %617 = vmatprep.subr.mxu0 0.0
  %618 = vmatpush1.msra.mxu0 %v613
  %619 = vmatprep.subr.mxu0 0.0
  %620 = vmatpush1.msra.mxu0 0.0
  %621 = vmatprep.subr.mxu0 0.0
  %622 = vmatpush1.msra.mxu0 0.0
  %623 = vmatprep.subr.mxu0 0.0
  %624 = vmatpush1.msra.mxu0 0.0
  %625 = vmatprep.subr.mxu0 0.0
  %626 = vmatpush1.msra.mxu0 0.0
  %627 = vmatprep.subr.mxu0 0.0
  %628 = vmatpush1.msra.mxu0 0.0
  %629 = vmatprep.subr.mxu0 0.0
  %630 = vmatpush1.msra.mxu0 0.0
  %631 = vmatprep.subr.mxu0 0.0
  %632 = vmatpush1.msra.mxu0 0.0
  %633 = vmatprep.subr.mxu0 0.0
  %634 = vmatpush1.msra.mxu0 0.0
  %635 = vmatprep.subr.mxu0 0.0
  %636 = vmatpush1.msra.mxu0 0.0
  %637 = vmatprep.subr.mxu0 0.0
  %638 = vmatpush1.msra.mxu0 0.0
  %639 = vmatprep.subr.mxu0 0.0
  %640 = vmatpush1.msra.mxu0 0.0
  %641 = vmatprep.subr.mxu0 0.0
  %642 = vmatpush1.msra.mxu0 0.0
  %643 = vmatprep.subr.mxu0 0.0
  %644 = vmatpush1.msra.mxu0 0.0
  %645 = vmatprep.subr.mxu0 0.0
  %646 = vmatpush1.msra.mxu0 0.0
  %647 = vmatprep.subr.mxu0 0.0
  %648 = vmatpush1.msra.mxu0 0.0
  %649 = vmatprep.subr.mxu0 0.0
  %650 = vmatpush1.msra.mxu0 0.0
  %651 = vmatprep.subr.mxu0 0.0
  %652 = vmatpush1.msra.mxu0 0.0
  %653 = vmatprep.subr.mxu0 0.0
  %654 = vmatpush1.msra.mxu0 0.0
  %655 = vmatprep.subr.mxu0 0.0
  %656 = vmatpush1.msra.mxu0 0.0
  %657 = vmatprep.subr.mxu0 0.0
  %658 = vmatpush1.msra.mxu0 0.0
  %659 = vmatprep.subr.mxu0 0.0
  %660 = vmatpush1.msra.mxu0 0.0
  %661 = vmatprep.subr.mxu0 0.0
  %662 = vmatpush1.msra.mxu0 0.0
  %663 = vmatprep.subr.mxu0 0.0
  %664 = vmatpush1.msra.mxu0 0.0
  %665 = vmatprep.subr.mxu0 0.0
  %666 = vmatpush1.msra.mxu0 0.0
  %667 = vmatprep.subr.mxu0 0.0
  %668 = vmatpush1.msra.mxu0 0.0
  %669 = vmatprep.subr.mxu0 0.0
  %670 = vmatpush1.msra.mxu0 0.0
  %671 = vmatprep.subr.mxu0 0.0
  %672 = vmatpush1.msra.mxu0 0.0
  %673 = vmatprep.subr.mxu0 0.0
  %674 = vmatpush1.msra.mxu0 0.0
  %675 = vmatprep.subr.mxu0 0.0
  %676 = vmatpush1.msra.mxu0 0.0
  %677 = vmatprep.subr.mxu0 0.0
  %678 = vmatpush1.msra.mxu0 0.0
  %679 = vmatprep.mubr.f32.mxu0 0.0
  %680 = vmatmul.mubr.f32.gmra.mrb[0].mxu0 %v607
  %v681 = vpop.f32.mrb[0].mxu0
  %v682 = vadd.f32 %v604, %v681
  %v683 = vpop.f32.mrb[0].mxu0
  %684 = vmatprep.mubr.f32.mxu0 0.0
  %685 = vmatmul.mubr.f32.gmra.mrb[0].mxu0 %v610
  %v686 = vpop.f32.mrb[0].mxu0
  %v687 = vadd.f32 %v604, %v686
  %v688 = vpop.f32.mrb[0].mxu0
  %689 = vdwg.mxu0
  %v690 = vadd.f32 %v149, %v682
  %v691 = vadd.f32 %v154, %v687
  %v692 = vld [vmem:[%s12] sm:$0x1]
  %v693 = vld [vmem:[%s13] sm:$0x1]
  %v694 = vsel %vm166, %v690, 0.0
  %695 = vadd.xlane.f32.xlu0 %v694
  %v696 = vpop.xlane.xlu0 %695
  %v697 = vsel %vm166, %v691, 0.0
  %698 = vadd.xlane.f32.xlu0 %v697
  %v699 = vpop.xlane.xlu0 %698
  %v700 = vrcp.pop 10.0
  %v701 = vmul.f32 %v696, %v700
  %v702 = vmul.f32 %v699, %v700
  %v703 = vsub.f32 %v690, %v701
  %v704 = vsub.f32 %v691, %v702
  %v705 = vmul.f32 %v703, %v703
  %v706 = vmul.f32 %v704, %v704
  %v707 = vsel %vm166, %v705, 0.0
  %708 = vadd.xlane.f32.xlu0 %v707
  %v709 = vpop.xlane.xlu0 %708
  %v710 = vsel %vm166, %v706, 0.0
  %711 = vadd.xlane.f32.xlu0 %v710
  %v712 = vpop.xlane.xlu0 %711
  %v713 = vmul.f32 %v709, %v700
  %v714 = vmul.f32 %v712, %v700
  %v715 = vadd.f32 %v713, 1e-05
  %v716 = vadd.f32 %v714, 1e-05
  %v717 = vrsqrt.pop %v715
  %v718 = vrsqrt.pop %v716
  %v719 = vmul.f32 %v703, %v717
  %v720 = vmul.f32 %v704, %v718
  %v722 = vlaneseq
  %v723 = vshrl.u32 %v722, 7
  %v724 = vsub.s32 0, %v723
  %v725 = vrot.slane %v692, %v724
  %v727 = vmul.f32 %v719, %v725
  %v728 = vmul.f32 %v720, %v725
  %v730 = vlaneseq
  %v731 = vshrl.u32 %v730, 7
  %v732 = vsub.s32 0, %v731
  %v733 = vrot.slane %v693, %v732
  %v735 = vadd.f32 %v727, %v733
  %v736 = vadd.f32 %v728, %v733
  %v737 = vld [vmem:[%s8] sm:$0xff]
  %v738 = vld [vmem:[%s8 + $0x8] sm:$0x3]
  %v739 = vld [vmem:[%s9] sm:$0x1]
  %v741 = vlaneseq
  %v742 = vshrl.u32 %v741, 7
  %v743 = vsub.s32 0, %v742
  %v744 = vrot.slane %v739, %v743
  %v747 = vsel %vm166, %v735, 0
  %v750 = vsel %vm166, %v736, 0
  %v753 = vsel %vm173, %v738, 0
  %755 = vmatprep.subr.mxu0 0.0
  %756 = vmatpush1.msra.mxu0 %v737
  %757 = vmatprep.subr.mxu0 0.0
  %758 = vmatpush1.msra.mxu0 %v753
  %759 = vmatprep.subr.mxu0 0.0
  %760 = vmatpush1.msra.mxu0 0.0
  %761 = vmatprep.subr.mxu0 0.0
  %762 = vmatpush1.msra.mxu0 0.0
  %763 = vmatprep.subr.mxu0 0.0
  %764 = vmatpush1.msra.mxu0 0.0
  %765 = vmatprep.subr.mxu0 0.0
  %766 = vmatpush1.msra.mxu0 0.0
  %767 = vmatprep.subr.mxu0 0.0
  %768 = vmatpush1.msra.mxu0 0.0
  %769 = vmatprep.subr.mxu0 0.0
  %770 = vmatpush1.msra.mxu0 0.0
  %771 = vmatprep.subr.mxu0 0.0
  %772 = vmatpush1.msra.mxu0 0.0
  %773 = vmatprep.subr.mxu0 0.0
  %774 = vmatpush1.msra.mxu0 0.0
  %775 = vmatprep.subr.mxu0 0.0
  %776 = vmatpush1.msra.mxu0 0.0
  %777 = vmatprep.subr.mxu0 0.0
  %778 = vmatpush1.msra.mxu0 0.0
  %779 = vmatprep.subr.mxu0 0.0
  %780 = vmatpush1.msra.mxu0 0.0
  %781 = vmatprep.subr.mxu0 0.0
  %782 = vmatpush1.msra.mxu0 0.0
  %783 = vmatprep.subr.mxu0 0.0
  %784 = vmatpush1.msra.mxu0 0.0
  %785 = vmatprep.subr.mxu0 0.0
  %786 = vmatpush1.msra.mxu0 0.0
  %787 = vmatprep.subr.mxu0 0.0
  %788 = vmatpush1.msra.mxu0 0.0
  %789 = vmatprep.subr.mxu0 0.0
  %790 = vmatpush1.msra.mxu0 0.0
  %791 = vmatprep.subr.mxu0 0.0
  %792 = vmatpush1.msra.mxu0 0.0
  %793 = vmatprep.subr.mxu0 0.0
  %794 = vmatpush1.msra.mxu0 0.0
  %795 = vmatprep.subr.mxu0 0.0
  %796 = vmatpush1.msra.mxu0 0.0
  %797 = vmatprep.subr.mxu0 0.0
  %798 = vmatpush1.msra.mxu0 0.0
  %799 = vmatprep.subr.mxu0 0.0
  %800 = vmatpush1.msra.mxu0 0.0
  %801 = vmatprep.subr.mxu0 0.0
  %802 = vmatpush1.msra.mxu0 0.0
  %803 = vmatprep.subr.mxu0 0.0
  %804 = vmatpush1.msra.mxu0 0.0
  %805 = vmatprep.subr.mxu0 0.0
  %806 = vmatpush1.msra.mxu0 0.0
  %807 = vmatprep.subr.mxu0 0.0
  %808 = vmatpush1.msra.mxu0 0.0
  %809 = vmatprep.subr.mxu0 0.0
  %810 = vmatpush1.msra.mxu0 0.0
  %811 = vmatprep.subr.mxu0 0.0
  %812 = vmatpush1.msra.mxu0 0.0
  %813 = vmatprep.subr.mxu0 0.0
  %814 = vmatpush1.msra.mxu0 0.0
  %815 = vmatprep.subr.mxu0 0.0
  %816 = vmatpush1.msra.mxu0 0.0
  %817 = vmatprep.subr.mxu0 0.0
  %818 = vmatpush1.msra.mxu0 0.0
  %819 = vmatprep.mubr.f32.mxu0 0.0
  %820 = vmatmul.mubr.f32.gmra.mrb[0].mxu0 %v747
  %v821 = vpop.f32.mrb[0].mxu0
  %v822 = vadd.f32 %v744, %v821
  %v823 = vpop.f32.mrb[0].mxu0
  %824 = vmatprep.mubr.f32.mxu0 0.0
  %825 = vmatmul.mubr.f32.gmra.mrb[0].mxu0 %v750
  %v826 = vpop.f32.mrb[0].mxu0
  %v827 = vadd.f32 %v744, %v826
  %v828 = vpop.f32.mrb[0].mxu0
  %829 = vdwg.mxu0
  %vm830 = vcmp.ge.f32.partialorder %v822, 0.0
  %vm831 = vcmp.ge.f32.partialorder %v827, 0.0
  %v832 = vmul.f32 %v822, 0.2
  %v833 = vmul.f32 %v827, 0.2
  %v834 = vsel %vm830, %v822, %v832
  %v835 = vsel %vm831, %v827, %v833
  %v836 = vld [vmem:[%s10] sm:$0xff]
  %v837 = vld [vmem:[%s10 + $0x8] sm:$0xff]
  %v838 = vld [vmem:[%s10 + $0x10] sm:$0xff]
  %v839 = vld [vmem:[%s10 + $0x18] sm:$0xff]
  %v840 = vld [vmem:[%s11] sm:$0x1]
  %v842 = vlaneseq
  %v843 = vshrl.u32 %v842, 7
  %v844 = vsub.s32 0, %v843
  %v845 = vrot.slane %v840, %v844
  %vm847 = vcmask 261120
  %v849 = vsel %vm847, %v834, 0
  %v852 = vsel %vm847, %v835, 0
  %854 = vmatprep.subr.mxu0 0.0
  %855 = vmatpush1.msra.mxu0 %v836
  %856 = vmatprep.subr.mxu0 0.0
  %857 = vmatpush1.msra.mxu0 %v837
  %858 = vmatprep.subr.mxu0 0.0
  %859 = vmatpush1.msra.mxu0 %v838
  %860 = vmatprep.subr.mxu0 0.0
  %861 = vmatpush1.msra.mxu0 %v839
  %862 = vmatprep.subr.mxu0 0.0
  %863 = vmatpush1.msra.mxu0 0.0
  %864 = vmatprep.subr.mxu0 0.0
  %865 = vmatpush1.msra.mxu0 0.0
  %866 = vmatprep.subr.mxu0 0.0
  %867 = vmatpush1.msra.mxu0 0.0
  %868 = vmatprep.subr.mxu0 0.0
  %869 = vmatpush1.msra.mxu0 0.0
  %870 = vmatprep.subr.mxu0 0.0
  %871 = vmatpush1.msra.mxu0 0.0
  %872 = vmatprep.subr.mxu0 0.0
  %873 = vmatpush1.msra.mxu0 0.0
  %874 = vmatprep.subr.mxu0 0.0
  %875 = vmatpush1.msra.mxu0 0.0
  %876 = vmatprep.subr.mxu0 0.0
  %877 = vmatpush1.msra.mxu0 0.0
  %878 = vmatprep.subr.mxu0 0.0
  %879 = vmatpush1.msra.mxu0 0.0
  %880 = vmatprep.subr.mxu0 0.0
  %881 = vmatpush1.msra.mxu0 0.0
  %882 = vmatprep.subr.mxu0 0.0
  %883 = vmatpush1.msra.mxu0 0.0
  %884 = vmatprep.subr.mxu0 0.0
  %885 = vmatpush1.msra.mxu0 0.0
  %886 = vmatprep.subr.mxu0 0.0
  %887 = vmatpush1.msra.mxu0 0.0
  %888 = vmatprep.subr.mxu0 0.0
  %889 = vmatpush1.msra.mxu0 0.0
  %890 = vmatprep.subr.mxu0 0.0
  %891 = vmatpush1.msra.mxu0 0.0
  %892 = vmatprep.subr.mxu0 0.0
  %893 = vmatpush1.msra.mxu0 0.0
  %894 = vmatprep.subr.mxu0 0.0
  %895 = vmatpush1.msra.mxu0 0.0
  %896 = vmatprep.subr.mxu0 0.0
  %897 = vmatpush1.msra.mxu0 0.0
  %898 = vmatprep.subr.mxu0 0.0
  %899 = vmatpush1.msra.mxu0 0.0
  %900 = vmatprep.subr.mxu0 0.0
  %901 = vmatpush1.msra.mxu0 0.0
  %902 = vmatprep.subr.mxu0 0.0
  %903 = vmatpush1.msra.mxu0 0.0
  %904 = vmatprep.subr.mxu0 0.0
  %905 = vmatpush1.msra.mxu0 0.0
  %906 = vmatprep.subr.mxu0 0.0
  %907 = vmatpush1.msra.mxu0 0.0
  %908 = vmatprep.subr.mxu0 0.0
  %909 = vmatpush1.msra.mxu0 0.0
  %910 = vmatprep.subr.mxu0 0.0
  %911 = vmatpush1.msra.mxu0 0.0
  %912 = vmatprep.subr.mxu0 0.0
  %913 = vmatpush1.msra.mxu0 0.0
  %914 = vmatprep.subr.mxu0 0.0
  %915 = vmatpush1.msra.mxu0 0.0
  %916 = vmatprep.subr.mxu0 0.0
  %917 = vmatpush1.msra.mxu0 0.0
  %918 = vmatprep.mubr.f32.mxu0 0.0
  %919 = vmatmul.mubr.f32.gmra.mrb[0].mxu0 %v849
  %v920 = vpop.f32.mrb[0].mxu0
  %v921 = vadd.f32 %v845, %v920
  %v922 = vpop.f32.mrb[0].mxu0
  %923 = vmatprep.mubr.f32.mxu0 0.0
  %924 = vmatmul.mubr.f32.gmra.mrb[0].mxu0 %v852
  %v925 = vpop.f32.mrb[0].mxu0
  %v926 = vadd.f32 %v845, %v925
  %v927 = vpop.f32.mrb[0].mxu0
  %928 = vdwg.mxu0
  %v929 = vadd.f32 %v735, %v921
  %v930 = vadd.f32 %v736, %v926
  %v931 = vld [vmem:[%s14] sm:$0x1]
  %v932 = vld [vmem:[%s15] sm:$0x1]
  %v933 = vsel %vm166, %v929, 0.0
  %934 = vadd.xlane.f32.xlu0 %v933
  %v935 = vpop.xlane.xlu0 %934
  %v936 = vsel %vm166, %v930, 0.0
  %937 = vadd.xlane.f32.xlu0 %v936
  %v938 = vpop.xlane.xlu0 %937
  %v939 = vmul.f32 %v935, %v700
  %v940 = vmul.f32 %v938, %v700
  %v941 = vsub.f32 %v929, %v939
  %v942 = vsub.f32 %v930, %v940
  %v943 = vmul.f32 %v941, %v941
  %v944 = vmul.f32 %v942, %v942
  %v945 = vsel %vm166, %v943, 0.0
  %946 = vadd.xlane.f32.xlu0 %v945
  %v947 = vpop.xlane.xlu0 %946
  %v948 = vsel %vm166, %v944, 0.0
  %949 = vadd.xlane.f32.xlu0 %v948
  %v950 = vpop.xlane.xlu0 %949
  %v951 = vmul.f32 %v947, %v700
  %v952 = vmul.f32 %v950, %v700
  %v953 = vadd.f32 %v951, 1e-05
  %v954 = vadd.f32 %v952, 1e-05
  %v955 = vrsqrt.pop %v953
  %v956 = vrsqrt.pop %v954
  %v957 = vmul.f32 %v941, %v955
  %v958 = vmul.f32 %v942, %v956
  %v960 = vlaneseq
  %v961 = vshrl.u32 %v960, 7
  %v962 = vsub.s32 0, %v961
  %v963 = vrot.slane %v931, %v962
  %v965 = vmul.f32 %v957, %v963
  %v966 = vmul.f32 %v958, %v963
  %v968 = vlaneseq
  %v969 = vshrl.u32 %v968, 7
  %v970 = vsub.s32 0, %v969
  %v971 = vrot.slane %v932, %v970
  %v973 = vadd.f32 %v965, %v971
  %v974 = vadd.f32 %v966, %v971
  %s975 = scalar_lea.vmem %s4, 16
  %v976 = vld [vmem:[%s975] sm:$0xff]
  %v977 = vld [vmem:[%s975 + $0x8] sm:$0x3]
  %s978 = scalar_lea.vmem %s5, 1
  %v979 = vld [vmem:[%s978] sm:$0x1]
  %v981 = vlaneseq
  %v982 = vshrl.u32 %v981, 7
  %v983 = vsub.s32 0, %v982
  %v984 = vrot.slane %v979, %v983
  %v987 = vsel %vm166, %v973, 0
  %v990 = vsel %vm166, %v974, 0
  %v993 = vsel %vm173, %v977, 0
  %995 = vmatprep.subr.mxu0 0.0
  %996 = vmatpush1.msra.mxu0 %v976
  %997 = vmatprep.subr.mxu0 0.0
  %998 = vmatpush1.msra.mxu0 %v993
  %999 = vmatprep.subr.mxu0 0.0
  %1000 = vmatpush1.msra.mxu0 0.0
  %1001 = vmatprep.subr.mxu0 0.0
  %1002 = vmatpush1.msra.mxu0 0.0
  %1003 = vmatprep.subr.mxu0 0.0
  %1004 = vmatpush1.msra.mxu0 0.0
  %1005 = vmatprep.subr.mxu0 0.0
  %1006 = vmatpush1.msra.mxu0 0.0
  %1007 = vmatprep.subr.mxu0 0.0
  %1008 = vmatpush1.msra.mxu0 0.0
  %1009 = vmatprep.subr.mxu0 0.0
  %1010 = vmatpush1.msra.mxu0 0.0
  %1011 = vmatprep.subr.mxu0 0.0
  %1012 = vmatpush1.msra.mxu0 0.0
  %1013 = vmatprep.subr.mxu0 0.0
  %1014 = vmatpush1.msra.mxu0 0.0
  %1015 = vmatprep.subr.mxu0 0.0
  %1016 = vmatpush1.msra.mxu0 0.0
  %1017 = vmatprep.subr.mxu0 0.0
  %1018 = vmatpush1.msra.mxu0 0.0
  %1019 = vmatprep.subr.mxu0 0.0
  %1020 = vmatpush1.msra.mxu0 0.0
  %1021 = vmatprep.subr.mxu0 0.0
  %1022 = vmatpush1.msra.mxu0 0.0
  %1023 = vmatprep.subr.mxu0 0.0
  %1024 = vmatpush1.msra.mxu0 0.0
  %1025 = vmatprep.subr.mxu0 0.0
  %1026 = vmatpush1.msra.mxu0 0.0
  %1027 = vmatprep.subr.mxu0 0.0
  %1028 = vmatpush1.msra.mxu0 0.0
  %1029 = vmatprep.subr.mxu0 0.0
  %1030 = vmatpush1.msra.mxu0 0.0
  %1031 = vmatprep.subr.mxu0 0.0
  %1032 = vmatpush1.msra.mxu0 0.0
  %1033 = vmatprep.subr.mxu0 0.0
  %1034 = vmatpush1.msra.mxu0 0.0
  %1035 = vmatprep.subr.mxu0 0.0
  %1036 = vmatpush1.msra.mxu0 0.0
  %1037 = vmatprep.subr.mxu0 0.0
  %1038 = vmatpush1.msra.mxu0 0.0
  %1039 = vmatprep.subr.mxu0 0.0
  %1040 = vmatpush1.msra.mxu0 0.0
  %1041 = vmatprep.subr.mxu0 0.0
  %1042 = vmatpush1.msra.mxu0 0.0
  %1043 = vmatprep.subr.mxu0 0.0
  %1044 = vmatpush1.msra.mxu0 0.0
  %1045 = vmatprep.subr.mxu0 0.0
  %1046 = vmatpush1.msra.mxu0 0.0
  %1047 = vmatprep.subr.mxu0 0.0
  %1048 = vmatpush1.msra.mxu0 0.0
  %1049 = vmatprep.subr.mxu0 0.0
  %1050 = vmatpush1.msra.mxu0 0.0
  %1051 = vmatprep.subr.mxu0 0.0
  %1052 = vmatpush1.msra.mxu0 0.0
  %1053 = vmatprep.subr.mxu0 0.0
  %1054 = vmatpush1.msra.mxu0 0.0
  %1055 = vmatprep.subr.mxu0 0.0
  %1056 = vmatpush1.msra.mxu0 0.0
  %1057 = vmatprep.subr.mxu0 0.0
  %1058 = vmatpush1.msra.mxu0 0.0
  %1059 = vmatprep.mubr.f32.mxu0 0.0
  %1060 = vmatmul.mubr.f32.gmra.mrb[0].mxu0 %v987
  %v1061 = vpop.f32.mrb[0].mxu0
  %v1062 = vadd.f32 %v984, %v1061
  %v1063 = vpop.f32.mrb[0].mxu0
  %1064 = vmatprep.mubr.f32.mxu0 0.0
  %1065 = vmatmul.mubr.f32.gmra.mrb[0].mxu0 %v990
  %v1066 = vpop.f32.mrb[0].mxu0
  %v1067 = vadd.f32 %v984, %v1066
  %v1068 = vpop.f32.mrb[0].mxu0
  %1069 = vdwg.mxu0
  %v1070 = vmul.f32 %v1062, 0.31622776
  %v1071 = vmul.f32 %v1067, 0.31622776
  %1073 = vrot.lane.b32.xlu0 %v1062, 118
  %v1074 = vpop.permute.xlu0 %1073
  %v1076 = vsel %vm166, %v1070, 0
  %v1078 = vsel %vm166, %v1074, 0
  %1080 = vmatprep.subr.mxu0 0.0
  %1081 = vmatpush1.xpose.msra.mxu0 %v1078
  %1082 = vmatprep.subr.mxu0 0.0
  %1083 = vmatpush1.xpose.msra.mxu0 0.0
  %1084 = vmatprep.subr.mxu0 0.0
  %1085 = vmatpush1.xpose.msra.mxu0 0.0
  %1086 = vmatprep.subr.mxu0 0.0
  %1087 = vmatpush1.xpose.msra.mxu0 0.0
  %1088 = vmatprep.subr.mxu0 0.0
  %1089 = vmatpush1.xpose.msra.mxu0 0.0
  %1090 = vmatprep.subr.mxu0 0.0
  %1091 = vmatpush1.xpose.msra.mxu0 0.0
  %1092 = vmatprep.subr.mxu0 0.0
  %1093 = vmatpush1.xpose.msra.mxu0 0.0
  %1094 = vmatprep.subr.mxu0 0.0
  %1095 = vmatpush1.xpose.msra.mxu0 0.0
  %1096 = vmatprep.subr.mxu0 0.0
  %1097 = vmatpush1.xpose.msra.mxu0 0.0
  %1098 = vmatprep.subr.mxu0 0.0
  %1099 = vmatpush1.xpose.msra.mxu0 0.0
  %1100 = vmatprep.subr.mxu0 0.0
  %1101 = vmatpush1.xpose.msra.mxu0 0.0
  %1102 = vmatprep.subr.mxu0 0.0
  %1103 = vmatpush1.xpose.msra.mxu0 0.0
  %1104 = vmatprep.subr.mxu0 0.0
  %1105 = vmatpush1.xpose.msra.mxu0 0.0
  %1106 = vmatprep.subr.mxu0 0.0
  %1107 = vmatpush1.xpose.msra.mxu0 0.0
  %1108 = vmatprep.subr.mxu0 0.0
  %1109 = vmatpush1.xpose.msra.mxu0 0.0
  %1110 = vmatprep.subr.mxu0 0.0
  %1111 = vmatpush1.xpose.msra.mxu0 0.0
  %1112 = vmatprep.subr.mxu0 0.0
  %1113 = vmatpush1.xpose.msra.mxu0 0.0
  %1114 = vmatprep.subr.mxu0 0.0
  %1115 = vmatpush1.xpose.msra.mxu0 0.0
  %1116 = vmatprep.subr.mxu0 0.0
  %1117 = vmatpush1.xpose.msra.mxu0 0.0
  %1118 = vmatprep.subr.mxu0 0.0
  %1119 = vmatpush1.xpose.msra.mxu0 0.0
  %1120 = vmatprep.subr.mxu0 0.0
  %1121 = vmatpush1.xpose.msra.mxu0 0.0
  %1122 = vmatprep.subr.mxu0 0.0
  %1123 = vmatpush1.xpose.msra.mxu0 0.0
  %1124 = vmatprep.subr.mxu0 0.0
  %1125 = vmatpush1.xpose.msra.mxu0 0.0
  %1126 = vmatprep.subr.mxu0 0.0
  %1127 = vmatpush1.xpose.msra.mxu0 0.0
  %1128 = vmatprep.subr.mxu0 0.0
  %1129 = vmatpush1.xpose.msra.mxu0 0.0
  %1130 = vmatprep.subr.mxu0 0.0
  %1131 = vmatpush1.xpose.msra.mxu0 0.0
  %1132 = vmatprep.subr.mxu0 0.0
  %1133 = vmatpush1.xpose.msra.mxu0 0.0
  %1134 = vmatprep.subr.mxu0 0.0
  %1135 = vmatpush1.xpose.msra.mxu0 0.0
  %1136 = vmatprep.subr.mxu0 0.0
  %1137 = vmatpush1.xpose.msra.mxu0 0.0
  %1138 = vmatprep.subr.mxu0 0.0
  %1139 = vmatpush1.xpose.msra.mxu0 0.0
  %1140 = vmatprep.subr.mxu0 0.0
  %1141 = vmatpush1.xpose.msra.mxu0 0.0
  %1142 = vmatprep.subr.mxu0 0.0
  %1143 = vmatpush1.xpose.msra.mxu0 0.0
  %1144 = vmatprep.mubr.f32.mxu0 0.0
  %1145 = vmatmul.mubr.f32.gmra.mrb[0].mxu0 %v1076
  %v1146 = vpop.f32.mrb[0].mxu0
  %v1147 = vadd.f32 %v259, %v1146
  %v1148 = vpop.f32.mrb[0].mxu0
  %1149 = vdwg.mxu0
  %1151 = vrot.lane.b32.xlu0 %v1067, 118
  %v1152 = vpop.permute.xlu0 %1151
  %v1154 = vsel %vm166, %v1071, 0
  %v1156 = vsel %vm166, %v1152, 0
  %1158 = vmatprep.subr.mxu0 0.0
  %1159 = vmatpush1.xpose.msra.mxu0 %v1156
  %1160 = vmatprep.subr.mxu0 0.0
  %1161 = vmatpush1.xpose.msra.mxu0 0.0
  %1162 = vmatprep.subr.mxu0 0.0
  %1163 = vmatpush1.xpose.msra.mxu0 0.0
  %1164 = vmatprep.subr.mxu0 0.0
  %1165 = vmatpush1.xpose.msra.mxu0 0.0
  %1166 = vmatprep.subr.mxu0 0.0
  %1167 = vmatpush1.xpose.msra.mxu0 0.0
  %1168 = vmatprep.subr.mxu0 0.0
  %1169 = vmatpush1.xpose.msra.mxu0 0.0
  %1170 = vmatprep.subr.mxu0 0.0
  %1171 = vmatpush1.xpose.msra.mxu0 0.0
  %1172 = vmatprep.subr.mxu0 0.0
  %1173 = vmatpush1.xpose.msra.mxu0 0.0
  %1174 = vmatprep.subr.mxu0 0.0
  %1175 = vmatpush1.xpose.msra.mxu0 0.0
  %1176 = vmatprep.subr.mxu0 0.0
  %1177 = vmatpush1.xpose.msra.mxu0 0.0
  %1178 = vmatprep.subr.mxu0 0.0
  %1179 = vmatpush1.xpose.msra.mxu0 0.0
  %1180 = vmatprep.subr.mxu0 0.0
  %1181 = vmatpush1.xpose.msra.mxu0 0.0
  %1182 = vmatprep.subr.mxu0 0.0
  %1183 = vmatpush1.xpose.msra.mxu0 0.0
  %1184 = vmatprep.subr.mxu0 0.0
  %1185 = vmatpush1.xpose.msra.mxu0 0.0
  %1186 = vmatprep.subr.mxu0 0.0
  %1187 = vmatpush1.xpose.msra.mxu0 0.0
  %1188 = vmatprep.subr.mxu0 0.0
  %1189 = vmatpush1.xpose.msra.mxu0 0.0
  %1190 = vmatprep.subr.mxu0 0.0
  %1191 = vmatpush1.xpose.msra.mxu0 0.0
  %1192 = vmatprep.subr.mxu0 0.0
  %1193 = vmatpush1.xpose.msra.mxu0 0.0
  %1194 = vmatprep.subr.mxu0 0.0
  %1195 = vmatpush1.xpose.msra.mxu0 0.0
  %1196 = vmatprep.subr.mxu0 0.0
  %1197 = vmatpush1.xpose.msra.mxu0 0.0
  %1198 = vmatprep.subr.mxu0 0.0
  %1199 = vmatpush1.xpose.msra.mxu0 0.0
  %1200 = vmatprep.subr.mxu0 0.0
  %1201 = vmatpush1.xpose.msra.mxu0 0.0
  %1202 = vmatprep.subr.mxu0 0.0
  %1203 = vmatpush1.xpose.msra.mxu0 0.0
  %1204 = vmatprep.subr.mxu0 0.0
  %1205 = vmatpush1.xpose.msra.mxu0 0.0
  %1206 = vmatprep.subr.mxu0 0.0
  %1207 = vmatpush1.xpose.msra.mxu0 0.0
  %1208 = vmatprep.subr.mxu0 0.0
  %1209 = vmatpush1.xpose.msra.mxu0 0.0
  %1210 = vmatprep.subr.mxu0 0.0
  %1211 = vmatpush1.xpose.msra.mxu0 0.0
  %1212 = vmatprep.subr.mxu0 0.0
  %1213 = vmatpush1.xpose.msra.mxu0 0.0
  %1214 = vmatprep.subr.mxu0 0.0
  %1215 = vmatpush1.xpose.msra.mxu0 0.0
  %1216 = vmatprep.subr.mxu0 0.0
  %1217 = vmatpush1.xpose.msra.mxu0 0.0
  %1218 = vmatprep.subr.mxu0 0.0
  %1219 = vmatpush1.xpose.msra.mxu0 0.0
  %1220 = vmatprep.subr.mxu0 0.0
  %1221 = vmatpush1.xpose.msra.mxu0 0.0
  %1222 = vmatprep.mubr.f32.mxu0 0.0
  %1223 = vmatmul.mubr.f32.gmra.mrb[0].mxu0 %v1154
  %v1224 = vpop.f32.mrb[0].mxu0
  %v1225 = vadd.f32 %v263, %v1224
  %v1226 = vpop.f32.mrb[0].mxu0
  %1227 = vdwg.mxu0
  %v1228 = vsel %vm422, %v1147, -inf
  %1229 = vmax.xlane.f32.xlu0 %v1228
  %v1230 = vpop.xlane.xlu0 %1229
  %v1231 = vsel %vm422, %v1225, -inf
  %1232 = vmax.xlane.f32.xlu0 %v1231
  %v1233 = vpop.xlane.xlu0 %1232
  %v1234 = vsub.f32 %v1147, %v1230
  %v1235 = vsub.f32 %v1225, %v1233
  %v1236 = vmul.f32 %v1234, 1.442695
  %v1237 = vpow.pop %v1236
  %v1238 = vmul.f32 %v1235, 1.442695
  %v1239 = vpow.pop %v1238
  %v1240 = vsel %vm422, %v1237, 0.0
  %1241 = vadd.xlane.f32.xlu0 %v1240
  %v1242 = vpop.xlane.xlu0 %1241
  %v1243 = vsel %vm422, %v1239, 0.0
  %1244 = vadd.xlane.f32.xlu0 %v1243
  %v1245 = vpop.xlane.xlu0 %1244
  %v1246 = vrcp.pop %v1242
  %v1247 = vrcp.pop %v1245
  %v1248 = vmul.f32 %v1237, %v1246
  %v1249 = vmul.f32 %v1239, %v1247
  %1250 = vrot.lane.b32.xlu0 %v1062, 108
  %v1251 = vpop.permute.xlu0 %1250
  %v1254 = vsel %vm422, %v1248, 0
  %1256 = vmatprep.subr.mxu0 0.0
  %1257 = vmatpush1.msra.mxu0 %v1251
  %1258 = vmatprep.subr.mxu0 0.0
  %1259 = vmatpush1.msra.mxu0 0.0
  %1260 = vmatprep.subr.mxu0 0.0
  %1261 = vmatpush1.msra.mxu0 0.0
  %1262 = vmatprep.subr.mxu0 0.0
  %1263 = vmatpush1.msra.mxu0 0.0
  %1264 = vmatprep.subr.mxu0 0.0
  %1265 = vmatpush1.msra.mxu0 0.0
  %1266 = vmatprep.subr.mxu0 0.0
  %1267 = vmatpush1.msra.mxu0 0.0
  %1268 = vmatprep.subr.mxu0 0.0
  %1269 = vmatpush1.msra.mxu0 0.0
  %1270 = vmatprep.subr.mxu0 0.0
  %1271 = vmatpush1.msra.mxu0 0.0
  %1272 = vmatprep.subr.mxu0 0.0
  %1273 = vmatpush1.msra.mxu0 0.0
  %1274 = vmatprep.subr.mxu0 0.0
  %1275 = vmatpush1.msra.mxu0 0.0
  %1276 = vmatprep.subr.mxu0 0.0
  %1277 = vmatpush1.msra.mxu0 0.0
  %1278 = vmatprep.subr.mxu0 0.0
  %1279 = vmatpush1.msra.mxu0 0.0
  %1280 = vmatprep.subr.mxu0 0.0
  %1281 = vmatpush1.msra.mxu0 0.0
  %1282 = vmatprep.subr.mxu0 0.0
  %1283 = vmatpush1.msra.mxu0 0.0
  %1284 = vmatprep.subr.mxu0 0.0
  %1285 = vmatpush1.msra.mxu0 0.0
  %1286 = vmatprep.subr.mxu0 0.0
  %1287 = vmatpush1.msra.mxu0 0.0
  %1288 = vmatprep.subr.mxu0 0.0
  %1289 = vmatpush1.msra.mxu0 0.0
  %1290 = vmatprep.subr.mxu0 0.0
  %1291 = vmatpush1.msra.mxu0 0.0
  %1292 = vmatprep.subr.mxu0 0.0
  %1293 = vmatpush1.msra.mxu0 0.0
  %1294 = vmatprep.subr.mxu0 0.0
  %1295 = vmatpush1.msra.mxu0 0.0
  %1296 = vmatprep.subr.mxu0 0.0
  %1297 = vmatpush1.msra.mxu0 0.0
  %1298 = vmatprep.subr.mxu0 0.0
  %1299 = vmatpush1.msra.mxu0 0.0
  %1300 = vmatprep.subr.mxu0 0.0
  %1301 = vmatpush1.msra.mxu0 0.0
  %1302 = vmatprep.subr.mxu0 0.0
  %1303 = vmatpush1.msra.mxu0 0.0
  %1304 = vmatprep.subr.mxu0 0.0
  %1305 = vmatpush1.msra.mxu0 0.0
  %1306 = vmatprep.subr.mxu0 0.0
  %1307 = vmatpush1.msra.mxu0 0.0
  %1308 = vmatprep.subr.mxu0 0.0
  %1309 = vmatpush1.msra.mxu0 0.0
  %1310 = vmatprep.subr.mxu0 0.0
  %1311 = vmatpush1.msra.mxu0 0.0
  %1312 = vmatprep.subr.mxu0 0.0
  %1313 = vmatpush1.msra.mxu0 0.0
  %1314 = vmatprep.subr.mxu0 0.0
  %1315 = vmatpush1.msra.mxu0 0.0
  %1316 = vmatprep.subr.mxu0 0.0
  %1317 = vmatpush1.msra.mxu0 0.0
  %1318 = vmatprep.subr.mxu0 0.0
  %1319 = vmatpush1.msra.mxu0 0.0
  %1320 = vmatprep.mubr.f32.mxu0 0.0
  %1321 = vmatmul.mubr.f32.gmra.mrb[0].mxu0 %v1254
  %v1322 = vpop.f32.mrb[0].mxu0
  %v1323 = vadd.f32 0.0, %v1322
  %v1324 = vpop.f32.mrb[0].mxu0
  %1325 = vdwg.mxu0
  %1326 = vrot.lane.b32.xlu0 %v1067, 108
  %v1327 = vpop.permute.xlu0 %1326
  %v1330 = vsel %vm422, %v1249, 0
  %1332 = vmatprep.subr.mxu0 0.0
  %1333 = vmatpush1.msra.mxu0 %v1327
  %1334 = vmatprep.subr.mxu0 0.0
  %1335 = vmatpush1.msra.mxu0 0.0
  %1336 = vmatprep.subr.mxu0 0.0
  %1337 = vmatpush1.msra.mxu0 0.0
  %1338 = vmatprep.subr.mxu0 0.0
  %1339 = vmatpush1.msra.mxu0 0.0
  %1340 = vmatprep.subr.mxu0 0.0
  %1341 = vmatpush1.msra.mxu0 0.0
  %1342 = vmatprep.subr.mxu0 0.0
  %1343 = vmatpush1.msra.mxu0 0.0
  %1344 = vmatprep.subr.mxu0 0.0
  %1345 = vmatpush1.msra.mxu0 0.0
  %1346 = vmatprep.subr.mxu0 0.0
  %1347 = vmatpush1.msra.mxu0 0.0
  %1348 = vmatprep.subr.mxu0 0.0
  %1349 = vmatpush1.msra.mxu0 0.0
  %1350 = vmatprep.subr.mxu0 0.0
  %1351 = vmatpush1.msra.mxu0 0.0
  %1352 = vmatprep.subr.mxu0 0.0
  %1353 = vmatpush1.msra.mxu0 0.0
  %1354 = vmatprep.subr.mxu0 0.0
  %1355 = vmatpush1.msra.mxu0 0.0
  %1356 = vmatprep.subr.mxu0 0.0
  %1357 = vmatpush1.msra.mxu0 0.0
  %1358 = vmatprep.subr.mxu0 0.0
  %1359 = vmatpush1.msra.mxu0 0.0
  %1360 = vmatprep.subr.mxu0 0.0
  %1361 = vmatpush1.msra.mxu0 0.0
  %1362 = vmatprep.subr.mxu0 0.0
  %1363 = vmatpush1.msra.mxu0 0.0
  %1364 = vmatprep.subr.mxu0 0.0
  %1365 = vmatpush1.msra.mxu0 0.0
  %1366 = vmatprep.subr.mxu0 0.0
  %1367 = vmatpush1.msra.mxu0 0.0
  %1368 = vmatprep.subr.mxu0 0.0
  %1369 = vmatpush1.msra.mxu0 0.0
  %1370 = vmatprep.subr.mxu0 0.0
  %1371 = vmatpush1.msra.mxu0 0.0
  %1372 = vmatprep.subr.mxu0 0.0
  %1373 = vmatpush1.msra.mxu0 0.0
  %1374 = vmatprep.subr.mxu0 0.0
  %1375 = vmatpush1.msra.mxu0 0.0
  %1376 = vmatprep.subr.mxu0 0.0
  %1377 = vmatpush1.msra.mxu0 0.0
  %1378 = vmatprep.subr.mxu0 0.0
  %1379 = vmatpush1.msra.mxu0 0.0
  %1380 = vmatprep.subr.mxu0 0.0
  %1381 = vmatpush1.msra.mxu0 0.0
  %1382 = vmatprep.subr.mxu0 0.0
  %1383 = vmatpush1.msra.mxu0 0.0
  %1384 = vmatprep.subr.mxu0 0.0
  %1385 = vmatpush1.msra.mxu0 0.0
  %1386 = vmatprep.subr.mxu0 0.0
  %1387 = vmatpush1.msra.mxu0 0.0
  %1388 = vmatprep.subr.mxu0 0.0
  %1389 = vmatpush1.msra.mxu0 0.0
  %1390 = vmatprep.subr.mxu0 0.0
  %1391 = vmatpush1.msra.mxu0 0.0
  %1392 = vmatprep.subr.mxu0 0.0
  %1393 = vmatpush1.msra.mxu0 0.0
  %1394 = vmatprep.subr.mxu0 0.0
  %1395 = vmatpush1.msra.mxu0 0.0
  %1396 = vmatprep.mubr.f32.mxu0 0.0
  %1397 = vmatmul.mubr.f32.gmra.mrb[0].mxu0 %v1330
  %v1398 = vpop.f32.mrb[0].mxu0
  %v1399 = vadd.f32 0.0, %v1398
  %v1400 = vpop.f32.mrb[0].mxu0
  %1401 = vdwg.mxu0
  %s1402 = scalar_lea.vmem %s6, 16
  %v1403 = vld [vmem:[%s1402] sm:$0xff]
  %v1404 = vld [vmem:[%s1402 + $0x8] sm:$0x3]
  %s1405 = scalar_lea.vmem %s7, 1
  %v1406 = vld [vmem:[%s1405] sm:$0x1]
  %v1408 = vlaneseq
  %v1409 = vshrl.u32 %v1408, 7
  %v1410 = vsub.s32 0, %v1409
  %v1411 = vrot.slane %v1406, %v1410
  %v1414 = vsel %vm166, %v1323, 0
  %v1417 = vsel %vm166, %v1399, 0
  %v1420 = vsel %vm173, %v1404, 0
  %1422 = vmatprep.subr.mxu0 0.0
  %1423 = vmatpush1.msra.mxu0 %v1403
  %1424 = vmatprep.subr.mxu0 0.0
  %1425 = vmatpush1.msra.mxu0 %v1420
  %1426 = vmatprep.subr.mxu0 0.0
  %1427 = vmatpush1.msra.mxu0 0.0
  %1428 = vmatprep.subr.mxu0 0.0
  %1429 = vmatpush1.msra.mxu0 0.0
  %1430 = vmatprep.subr.mxu0 0.0
  %1431 = vmatpush1.msra.mxu0 0.0
  %1432 = vmatprep.subr.mxu0 0.0
  %1433 = vmatpush1.msra.mxu0 0.0
  %1434 = vmatprep.subr.mxu0 0.0
  %1435 = vmatpush1.msra.mxu0 0.0
  %1436 = vmatprep.subr.mxu0 0.0
  %1437 = vmatpush1.msra.mxu0 0.0
  %1438 = vmatprep.subr.mxu0 0.0
  %1439 = vmatpush1.msra.mxu0 0.0
  %1440 = vmatprep.subr.mxu0 0.0
  %1441 = vmatpush1.msra.mxu0 0.0
  %1442 = vmatprep.subr.mxu0 0.0
  %1443 = vmatpush1.msra.mxu0 0.0
  %1444 = vmatprep.subr.mxu0 0.0
  %1445 = vmatpush1.msra.mxu0 0.0
  %1446 = vmatprep.subr.mxu0 0.0
  %1447 = vmatpush1.msra.mxu0 0.0
  %1448 = vmatprep.subr.mxu0 0.0
  %1449 = vmatpush1.msra.mxu0 0.0
  %1450 = vmatprep.subr.mxu0 0.0
  %1451 = vmatpush1.msra.mxu0 0.0
  %1452 = vmatprep.subr.mxu0 0.0
  %1453 = vmatpush1.msra.mxu0 0.0
  %1454 = vmatprep.subr.mxu0 0.0
  %1455 = vmatpush1.msra.mxu0 0.0
  %1456 = vmatprep.subr.mxu0 0.0
  %1457 = vmatpush1.msra.mxu0 0.0
  %1458 = vmatprep.subr.mxu0 0.0
  %1459 = vmatpush1.msra.mxu0 0.0
  %1460 = vmatprep.subr.mxu0 0.0
  %1461 = vmatpush1.msra.mxu0 0.0
  %1462 = vmatprep.subr.mxu0 0.0
  %1463 = vmatpush1.msra.mxu0 0.0
  %1464 = vmatprep.subr.mxu0 0.0
  %1465 = vmatpush1.msra.mxu0 0.0
  %1466 = vmatprep.subr.mxu0 0.0
  %1467 = vmatpush1.msra.mxu0 0.0
  %1468 = vmatprep.subr.mxu0 0.0
  %1469 = vmatpush1.msra.mxu0 0.0
  %1470 = vmatprep.subr.mxu0 0.0
  %1471 = vmatpush1.msra.mxu0 0.0
  %1472 = vmatprep.subr.mxu0 0.0
  %1473 = vmatpush1.msra.mxu0 0.0
  %1474 = vmatprep.subr.mxu0 0.0
  %1475 = vmatpush1.msra.mxu0 0.0
  %1476 = vmatprep.subr.mxu0 0.0
  %1477 = vmatpush1.msra.mxu0 0.0
  %1478 = vmatprep.subr.mxu0 0.0
  %1479 = vmatpush1.msra.mxu0 0.0
  %1480 = vmatprep.subr.mxu0 0.0
  %1481 = vmatpush1.msra.mxu0 0.0
  %1482 = vmatprep.subr.mxu0 0.0
  %1483 = vmatpush1.msra.mxu0 0.0
  %1484 = vmatprep.subr.mxu0 0.0
  %1485 = vmatpush1.msra.mxu0 0.0
  %1486 = vmatprep.mubr.f32.mxu0 0.0
  %1487 = vmatmul.mubr.f32.gmra.mrb[0].mxu0 %v1414
  %v1488 = vpop.f32.mrb[0].mxu0
  %v1489 = vadd.f32 %v1411, %v1488
  %v1490 = vpop.f32.mrb[0].mxu0
  %1491 = vmatprep.mubr.f32.mxu0 0.0
  %1492 = vmatmul.mubr.f32.gmra.mrb[0].mxu0 %v1417
  %v1493 = vpop.f32.mrb[0].mxu0
  %v1494 = vadd.f32 %v1411, %v1493
  %v1495 = vpop.f32.mrb[0].mxu0
  %1496 = vdwg.mxu0
  %v1497 = vadd.f32 %v973, %v1489
  %v1498 = vadd.f32 %v974, %v1494
  %s1499 = scalar_lea.vmem %s12, 1
  %v1500 = vld [vmem:[%s1499] sm:$0x1]
  %s1501 = scalar_lea.vmem %s13, 1
  %v1502 = vld [vmem:[%s1501] sm:$0x1]
  %v1503 = vsel %vm166, %v1497, 0.0
  %1504 = vadd.xlane.f32.xlu0 %v1503
  %v1505 = vpop.xlane.xlu0 %1504
  %v1506 = vsel %vm166, %v1498, 0.0
  %1507 = vadd.xlane.f32.xlu0 %v1506
  %v1508 = vpop.xlane.xlu0 %1507
  %v1509 = vmul.f32 %v1505, %v700
  %v1510 = vmul.f32 %v1508, %v700
  %v1511 = vsub.f32 %v1497, %v1509
  %v1512 = vsub.f32 %v1498, %v1510
  %v1513 = vmul.f32 %v1511, %v1511
  %v1514 = vmul.f32 %v1512, %v1512
  %v1515 = vsel %vm166, %v1513, 0.0
  %1516 = vadd.xlane.f32.xlu0 %v1515
  %v1517 = vpop.xlane.xlu0 %1516
  %v1518 = vsel %vm166, %v1514, 0.0
  %1519 = vadd.xlane.f32.xlu0 %v1518
  %v1520 = vpop.xlane.xlu0 %1519
  %v1521 = vmul.f32 %v1517, %v700
  %v1522 = vmul.f32 %v1520, %v700
  %v1523 = vadd.f32 %v1521, 1e-05
  %v1524 = vadd.f32 %v1522, 1e-05
  %v1525 = vrsqrt.pop %v1523
  %v1526 = vrsqrt.pop %v1524
  %v1527 = vmul.f32 %v1511, %v1525
  %v1528 = vmul.f32 %v1512, %v1526
  %v1530 = vlaneseq
  %v1531 = vshrl.u32 %v1530, 7
  %v1532 = vsub.s32 0, %v1531
  %v1533 = vrot.slane %v1500, %v1532
  %v1535 = vmul.f32 %v1527, %v1533
  %v1536 = vmul.f32 %v1528, %v1533
  %v1538 = vlaneseq
  %v1539 = vshrl.u32 %v1538, 7
  %v1540 = vsub.s32 0, %v1539
  %v1541 = vrot.slane %v1502, %v1540
  %v1543 = vadd.f32 %v1535, %v1541
  %v1544 = vadd.f32 %v1536, %v1541
  %s1545 = scalar_lea.vmem %s8, 16
  %v1546 = vld [vmem:[%s1545] sm:$0xff]
  %v1547 = vld [vmem:[%s1545 + $0x8] sm:$0x3]
  %s1548 = scalar_lea.vmem %s9, 1
  %v1549 = vld [vmem:[%s1548] sm:$0x1]
  %v1551 = vlaneseq
  %v1552 = vshrl.u32 %v1551, 7
  %v1553 = vsub.s32 0, %v1552
  %v1554 = vrot.slane %v1549, %v1553
  %v1557 = vsel %vm166, %v1543, 0
  %v1560 = vsel %vm166, %v1544, 0
  %v1563 = vsel %vm173, %v1547, 0
  %1565 = vmatprep.subr.mxu0 0.0
  %1566 = vmatpush1.msra.mxu0 %v1546
  %1567 = vmatprep.subr.mxu0 0.0
  %1568 = vmatpush1.msra.mxu0 %v1563
  %1569 = vmatprep.subr.mxu0 0.0
  %1570 = vmatpush1.msra.mxu0 0.0
  %1571 = vmatprep.subr.mxu0 0.0
  %1572 = vmatpush1.msra.mxu0 0.0
  %1573 = vmatprep.subr.mxu0 0.0
  %1574 = vmatpush1.msra.mxu0 0.0
  %1575 = vmatprep.subr.mxu0 0.0
  %1576 = vmatpush1.msra.mxu0 0.0
  %1577 = vmatprep.subr.mxu0 0.0
  %1578 = vmatpush1.msra.mxu0 0.0
  %1579 = vmatprep.subr.mxu0 0.0
  %1580 = vmatpush1.msra.mxu0 0.0
  %1581 = vmatprep.subr.mxu0 0.0
  %1582 = vmatpush1.msra.mxu0 0.0
  %1583 = vmatprep.subr.mxu0 0.0
  %1584 = vmatpush1.msra.mxu0 0.0
  %1585 = vmatprep.subr.mxu0 0.0
  %1586 = vmatpush1.msra.mxu0 0.0
  %1587 = vmatprep.subr.mxu0 0.0
  %1588 = vmatpush1.msra.mxu0 0.0
  %1589 = vmatprep.subr.mxu0 0.0
  %1590 = vmatpush1.msra.mxu0 0.0
  %1591 = vmatprep.subr.mxu0 0.0
  %1592 = vmatpush1.msra.mxu0 0.0
  %1593 = vmatprep.subr.mxu0 0.0
  %1594 = vmatpush1.msra.mxu0 0.0
  %1595 = vmatprep.subr.mxu0 0.0
  %1596 = vmatpush1.msra.mxu0 0.0
  %1597 = vmatprep.subr.mxu0 0.0
  %1598 = vmatpush1.msra.mxu0 0.0
  %1599 = vmatprep.subr.mxu0 0.0
  %1600 = vmatpush1.msra.mxu0 0.0
  %1601 = vmatprep.subr.mxu0 0.0
  %1602 = vmatpush1.msra.mxu0 0.0
  %1603 = vmatprep.subr.mxu0 0.0
  %1604 = vmatpush1.msra.mxu0 0.0
  %1605 = vmatprep.subr.mxu0 0.0
  %1606 = vmatpush1.msra.mxu0 0.0
  %1607 = vmatprep.subr.mxu0 0.0
  %1608 = vmatpush1.msra.mxu0 0.0
  %1609 = vmatprep.subr.mxu0 0.0
  %1610 = vmatpush1.msra.mxu0 0.0
  %1611 = vmatprep.subr.mxu0 0.0
  %1612 = vmatpush1.msra.mxu0 0.0
  %1613 = vmatprep.subr.mxu0 0.0
  %1614 = vmatpush1.msra.mxu0 0.0
  %1615 = vmatprep.subr.mxu0 0.0
  %1616 = vmatpush1.msra.mxu0 0.0
  %1617 = vmatprep.subr.mxu0 0.0
  %1618 = vmatpush1.msra.mxu0 0.0
  %1619 = vmatprep.subr.mxu0 0.0
  %1620 = vmatpush1.msra.mxu0 0.0
  %1621 = vmatprep.subr.mxu0 0.0
  %1622 = vmatpush1.msra.mxu0 0.0
  %1623 = vmatprep.subr.mxu0 0.0
  %1624 = vmatpush1.msra.mxu0 0.0
  %1625 = vmatprep.subr.mxu0 0.0
  %1626 = vmatpush1.msra.mxu0 0.0
  %1627 = vmatprep.subr.mxu0 0.0
  %1628 = vmatpush1.msra.mxu0 0.0
  %1629 = vmatprep.mubr.f32.mxu0 0.0
  %1630 = vmatmul.mubr.f32.gmra.mrb[0].mxu0 %v1557
  %v1631 = vpop.f32.mrb[0].mxu0
  %v1632 = vadd.f32 %v1554, %v1631
  %v1633 = vpop.f32.mrb[0].mxu0
  %1634 = vmatprep.mubr.f32.mxu0 0.0
  %1635 = vmatmul.mubr.f32.gmra.mrb[0].mxu0 %v1560
  %v1636 = vpop.f32.mrb[0].mxu0
  %v1637 = vadd.f32 %v1554, %v1636
  %v1638 = vpop.f32.mrb[0].mxu0
  %1639 = vdwg.mxu0
  %vm1640 = vcmp.ge.f32.partialorder %v1632, 0.0
  %vm1641 = vcmp.ge.f32.partialorder %v1637, 0.0
  %v1642 = vmul.f32 %v1632, 0.2
  %v1643 = vmul.f32 %v1637, 0.2
  %v1644 = vsel %vm1640, %v1632, %v1642
  %v1645 = vsel %vm1641, %v1637, %v1643
  %s1646 = scalar_lea.vmem %s10, 32
  %v1647 = vld [vmem:[%s1646] sm:$0xff]
  %v1648 = vld [vmem:[%s1646 + $0x8] sm:$0xff]
  %v1649 = vld [vmem:[%s1646 + $0x10] sm:$0xff]
  %v1650 = vld [vmem:[%s1646 + $0x18] sm:$0xff]
  %s1651 = scalar_lea.vmem %s11, 1
  %v1652 = vld [vmem:[%s1651] sm:$0x1]
  %v1654 = vlaneseq
  %v1655 = vshrl.u32 %v1654, 7
  %v1656 = vsub.s32 0, %v1655
  %v1657 = vrot.slane %v1652, %v1656
  %v1660 = vsel %vm847, %v1644, 0
  %v1663 = vsel %vm847, %v1645, 0
  %1665 = vmatprep.subr.mxu0 0.0
  %1666 = vmatpush1.msra.mxu0 %v1647
  %1667 = vmatprep.subr.mxu0 0.0
  %1668 = vmatpush1.msra.mxu0 %v1648
  %1669 = vmatprep.subr.mxu0 0.0
  %1670 = vmatpush1.msra.mxu0 %v1649
  %1671 = vmatprep.subr.mxu0 0.0
  %1672 = vmatpush1.msra.mxu0 %v1650
  %1673 = vmatprep.subr.mxu0 0.0
  %1674 = vmatpush1.msra.mxu0 0.0
  %1675 = vmatprep.subr.mxu0 0.0
  %1676 = vmatpush1.msra.mxu0 0.0
  %1677 = vmatprep.subr.mxu0 0.0
  %1678 = vmatpush1.msra.mxu0 0.0
  %1679 = vmatprep.subr.mxu0 0.0
  %1680 = vmatpush1.msra.mxu0 0.0
  %1681 = vmatprep.subr.mxu0 0.0
  %1682 = vmatpush1.msra.mxu0 0.0
  %1683 = vmatprep.subr.mxu0 0.0
  %1684 = vmatpush1.msra.mxu0 0.0
  %1685 = vmatprep.subr.mxu0 0.0
  %1686 = vmatpush1.msra.mxu0 0.0
  %1687 = vmatprep.subr.mxu0 0.0
  %1688 = vmatpush1.msra.mxu0 0.0
  %1689 = vmatprep.subr.mxu0 0.0
  %1690 = vmatpush1.msra.mxu0 0.0
  %1691 = vmatprep.subr.mxu0 0.0
  %1692 = vmatpush1.msra.mxu0 0.0
  %1693 = vmatprep.subr.mxu0 0.0
  %1694 = vmatpush1.msra.mxu0 0.0
  %1695 = vmatprep.subr.mxu0 0.0
  %1696 = vmatpush1.msra.mxu0 0.0
  %1697 = vmatprep.subr.mxu0 0.0
  %1698 = vmatpush1.msra.mxu0 0.0
  %1699 = vmatprep.subr.mxu0 0.0
  %1700 = vmatpush1.msra.mxu0 0.0
  %1701 = vmatprep.subr.mxu0 0.0
  %1702 = vmatpush1.msra.mxu0 0.0
  %1703 = vmatprep.subr.mxu0 0.0
  %1704 = vmatpush1.msra.mxu0 0.0
  %1705 = vmatprep.subr.mxu0 0.0
  %1706 = vmatpush1.msra.mxu0 0.0
  %1707 = vmatprep.subr.mxu0 0.0
  %1708 = vmatpush1.msra.mxu0 0.0
  %1709 = vmatprep.subr.mxu0 0.0
  %1710 = vmatpush1.msra.mxu0 0.0
  %1711 = vmatprep.subr.mxu0 0.0
  %1712 = vmatpush1.msra.mxu0 0.0
  %1713 = vmatprep.subr.mxu0 0.0
  %1714 = vmatpush1.msra.mxu0 0.0
  %1715 = vmatprep.subr.mxu0 0.0
  %1716 = vmatpush1.msra.mxu0 0.0
  %1717 = vmatprep.subr.mxu0 0.0
  %1718 = vmatpush1.msra.mxu0 0.0
  %1719 = vmatprep.subr.mxu0 0.0
  %1720 = vmatpush1.msra.mxu0 0.0
  %1721 = vmatprep.subr.mxu0 0.0
  %1722 = vmatpush1.msra.mxu0 0.0
  %1723 = vmatprep.subr.mxu0 0.0
  %1724 = vmatpush1.msra.mxu0 0.0
  %1725 = vmatprep.subr.mxu0 0.0
  %1726 = vmatpush1.msra.mxu0 0.0
  %1727 = vmatprep.subr.mxu0 0.0
  %1728 = vmatpush1.msra.mxu0 0.0
  %1729 = vmatprep.mubr.f32.mxu0 0.0
  %1730 = vmatmul.mubr.f32.gmra.mrb[0].mxu0 %v1660
  %v1731 = vpop.f32.mrb[0].mxu0
  %v1732 = vadd.f32 %v1657, %v1731
  %v1733 = vpop.f32.mrb[0].mxu0
  %1734 = vmatprep.mubr.f32.mxu0 0.0
  %1735 = vmatmul.mubr.f32.gmra.mrb[0].mxu0 %v1663
  %v1736 = vpop.f32.mrb[0].mxu0
  %v1737 = vadd.f32 %v1657, %v1736
  %v1738 = vpop.f32.mrb[0].mxu0
  %1739 = vdwg.mxu0
  %v1740 = vadd.f32 %v1543, %v1732
  %v1741 = vadd.f32 %v1544, %v1737
  %s1742 = scalar_lea.vmem %s14, 1
  %v1743 = vld [vmem:[%s1742] sm:$0x1]
  %s1744 = scalar_lea.vmem %s15, 1
  %v1745 = vld [vmem:[%s1744] sm:$0x1]
  %v1746 = vsel %vm166, %v1740, 0.0
  %1747 = vadd.xlane.f32.xlu0 %v1746
  %v1748 = vpop.xlane.xlu0 %1747
  %v1749 = vsel %vm166, %v1741, 0.0
  %1750 = vadd.xlane.f32.xlu0 %v1749
  %v1751 = vpop.xlane.xlu0 %1750
  %v1752 = vmul.f32 %v1748, %v700
  %v1753 = vmul.f32 %v1751, %v700
  %v1754 = vsub.f32 %v1740, %v1752
  %v1755 = vsub.f32 %v1741, %v1753
  %v1756 = vmul.f32 %v1754, %v1754
  %v1757 = vmul.f32 %v1755, %v1755
  %v1758 = vsel %vm166, %v1756, 0.0
  %1759 = vadd.xlane.f32.xlu0 %v1758
  %v1760 = vpop.xlane.xlu0 %1759
  %v1761 = vsel %vm166, %v1757, 0.0
  %1762 = vadd.xlane.f32.xlu0 %v1761
  %v1763 = vpop.xlane.xlu0 %1762
  %v1764 = vmul.f32 %v1760, %v700
  %v1765 = vmul.f32 %v1763, %v700
  %v1766 = vadd.f32 %v1764, 1e-05
  %v1767 = vadd.f32 %v1765, 1e-05
  %v1768 = vrsqrt.pop %v1766
  %v1769 = vrsqrt.pop %v1767
  %v1770 = vmul.f32 %v1754, %v1768
  %v1771 = vmul.f32 %v1755, %v1769
  %v1773 = vlaneseq
  %v1774 = vshrl.u32 %v1773, 7
  %v1775 = vsub.s32 0, %v1774
  %v1776 = vrot.slane %v1743, %v1775
  %v1778 = vmul.f32 %v1770, %v1776
  %v1779 = vmul.f32 %v1771, %v1776
  %v1781 = vlaneseq
  %v1782 = vshrl.u32 %v1781, 7
  %v1783 = vsub.s32 0, %v1782
  %v1784 = vrot.slane %v1745, %v1783
  %v1786 = vadd.f32 %v1778, %v1784
  %v1787 = vadd.f32 %v1779, %v1784
  %s1788 = scalar_lea.vmem %s4, 32
  %v1789 = vld [vmem:[%s1788] sm:$0xff]
  %v1790 = vld [vmem:[%s1788 + $0x8] sm:$0x3]
  %s1791 = scalar_lea.vmem %s5, 2
  %v1792 = vld [vmem:[%s1791] sm:$0x1]
  %v1794 = vlaneseq
  %v1795 = vshrl.u32 %v1794, 7
  %v1796 = vsub.s32 0, %v1795
  %v1797 = vrot.slane %v1792, %v1796
  %v1800 = vsel %vm166, %v1786, 0
  %v1803 = vsel %vm166, %v1787, 0
  %v1806 = vsel %vm173, %v1790, 0
  %1808 = vmatprep.subr.mxu0 0.0
  %1809 = vmatpush1.msra.mxu0 %v1789
  %1810 = vmatprep.subr.mxu0 0.0
  %1811 = vmatpush1.msra.mxu0 %v1806
  %1812 = vmatprep.subr.mxu0 0.0
  %1813 = vmatpush1.msra.mxu0 0.0
  %1814 = vmatprep.subr.mxu0 0.0
  %1815 = vmatpush1.msra.mxu0 0.0
  %1816 = vmatprep.subr.mxu0 0.0
  %1817 = vmatpush1.msra.mxu0 0.0
  %1818 = vmatprep.subr.mxu0 0.0
  %1819 = vmatpush1.msra.mxu0 0.0
  %1820 = vmatprep.subr.mxu0 0.0
  %1821 = vmatpush1.msra.mxu0 0.0
  %1822 = vmatprep.subr.mxu0 0.0
  %1823 = vmatpush1.msra.mxu0 0.0
  %1824 = vmatprep.subr.mxu0 0.0
  %1825 = vmatpush1.msra.mxu0 0.0
  %1826 = vmatprep.subr.mxu0 0.0
  %1827 = vmatpush1.msra.mxu0 0.0
  %1828 = vmatprep.subr.mxu0 0.0
  %1829 = vmatpush1.msra.mxu0 0.0
  %1830 = vmatprep.subr.mxu0 0.0
  %1831 = vmatpush1.msra.mxu0 0.0
  %1832 = vmatprep.subr.mxu0 0.0
  %1833 = vmatpush1.msra.mxu0 0.0
  %1834 = vmatprep.subr.mxu0 0.0
  %1835 = vmatpush1.msra.mxu0 0.0
  %1836 = vmatprep.subr.mxu0 0.0
  %1837 = vmatpush1.msra.mxu0 0.0
  %1838 = vmatprep.subr.mxu0 0.0
  %1839 = vmatpush1.msra.mxu0 0.0
  %1840 = vmatprep.subr.mxu0 0.0
  %1841 = vmatpush1.msra.mxu0 0.0
  %1842 = vmatprep.subr.mxu0 0.0
  %1843 = vmatpush1.msra.mxu0 0.0
  %1844 = vmatprep.subr.mxu0 0.0
  %1845 = vmatpush1.msra.mxu0 0.0
  %1846 = vmatprep.subr.mxu0 0.0
  %1847 = vmatpush1.msra.mxu0 0.0
  %1848 = vmatprep.subr.mxu0 0.0
  %1849 = vmatpush1.msra.mxu0 0.0
  %1850 = vmatprep.subr.mxu0 0.0
  %1851 = vmatpush1.msra.mxu0 0.0
  %1852 = vmatprep.subr.mxu0 0.0
  %1853 = vmatpush1.msra.mxu0 0.0
  %1854 = vmatprep.subr.mxu0 0.0
  %1855 = vmatpush1.msra.mxu0 0.0
  %1856 = vmatprep.subr.mxu0 0.0
  %1857 = vmatpush1.msra.mxu0 0.0
  %1858 = vmatprep.subr.mxu0 0.0
  %1859 = vmatpush1.msra.mxu0 0.0
  %1860 = vmatprep.subr.mxu0 0.0
  %1861 = vmatpush1.msra.mxu0 0.0
  %1862 = vmatprep.subr.mxu0 0.0
  %1863 = vmatpush1.msra.mxu0 0.0
  %1864 = vmatprep.subr.mxu0 0.0
  %1865 = vmatpush1.msra.mxu0 0.0
  %1866 = vmatprep.subr.mxu0 0.0
  %1867 = vmatpush1.msra.mxu0 0.0
  %1868 = vmatprep.subr.mxu0 0.0
  %1869 = vmatpush1.msra.mxu0 0.0
  %1870 = vmatprep.subr.mxu0 0.0
  %1871 = vmatpush1.msra.mxu0 0.0
  %1872 = vmatprep.mubr.f32.mxu0 0.0
  %1873 = vmatmul.mubr.f32.gmra.mrb[0].mxu0 %v1800
  %v1874 = vpop.f32.mrb[0].mxu0
  %v1875 = vadd.f32 %v1797, %v1874
  %v1876 = vpop.f32.mrb[0].mxu0
  %1877 = vmatprep.mubr.f32.mxu0 0.0
  %1878 = vmatmul.mubr.f32.gmra.mrb[0].mxu0 %v1803
  %v1879 = vpop.f32.mrb[0].mxu0
  %v1880 = vadd.f32 %v1797, %v1879
  %v1881 = vpop.f32.mrb[0].mxu0
  %1882 = vdwg.mxu0
  %v1883 = vmul.f32 %v1875, 0.31622776
  %v1884 = vmul.f32 %v1880, 0.31622776
  %1886 = vrot.lane.b32.xlu0 %v1875, 118
  %v1887 = vpop.permute.xlu0 %1886
  %v1889 = vsel %vm166, %v1883, 0
  %v1891 = vsel %vm166, %v1887, 0
  %1893 = vmatprep.subr.mxu0 0.0
  %1894 = vmatpush1.xpose.msra.mxu0 %v1891
  %1895 = vmatprep.subr.mxu0 0.0
  %1896 = vmatpush1.xpose.msra.mxu0 0.0
  %1897 = vmatprep.subr.mxu0 0.0
  %1898 = vmatpush1.xpose.msra.mxu0 0.0
  %1899 = vmatprep.subr.mxu0 0.0
  %1900 = vmatpush1.xpose.msra.mxu0 0.0
  %1901 = vmatprep.subr.mxu0 0.0
  %1902 = vmatpush1.xpose.msra.mxu0 0.0
  %1903 = vmatprep.subr.mxu0 0.0
  %1904 = vmatpush1.xpose.msra.mxu0 0.0
  %1905 = vmatprep.subr.mxu0 0.0
  %1906 = vmatpush1.xpose.msra.mxu0 0.0
  %1907 = vmatprep.subr.mxu0 0.0
  %1908 = vmatpush1.xpose.msra.mxu0 0.0
  %1909 = vmatprep.subr.mxu0 0.0
  %1910 = vmatpush1.xpose.msra.mxu0 0.0
  %1911 = vmatprep.subr.mxu0 0.0
  %1912 = vmatpush1.xpose.msra.mxu0 0.0
  %1913 = vmatprep.subr.mxu0 0.0
  %1914 = vmatpush1.xpose.msra.mxu0 0.0
  %1915 = vmatprep.subr.mxu0 0.0
  %1916 = vmatpush1.xpose.msra.mxu0 0.0
  %1917 = vmatprep.subr.mxu0 0.0
  %1918 = vmatpush1.xpose.msra.mxu0 0.0
  %1919 = vmatprep.subr.mxu0 0.0
  %1920 = vmatpush1.xpose.msra.mxu0 0.0
  %1921 = vmatprep.subr.mxu0 0.0
  %1922 = vmatpush1.xpose.msra.mxu0 0.0
  %1923 = vmatprep.subr.mxu0 0.0
  %1924 = vmatpush1.xpose.msra.mxu0 0.0
  %1925 = vmatprep.subr.mxu0 0.0
  %1926 = vmatpush1.xpose.msra.mxu0 0.0
  %1927 = vmatprep.subr.mxu0 0.0
  %1928 = vmatpush1.xpose.msra.mxu0 0.0
  %1929 = vmatprep.subr.mxu0 0.0
  %1930 = vmatpush1.xpose.msra.mxu0 0.0
  %1931 = vmatprep.subr.mxu0 0.0
  %1932 = vmatpush1.xpose.msra.mxu0 0.0
  %1933 = vmatprep.subr.mxu0 0.0
  %1934 = vmatpush1.xpose.msra.mxu0 0.0
  %1935 = vmatprep.subr.mxu0 0.0
  %1936 = vmatpush1.xpose.msra.mxu0 0.0
  %1937 = vmatprep.subr.mxu0 0.0
  %1938 = vmatpush1.xpose.msra.mxu0 0.0
  %1939 = vmatprep.subr.mxu0 0.0
  %1940 = vmatpush1.xpose.msra.mxu0 0.0
  %1941 = vmatprep.subr.mxu0 0.0
  %1942 = vmatpush1.xpose.msra.mxu0 0.0
  %1943 = vmatprep.subr.mxu0 0.0
  %1944 = vmatpush1.xpose.msra.mxu0 0.0
  %1945 = vmatprep.subr.mxu0 0.0
  %1946 = vmatpush1.xpose.msra.mxu0 0.0
  %1947 = vmatprep.subr.mxu0 0.0
  %1948 = vmatpush1.xpose.msra.mxu0 0.0
  %1949 = vmatprep.subr.mxu0 0.0
  %1950 = vmatpush1.xpose.msra.mxu0 0.0
  %1951 = vmatprep.subr.mxu0 0.0
  %1952 = vmatpush1.xpose.msra.mxu0 0.0
  %1953 = vmatprep.subr.mxu0 0.0
  %1954 = vmatpush1.xpose.msra.mxu0 0.0
  %1955 = vmatprep.subr.mxu0 0.0
  %1956 = vmatpush1.xpose.msra.mxu0 0.0
  %1957 = vmatprep.mubr.f32.mxu0 0.0
  %1958 = vmatmul.mubr.f32.gmra.mrb[0].mxu0 %v1889
  %v1959 = vpop.f32.mrb[0].mxu0
  %v1960 = vadd.f32 %v259, %v1959
  %v1961 = vpop.f32.mrb[0].mxu0
  %1962 = vdwg.mxu0
  %1964 = vrot.lane.b32.xlu0 %v1880, 118
  %v1965 = vpop.permute.xlu0 %1964
  %v1967 = vsel %vm166, %v1884, 0
  %v1969 = vsel %vm166, %v1965, 0
  %1971 = vmatprep.subr.mxu0 0.0
  %1972 = vmatpush1.xpose.msra.mxu0 %v1969
  %1973 = vmatprep.subr.mxu0 0.0
  %1974 = vmatpush1.xpose.msra.mxu0 0.0
  %1975 = vmatprep.subr.mxu0 0.0
  %1976 = vmatpush1.xpose.msra.mxu0 0.0
  %1977 = vmatprep.subr.mxu0 0.0
  %1978 = vmatpush1.xpose.msra.mxu0 0.0
  %1979 = vmatprep.subr.mxu0 0.0
  %1980 = vmatpush1.xpose.msra.mxu0 0.0
  %1981 = vmatprep.subr.mxu0 0.0
  %1982 = vmatpush1.xpose.msra.mxu0 0.0
  %1983 = vmatprep.subr.mxu0 0.0
  %1984 = vmatpush1.xpose.msra.mxu0 0.0
  %1985 = vmatprep.subr.mxu0 0.0
  %1986 = vmatpush1.xpose.msra.mxu0 0.0
  %1987 = vmatprep.subr.mxu0 0.0
  %1988 = vmatpush1.xpose.msra.mxu0 0.0
  %1989 = vmatprep.subr.mxu0 0.0
  %1990 = vmatpush1.xpose.msra.mxu0 0.0
  %1991 = vmatprep.subr.mxu0 0.0
  %1992 = vmatpush1.xpose.msra.mxu0 0.0
  %1993 = vmatprep.subr.mxu0 0.0
  %1994 = vmatpush1.xpose.msra.mxu0 0.0
  %1995 = vmatprep.subr.mxu0 0.0
  %1996 = vmatpush1.xpose.msra.mxu0 0.0
  %1997 = vmatprep.subr.mxu0 0.0
  %1998 = vmatpush1.xpose.msra.mxu0 0.0
  %1999 = vmatprep.subr.mxu0 0.0
  %2000 = vmatpush1.xpose.msra.mxu0 0.0
  %2001 = vmatprep.subr.mxu0 0.0
  %2002 = vmatpush1.xpose.msra.mxu0 0.0
  %2003 = vmatprep.subr.mxu0 0.0
  %2004 = vmatpush1.xpose.msra.mxu0 0.0
  %2005 = vmatprep.subr.mxu0 0.0
  %2006 = vmatpush1.xpose.msra.mxu0 0.0
  %2007 = vmatprep.subr.mxu0 0.0
  %2008 = vmatpush1.xpose.msra.mxu0 0.0
  %2009 = vmatprep.subr.mxu0 0.0
  %2010 = vmatpush1.xpose.msra.mxu0 0.0
  %2011 = vmatprep.subr.mxu0 0.0
  %2012 = vmatpush1.xpose.msra.mxu0 0.0
  %2013 = vmatprep.subr.mxu0 0.0
  %2014 = vmatpush1.xpose.msra.mxu0 0.0
  %2015 = vmatprep.subr.mxu0 0.0
  %2016 = vmatpush1.xpose.msra.mxu0 0.0
  %2017 = vmatprep.subr.mxu0 0.0
  %2018 = vmatpush1.xpose.msra.mxu0 0.0
  %2019 = vmatprep.subr.mxu0 0.0
  %2020 = vmatpush1.xpose.msra.mxu0 0.0
  %2021 = vmatprep.subr.mxu0 0.0
  %2022 = vmatpush1.xpose.msra.mxu0 0.0
  %2023 = vmatprep.subr.mxu0 0.0
  %2024 = vmatpush1.xpose.msra.mxu0 0.0
  %2025 = vmatprep.subr.mxu0 0.0
  %2026 = vmatpush1.xpose.msra.mxu0 0.0
  %2027 = vmatprep.subr.mxu0 0.0
  %2028 = vmatpush1.xpose.msra.mxu0 0.0
  %2029 = vmatprep.subr.mxu0 0.0
  %2030 = vmatpush1.xpose.msra.mxu0 0.0
  %2031 = vmatprep.subr.mxu0 0.0
  %2032 = vmatpush1.xpose.msra.mxu0 0.0
  %2033 = vmatprep.subr.mxu0 0.0
  %2034 = vmatpush1.xpose.msra.mxu0 0.0
  %2035 = vmatprep.mubr.f32.mxu0 0.0
  %2036 = vmatmul.mubr.f32.gmra.mrb[0].mxu0 %v1967
  %v2037 = vpop.f32.mrb[0].mxu0
  %v2038 = vadd.f32 %v263, %v2037
  %v2039 = vpop.f32.mrb[0].mxu0
  %2040 = vdwg.mxu0
  %v2041 = vsel %vm422, %v1960, -inf
  %2042 = vmax.xlane.f32.xlu0 %v2041
  %v2043 = vpop.xlane.xlu0 %2042
  %v2044 = vsel %vm422, %v2038, -inf
  %2045 = vmax.xlane.f32.xlu0 %v2044
  %v2046 = vpop.xlane.xlu0 %2045
  %v2047 = vsub.f32 %v1960, %v2043
  %v2048 = vsub.f32 %v2038, %v2046
  %v2049 = vmul.f32 %v2047, 1.442695
  %v2050 = vpow.pop %v2049
  %v2051 = vmul.f32 %v2048, 1.442695
  %v2052 = vpow.pop %v2051
  %v2053 = vsel %vm422, %v2050, 0.0
  %2054 = vadd.xlane.f32.xlu0 %v2053
  %v2055 = vpop.xlane.xlu0 %2054
  %v2056 = vsel %vm422, %v2052, 0.0
  %2057 = vadd.xlane.f32.xlu0 %v2056
  %v2058 = vpop.xlane.xlu0 %2057
  %v2059 = vrcp.pop %v2055
  %v2060 = vrcp.pop %v2058
  %v2061 = vmul.f32 %v2050, %v2059
  %v2062 = vmul.f32 %v2052, %v2060
  %2063 = vrot.lane.b32.xlu0 %v1875, 108
  %v2064 = vpop.permute.xlu0 %2063
  %v2067 = vsel %vm422, %v2061, 0
  %2069 = vmatprep.subr.mxu0 0.0
  %2070 = vmatpush1.msra.mxu0 %v2064
  %2071 = vmatprep.subr.mxu0 0.0
  %2072 = vmatpush1.msra.mxu0 0.0
  %2073 = vmatprep.subr.mxu0 0.0
  %2074 = vmatpush1.msra.mxu0 0.0
  %2075 = vmatprep.subr.mxu0 0.0
  %2076 = vmatpush1.msra.mxu0 0.0
  %2077 = vmatprep.subr.mxu0 0.0
  %2078 = vmatpush1.msra.mxu0 0.0
  %2079 = vmatprep.subr.mxu0 0.0
  %2080 = vmatpush1.msra.mxu0 0.0
  %2081 = vmatprep.subr.mxu0 0.0
  %2082 = vmatpush1.msra.mxu0 0.0
  %2083 = vmatprep.subr.mxu0 0.0
  %2084 = vmatpush1.msra.mxu0 0.0
  %2085 = vmatprep.subr.mxu0 0.0
  %2086 = vmatpush1.msra.mxu0 0.0
  %2087 = vmatprep.subr.mxu0 0.0
  %2088 = vmatpush1.msra.mxu0 0.0
  %2089 = vmatprep.subr.mxu0 0.0
  %2090 = vmatpush1.msra.mxu0 0.0
  %2091 = vmatprep.subr.mxu0 0.0
  %2092 = vmatpush1.msra.mxu0 0.0
  %2093 = vmatprep.subr.mxu0 0.0
  %2094 = vmatpush1.msra.mxu0 0.0
  %2095 = vmatprep.subr.mxu0 0.0
  %2096 = vmatpush1.msra.mxu0 0.0
  %2097 = vmatprep.subr.mxu0 0.0
  %2098 = vmatpush1.msra.mxu0 0.0
  %2099 = vmatprep.subr.mxu0 0.0
  %2100 = vmatpush1.msra.mxu0 0.0
  %2101 = vmatprep.subr.mxu0 0.0
  %2102 = vmatpush1.msra.mxu0 0.0
  %2103 = vmatprep.subr.mxu0 0.0
  %2104 = vmatpush1.msra.mxu0 0.0
  %2105 = vmatprep.subr.mxu0 0.0
  %2106 = vmatpush1.msra.mxu0 0.0
  %2107 = vmatprep.subr.mxu0 0.0
  %2108 = vmatpush1.msra.mxu0 0.0
  %2109 = vmatprep.subr.mxu0 0.0
  %2110 = vmatpush1.msra.mxu0 0.0
  %2111 = vmatprep.subr.mxu0 0.0
  %2112 = vmatpush1.msra.mxu0 0.0
  %2113 = vmatprep.subr.mxu0 0.0
  %2114 = vmatpush1.msra.mxu0 0.0
  %2115 = vmatprep.subr.mxu0 0.0
  %2116 = vmatpush1.msra.mxu0 0.0
  %2117 = vmatprep.subr.mxu0 0.0
  %2118 = vmatpush1.msra.mxu0 0.0
  %2119 = vmatprep.subr.mxu0 0.0
  %2120 = vmatpush1.msra.mxu0 0.0
  %2121 = vmatprep.subr.mxu0 0.0
  %2122 = vmatpush1.msra.mxu0 0.0
  %2123 = vmatprep.subr.mxu0 0.0
  %2124 = vmatpush1.msra.mxu0 0.0
  %2125 = vmatprep.subr.mxu0 0.0
  %2126 = vmatpush1.msra.mxu0 0.0
  %2127 = vmatprep.subr.mxu0 0.0
  %2128 = vmatpush1.msra.mxu0 0.0
  %2129 = vmatprep.subr.mxu0 0.0
  %2130 = vmatpush1.msra.mxu0 0.0
  %2131 = vmatprep.subr.mxu0 0.0
  %2132 = vmatpush1.msra.mxu0 0.0
  %2133 = vmatprep.mubr.f32.mxu0 0.0
  %2134 = vmatmul.mubr.f32.gmra.mrb[0].mxu0 %v2067
  %v2135 = vpop.f32.mrb[0].mxu0
  %v2136 = vadd.f32 0.0, %v2135
  %v2137 = vpop.f32.mrb[0].mxu0
  %2138 = vdwg.mxu0
  %2139 = vrot.lane.b32.xlu0 %v1880, 108
  %v2140 = vpop.permute.xlu0 %2139
  %v2143 = vsel %vm422, %v2062, 0
  %2145 = vmatprep.subr.mxu0 0.0
  %2146 = vmatpush1.msra.mxu0 %v2140
  %2147 = vmatprep.subr.mxu0 0.0
  %2148 = vmatpush1.msra.mxu0 0.0
  %2149 = vmatprep.subr.mxu0 0.0
  %2150 = vmatpush1.msra.mxu0 0.0
  %2151 = vmatprep.subr.mxu0 0.0
  %2152 = vmatpush1.msra.mxu0 0.0
  %2153 = vmatprep.subr.mxu0 0.0
  %2154 = vmatpush1.msra.mxu0 0.0
  %2155 = vmatprep.subr.mxu0 0.0
  %2156 = vmatpush1.msra.mxu0 0.0
  %2157 = vmatprep.subr.mxu0 0.0
  %2158 = vmatpush1.msra.mxu0 0.0
  %2159 = vmatprep.subr.mxu0 0.0
  %2160 = vmatpush1.msra.mxu0 0.0
  %2161 = vmatprep.subr.mxu0 0.0
  %2162 = vmatpush1.msra.mxu0 0.0
  %2163 = vmatprep.subr.mxu0 0.0
  %2164 = vmatpush1.msra.mxu0 0.0
  %2165 = vmatprep.subr.mxu0 0.0
  %2166 = vmatpush1.msra.mxu0 0.0
  %2167 = vmatprep.subr.mxu0 0.0
  %2168 = vmatpush1.msra.mxu0 0.0
  %2169 = vmatprep.subr.mxu0 0.0
  %2170 = vmatpush1.msra.mxu0 0.0
  %2171 = vmatprep.subr.mxu0 0.0
  %2172 = vmatpush1.msra.mxu0 0.0
  %2173 = vmatprep.subr.mxu0 0.0
  %2174 = vmatpush1.msra.mxu0 0.0
  %2175 = vmatprep.subr.mxu0 0.0
  %2176 = vmatpush1.msra.mxu0 0.0
  %2177 = vmatprep.subr.mxu0 0.0
  %2178 = vmatpush1.msra.mxu0 0.0
  %2179 = vmatprep.subr.mxu0 0.0
  %2180 = vmatpush1.msra.mxu0 0.0
  %2181 = vmatprep.subr.mxu0 0.0
  %2182 = vmatpush1.msra.mxu0 0.0
  %2183 = vmatprep.subr.mxu0 0.0
  %2184 = vmatpush1.msra.mxu0 0.0
  %2185 = vmatprep.subr.mxu0 0.0
  %2186 = vmatpush1.msra.mxu0 0.0
  %2187 = vmatprep.subr.mxu0 0.0
  %2188 = vmatpush1.msra.mxu0 0.0
  %2189 = vmatprep.subr.mxu0 0.0
  %2190 = vmatpush1.msra.mxu0 0.0
  %2191 = vmatprep.subr.mxu0 0.0
  %2192 = vmatpush1.msra.mxu0 0.0
  %2193 = vmatprep.subr.mxu0 0.0
  %2194 = vmatpush1.msra.mxu0 0.0
  %2195 = vmatprep.subr.mxu0 0.0
  %2196 = vmatpush1.msra.mxu0 0.0
  %2197 = vmatprep.subr.mxu0 0.0
  %2198 = vmatpush1.msra.mxu0 0.0
  %2199 = vmatprep.subr.mxu0 0.0
  %2200 = vmatpush1.msra.mxu0 0.0
  %2201 = vmatprep.subr.mxu0 0.0
  %2202 = vmatpush1.msra.mxu0 0.0
  %2203 = vmatprep.subr.mxu0 0.0
  %2204 = vmatpush1.msra.mxu0 0.0
  %2205 = vmatprep.subr.mxu0 0.0
  %2206 = vmatpush1.msra.mxu0 0.0
  %2207 = vmatprep.subr.mxu0 0.0
  %2208 = vmatpush1.msra.mxu0 0.0
  %2209 = vmatprep.mubr.f32.mxu0 0.0
  %2210 = vmatmul.mubr.f32.gmra.mrb[0].mxu0 %v2143
  %v2211 = vpop.f32.mrb[0].mxu0
  %v2212 = vadd.f32 0.0, %v2211
  %v2213 = vpop.f32.mrb[0].mxu0
  %2214 = vdwg.mxu0
  %s2215 = scalar_lea.vmem %s6, 32
  %v2216 = vld [vmem:[%s2215] sm:$0xff]
  %v2217 = vld [vmem:[%s2215 + $0x8] sm:$0x3]
  %s2218 = scalar_lea.vmem %s7, 2
  %v2219 = vld [vmem:[%s2218] sm:$0x1]
  %v2221 = vlaneseq
  %v2222 = vshrl.u32 %v2221, 7
  %v2223 = vsub.s32 0, %v2222
  %v2224 = vrot.slane %v2219, %v2223
  %v2227 = vsel %vm166, %v2136, 0
  %v2230 = vsel %vm166, %v2212, 0
  %v2233 = vsel %vm173, %v2217, 0
  %2235 = vmatprep.subr.mxu0 0.0
  %2236 = vmatpush1.msra.mxu0 %v2216
  %2237 = vmatprep.subr.mxu0 0.0
  %2238 = vmatpush1.msra.mxu0 %v2233
  %2239 = vmatprep.subr.mxu0 0.0
  %2240 = vmatpush1.msra.mxu0 0.0
  %2241 = vmatprep.subr.mxu0 0.0
  %2242 = vmatpush1.msra.mxu0 0.0
  %2243 = vmatprep.subr.mxu0 0.0
  %2244 = vmatpush1.msra.mxu0 0.0
  %2245 = vmatprep.subr.mxu0 0.0
  %2246 = vmatpush1.msra.mxu0 0.0
  %2247 = vmatprep.subr.mxu0 0.0
  %2248 = vmatpush1.msra.mxu0 0.0
  %2249 = vmatprep.subr.mxu0 0.0
  %2250 = vmatpush1.msra.mxu0 0.0
  %2251 = vmatprep.subr.mxu0 0.0
  %2252 = vmatpush1.msra.mxu0 0.0
  %2253 = vmatprep.subr.mxu0 0.0
  %2254 = vmatpush1.msra.mxu0 0.0
  %2255 = vmatprep.subr.mxu0 0.0
  %2256 = vmatpush1.msra.mxu0 0.0
  %2257 = vmatprep.subr.mxu0 0.0
  %2258 = vmatpush1.msra.mxu0 0.0
  %2259 = vmatprep.subr.mxu0 0.0
  %2260 = vmatpush1.msra.mxu0 0.0
  %2261 = vmatprep.subr.mxu0 0.0
  %2262 = vmatpush1.msra.mxu0 0.0
  %2263 = vmatprep.subr.mxu0 0.0
  %2264 = vmatpush1.msra.mxu0 0.0
  %2265 = vmatprep.subr.mxu0 0.0
  %2266 = vmatpush1.msra.mxu0 0.0
  %2267 = vmatprep.subr.mxu0 0.0
  %2268 = vmatpush1.msra.mxu0 0.0
  %2269 = vmatprep.subr.mxu0 0.0
  %2270 = vmatpush1.msra.mxu0 0.0
  %2271 = vmatprep.subr.mxu0 0.0
  %2272 = vmatpush1.msra.mxu0 0.0
  %2273 = vmatprep.subr.mxu0 0.0
  %2274 = vmatpush1.msra.mxu0 0.0
  %2275 = vmatprep.subr.mxu0 0.0
  %2276 = vmatpush1.msra.mxu0 0.0
  %2277 = vmatprep.subr.mxu0 0.0
  %2278 = vmatpush1.msra.mxu0 0.0
  %2279 = vmatprep.subr.mxu0 0.0
  %2280 = vmatpush1.msra.mxu0 0.0
  %2281 = vmatprep.subr.mxu0 0.0
  %2282 = vmatpush1.msra.mxu0 0.0
  %2283 = vmatprep.subr.mxu0 0.0
  %2284 = vmatpush1.msra.mxu0 0.0
  %2285 = vmatprep.subr.mxu0 0.0
  %2286 = vmatpush1.msra.mxu0 0.0
  %2287 = vmatprep.subr.mxu0 0.0
  %2288 = vmatpush1.msra.mxu0 0.0
  %2289 = vmatprep.subr.mxu0 0.0
  %2290 = vmatpush1.msra.mxu0 0.0
  %2291 = vmatprep.subr.mxu0 0.0
  %2292 = vmatpush1.msra.mxu0 0.0
  %2293 = vmatprep.subr.mxu0 0.0
  %2294 = vmatpush1.msra.mxu0 0.0
  %2295 = vmatprep.subr.mxu0 0.0
  %2296 = vmatpush1.msra.mxu0 0.0
  %2297 = vmatprep.subr.mxu0 0.0
  %2298 = vmatpush1.msra.mxu0 0.0
  %2299 = vmatprep.mubr.f32.mxu0 0.0
  %2300 = vmatmul.mubr.f32.gmra.mrb[0].mxu0 %v2227
  %v2301 = vpop.f32.mrb[0].mxu0
  %v2302 = vadd.f32 %v2224, %v2301
  %v2303 = vpop.f32.mrb[0].mxu0
  %2304 = vmatprep.mubr.f32.mxu0 0.0
  %2305 = vmatmul.mubr.f32.gmra.mrb[0].mxu0 %v2230
  %v2306 = vpop.f32.mrb[0].mxu0
  %v2307 = vadd.f32 %v2224, %v2306
  %v2308 = vpop.f32.mrb[0].mxu0
  %2309 = vdwg.mxu0
  %v2310 = vadd.f32 %v1786, %v2302
  %v2311 = vadd.f32 %v1787, %v2307
  %s2312 = scalar_lea.vmem %s12, 2
  %v2313 = vld [vmem:[%s2312] sm:$0x1]
  %s2314 = scalar_lea.vmem %s13, 2
  %v2315 = vld [vmem:[%s2314] sm:$0x1]
  %v2316 = vsel %vm166, %v2310, 0.0
  %2317 = vadd.xlane.f32.xlu0 %v2316
  %v2318 = vpop.xlane.xlu0 %2317
  %v2319 = vsel %vm166, %v2311, 0.0
  %2320 = vadd.xlane.f32.xlu0 %v2319
  %v2321 = vpop.xlane.xlu0 %2320
  %v2322 = vmul.f32 %v2318, %v700
  %v2323 = vmul.f32 %v2321, %v700
  %v2324 = vsub.f32 %v2310, %v2322
  %v2325 = vsub.f32 %v2311, %v2323
  %v2326 = vmul.f32 %v2324, %v2324
  %v2327 = vmul.f32 %v2325, %v2325
  %v2328 = vsel %vm166, %v2326, 0.0
  %2329 = vadd.xlane.f32.xlu0 %v2328
  %v2330 = vpop.xlane.xlu0 %2329
  %v2331 = vsel %vm166, %v2327, 0.0
  %2332 = vadd.xlane.f32.xlu0 %v2331
  %v2333 = vpop.xlane.xlu0 %2332
  %v2334 = vmul.f32 %v2330, %v700
  %v2335 = vmul.f32 %v2333, %v700
  %v2336 = vadd.f32 %v2334, 1e-05
  %v2337 = vadd.f32 %v2335, 1e-05
  %v2338 = vrsqrt.pop %v2336
  %v2339 = vrsqrt.pop %v2337
  %v2340 = vmul.f32 %v2324, %v2338
  %v2341 = vmul.f32 %v2325, %v2339
  %v2343 = vlaneseq
  %v2344 = vshrl.u32 %v2343, 7
  %v2345 = vsub.s32 0, %v2344
  %v2346 = vrot.slane %v2313, %v2345
  %v2348 = vmul.f32 %v2340, %v2346
  %v2349 = vmul.f32 %v2341, %v2346
  %v2351 = vlaneseq
  %v2352 = vshrl.u32 %v2351, 7
  %v2353 = vsub.s32 0, %v2352
  %v2354 = vrot.slane %v2315, %v2353
  %v2356 = vadd.f32 %v2348, %v2354
  %v2357 = vadd.f32 %v2349, %v2354
  %s2358 = scalar_lea.vmem %s8, 32
  %v2359 = vld [vmem:[%s2358] sm:$0xff]
  %v2360 = vld [vmem:[%s2358 + $0x8] sm:$0x3]
  %s2361 = scalar_lea.vmem %s9, 2
  %v2362 = vld [vmem:[%s2361] sm:$0x1]
  %v2364 = vlaneseq
  %v2365 = vshrl.u32 %v2364, 7
  %v2366 = vsub.s32 0, %v2365
  %v2367 = vrot.slane %v2362, %v2366
  %v2370 = vsel %vm166, %v2356, 0
  %v2373 = vsel %vm166, %v2357, 0
  %v2376 = vsel %vm173, %v2360, 0
  %2378 = vmatprep.subr.mxu0 0.0
  %2379 = vmatpush1.msra.mxu0 %v2359
  %2380 = vmatprep.subr.mxu0 0.0
  %2381 = vmatpush1.msra.mxu0 %v2376
  %2382 = vmatprep.subr.mxu0 0.0
  %2383 = vmatpush1.msra.mxu0 0.0
  %2384 = vmatprep.subr.mxu0 0.0
  %2385 = vmatpush1.msra.mxu0 0.0
  %2386 = vmatprep.subr.mxu0 0.0
  %2387 = vmatpush1.msra.mxu0 0.0
  %2388 = vmatprep.subr.mxu0 0.0
  %2389 = vmatpush1.msra.mxu0 0.0
  %2390 = vmatprep.subr.mxu0 0.0
  %2391 = vmatpush1.msra.mxu0 0.0
  %2392 = vmatprep.subr.mxu0 0.0
  %2393 = vmatpush1.msra.mxu0 0.0
  %2394 = vmatprep.subr.mxu0 0.0
  %2395 = vmatpush1.msra.mxu0 0.0
  %2396 = vmatprep.subr.mxu0 0.0
  %2397 = vmatpush1.msra.mxu0 0.0
  %2398 = vmatprep.subr.mxu0 0.0
  %2399 = vmatpush1.msra.mxu0 0.0
  %2400 = vmatprep.subr.mxu0 0.0
  %2401 = vmatpush1.msra.mxu0 0.0
  %2402 = vmatprep.subr.mxu0 0.0
  %2403 = vmatpush1.msra.mxu0 0.0
  %2404 = vmatprep.subr.mxu0 0.0
  %2405 = vmatpush1.msra.mxu0 0.0
  %2406 = vmatprep.subr.mxu0 0.0
  %2407 = vmatpush1.msra.mxu0 0.0
  %2408 = vmatprep.subr.mxu0 0.0
  %2409 = vmatpush1.msra.mxu0 0.0
  %2410 = vmatprep.subr.mxu0 0.0
  %2411 = vmatpush1.msra.mxu0 0.0
  %2412 = vmatprep.subr.mxu0 0.0
  %2413 = vmatpush1.msra.mxu0 0.0
  %2414 = vmatprep.subr.mxu0 0.0
  %2415 = vmatpush1.msra.mxu0 0.0
  %2416 = vmatprep.subr.mxu0 0.0
  %2417 = vmatpush1.msra.mxu0 0.0
  %2418 = vmatprep.subr.mxu0 0.0
  %2419 = vmatpush1.msra.mxu0 0.0
  %2420 = vmatprep.subr.mxu0 0.0
  %2421 = vmatpush1.msra.mxu0 0.0
  %2422 = vmatprep.subr.mxu0 0.0
  %2423 = vmatpush1.msra.mxu0 0.0
  %2424 = vmatprep.subr.mxu0 0.0
  %2425 = vmatpush1.msra.mxu0 0.0
  %2426 = vmatprep.subr.mxu0 0.0
  %2427 = vmatpush1.msra.mxu0 0.0
  %2428 = vmatprep.subr.mxu0 0.0
  %2429 = vmatpush1.msra.mxu0 0.0
  %2430 = vmatprep.subr.mxu0 0.0
  %2431 = vmatpush1.msra.mxu0 0.0
  %2432 = vmatprep.subr.mxu0 0.0
  %2433 = vmatpush1.msra.mxu0 0.0
  %2434 = vmatprep.subr.mxu0 0.0
  %2435 = vmatpush1.msra.mxu0 0.0
  %2436 = vmatprep.subr.mxu0 0.0
  %2437 = vmatpush1.msra.mxu0 0.0
  %2438 = vmatprep.subr.mxu0 0.0
  %2439 = vmatpush1.msra.mxu0 0.0
  %2440 = vmatprep.subr.mxu0 0.0
  %2441 = vmatpush1.msra.mxu0 0.0
  %2442 = vmatprep.mubr.f32.mxu0 0.0
  %2443 = vmatmul.mubr.f32.gmra.mrb[0].mxu0 %v2370
  %v2444 = vpop.f32.mrb[0].mxu0
  %v2445 = vadd.f32 %v2367, %v2444
  %v2446 = vpop.f32.mrb[0].mxu0
  %2447 = vmatprep.mubr.f32.mxu0 0.0
  %2448 = vmatmul.mubr.f32.gmra.mrb[0].mxu0 %v2373
  %v2449 = vpop.f32.mrb[0].mxu0
  %v2450 = vadd.f32 %v2367, %v2449
  %v2451 = vpop.f32.mrb[0].mxu0
  %2452 = vdwg.mxu0
  %vm2453 = vcmp.ge.f32.partialorder %v2445, 0.0
  %vm2454 = vcmp.ge.f32.partialorder %v2450, 0.0
  %v2455 = vmul.f32 %v2445, 0.2
  %v2456 = vmul.f32 %v2450, 0.2
  %v2457 = vsel %vm2453, %v2445, %v2455
  %v2458 = vsel %vm2454, %v2450, %v2456
  %s2459 = scalar_lea.vmem %s10, 64
  %v2460 = vld [vmem:[%s2459] sm:$0xff]
  %v2461 = vld [vmem:[%s2459 + $0x8] sm:$0xff]
  %v2462 = vld [vmem:[%s2459 + $0x10] sm:$0xff]
  %v2463 = vld [vmem:[%s2459 + $0x18] sm:$0xff]
  %s2464 = scalar_lea.vmem %s11, 2
  %v2465 = vld [vmem:[%s2464] sm:$0x1]
  %v2467 = vlaneseq
  %v2468 = vshrl.u32 %v2467, 7
  %v2469 = vsub.s32 0, %v2468
  %v2470 = vrot.slane %v2465, %v2469
  %v2473 = vsel %vm847, %v2457, 0
  %v2476 = vsel %vm847, %v2458, 0
  %2478 = vmatprep.subr.mxu0 0.0
  %2479 = vmatpush1.msra.mxu0 %v2460
  %2480 = vmatprep.subr.mxu0 0.0
  %2481 = vmatpush1.msra.mxu0 %v2461
  %2482 = vmatprep.subr.mxu0 0.0
  %2483 = vmatpush1.msra.mxu0 %v2462
  %2484 = vmatprep.subr.mxu0 0.0
  %2485 = vmatpush1.msra.mxu0 %v2463
  %2486 = vmatprep.subr.mxu0 0.0
  %2487 = vmatpush1.msra.mxu0 0.0
  %2488 = vmatprep.subr.mxu0 0.0
  %2489 = vmatpush1.msra.mxu0 0.0
  %2490 = vmatprep.subr.mxu0 0.0
  %2491 = vmatpush1.msra.mxu0 0.0
  %2492 = vmatprep.subr.mxu0 0.0
  %2493 = vmatpush1.msra.mxu0 0.0
  %2494 = vmatprep.subr.mxu0 0.0
  %2495 = vmatpush1.msra.mxu0 0.0
  %2496 = vmatprep.subr.mxu0 0.0
  %2497 = vmatpush1.msra.mxu0 0.0
  %2498 = vmatprep.subr.mxu0 0.0
  %2499 = vmatpush1.msra.mxu0 0.0
  %2500 = vmatprep.subr.mxu0 0.0
  %2501 = vmatpush1.msra.mxu0 0.0
  %2502 = vmatprep.subr.mxu0 0.0
  %2503 = vmatpush1.msra.mxu0 0.0
  %2504 = vmatprep.subr.mxu0 0.0
  %2505 = vmatpush1.msra.mxu0 0.0
  %2506 = vmatprep.subr.mxu0 0.0
  %2507 = vmatpush1.msra.mxu0 0.0
  %2508 = vmatprep.subr.mxu0 0.0
  %2509 = vmatpush1.msra.mxu0 0.0
  %2510 = vmatprep.subr.mxu0 0.0
  %2511 = vmatpush1.msra.mxu0 0.0
  %2512 = vmatprep.subr.mxu0 0.0
  %2513 = vmatpush1.msra.mxu0 0.0
  %2514 = vmatprep.subr.mxu0 0.0
  %2515 = vmatpush1.msra.mxu0 0.0
  %2516 = vmatprep.subr.mxu0 0.0
  %2517 = vmatpush1.msra.mxu0 0.0
  %2518 = vmatprep.subr.mxu0 0.0
  %2519 = vmatpush1.msra.mxu0 0.0
  %2520 = vmatprep.subr.mxu0 0.0
  %2521 = vmatpush1.msra.mxu0 0.0
  %2522 = vmatprep.subr.mxu0 0.0
  %2523 = vmatpush1.msra.mxu0 0.0
  %2524 = vmatprep.subr.mxu0 0.0
  %2525 = vmatpush1.msra.mxu0 0.0
  %2526 = vmatprep.subr.mxu0 0.0
  %2527 = vmatpush1.msra.mxu0 0.0
  %2528 = vmatprep.subr.mxu0 0.0
  %2529 = vmatpush1.msra.mxu0 0.0
  %2530 = vmatprep.subr.mxu0 0.0
  %2531 = vmatpush1.msra.mxu0 0.0
  %2532 = vmatprep.subr.mxu0 0.0
  %2533 = vmatpush1.msra.mxu0 0.0
  %2534 = vmatprep.subr.mxu0 0.0
  %2535 = vmatpush1.msra.mxu0 0.0
  %2536 = vmatprep.subr.mxu0 0.0
  %2537 = vmatpush1.msra.mxu0 0.0
  %2538 = vmatprep.subr.mxu0 0.0
  %2539 = vmatpush1.msra.mxu0 0.0
  %2540 = vmatprep.subr.mxu0 0.0
  %2541 = vmatpush1.msra.mxu0 0.0
  %2542 = vmatprep.mubr.f32.mxu0 0.0
  %2543 = vmatmul.mubr.f32.gmra.mrb[0].mxu0 %v2473
  %v2544 = vpop.f32.mrb[0].mxu0
  %v2545 = vadd.f32 %v2470, %v2544
  %v2546 = vpop.f32.mrb[0].mxu0
  %2547 = vmatprep.mubr.f32.mxu0 0.0
  %2548 = vmatmul.mubr.f32.gmra.mrb[0].mxu0 %v2476
  %v2549 = vpop.f32.mrb[0].mxu0
  %v2550 = vadd.f32 %v2470, %v2549
  %v2551 = vpop.f32.mrb[0].mxu0
  %2552 = vdwg.mxu0
  %v2553 = vadd.f32 %v2356, %v2545
  %v2554 = vadd.f32 %v2357, %v2550
  %s2555 = scalar_lea.vmem %s14, 2
  %v2556 = vld [vmem:[%s2555] sm:$0x1]
  %s2557 = scalar_lea.vmem %s15, 2
  %v2558 = vld [vmem:[%s2557] sm:$0x1]
  %v2559 = vsel %vm166, %v2553, 0.0
  %2560 = vadd.xlane.f32.xlu0 %v2559
  %v2561 = vpop.xlane.xlu0 %2560
  %v2562 = vsel %vm166, %v2554, 0.0
  %2563 = vadd.xlane.f32.xlu0 %v2562
  %v2564 = vpop.xlane.xlu0 %2563
  %v2565 = vmul.f32 %v2561, %v700
  %v2566 = vmul.f32 %v2564, %v700
  %v2567 = vsub.f32 %v2553, %v2565
  %v2568 = vsub.f32 %v2554, %v2566
  %v2569 = vmul.f32 %v2567, %v2567
  %v2570 = vmul.f32 %v2568, %v2568
  %v2571 = vsel %vm166, %v2569, 0.0
  %2572 = vadd.xlane.f32.xlu0 %v2571
  %v2573 = vpop.xlane.xlu0 %2572
  %v2574 = vsel %vm166, %v2570, 0.0
  %2575 = vadd.xlane.f32.xlu0 %v2574
  %v2576 = vpop.xlane.xlu0 %2575
  %v2577 = vmul.f32 %v2573, %v700
  %v2578 = vmul.f32 %v2576, %v700
  %v2579 = vadd.f32 %v2577, 1e-05
  %v2580 = vadd.f32 %v2578, 1e-05
  %v2581 = vrsqrt.pop %v2579
  %v2582 = vrsqrt.pop %v2580
  %v2583 = vmul.f32 %v2567, %v2581
  %v2584 = vmul.f32 %v2568, %v2582
  %v2586 = vlaneseq
  %v2587 = vshrl.u32 %v2586, 7
  %v2588 = vsub.s32 0, %v2587
  %v2589 = vrot.slane %v2556, %v2588
  %v2591 = vmul.f32 %v2583, %v2589
  %v2592 = vmul.f32 %v2584, %v2589
  %v2594 = vlaneseq
  %v2595 = vshrl.u32 %v2594, 7
  %v2596 = vsub.s32 0, %v2595
  %v2597 = vrot.slane %v2558, %v2596
  %v2599 = vadd.f32 %v2591, %v2597
  %v2600 = vadd.f32 %v2592, %v2597
  %v2601 = vld [vmem:[%s16] sm:$0xff]
  %v2602 = vld [vmem:[%s16 + $0x8] sm:$0x3]
  %v2603 = vld [vmem:[%s17] sm:$0x1]
  %v2605 = vlaneseq
  %v2606 = vshrl.u32 %v2605, 7
  %v2607 = vsub.s32 0, %v2606
  %v2608 = vrot.slane %v2603, %v2607
  %v2611 = vsel %vm166, %v2599, 0
  %v2614 = vsel %vm166, %v2600, 0
  %v2617 = vsel %vm173, %v2602, 0
  %2619 = vmatprep.subr.mxu0 0.0
  %2620 = vmatpush1.msra.mxu0 %v2601
  %2621 = vmatprep.subr.mxu0 0.0
  %2622 = vmatpush1.msra.mxu0 %v2617
  %2623 = vmatprep.subr.mxu0 0.0
  %2624 = vmatpush1.msra.mxu0 0.0
  %2625 = vmatprep.subr.mxu0 0.0
  %2626 = vmatpush1.msra.mxu0 0.0
  %2627 = vmatprep.subr.mxu0 0.0
  %2628 = vmatpush1.msra.mxu0 0.0
  %2629 = vmatprep.subr.mxu0 0.0
  %2630 = vmatpush1.msra.mxu0 0.0
  %2631 = vmatprep.subr.mxu0 0.0
  %2632 = vmatpush1.msra.mxu0 0.0
  %2633 = vmatprep.subr.mxu0 0.0
  %2634 = vmatpush1.msra.mxu0 0.0
  %2635 = vmatprep.subr.mxu0 0.0
  %2636 = vmatpush1.msra.mxu0 0.0
  %2637 = vmatprep.subr.mxu0 0.0
  %2638 = vmatpush1.msra.mxu0 0.0
  %2639 = vmatprep.subr.mxu0 0.0
  %2640 = vmatpush1.msra.mxu0 0.0
  %2641 = vmatprep.subr.mxu0 0.0
  %2642 = vmatpush1.msra.mxu0 0.0
  %2643 = vmatprep.subr.mxu0 0.0
  %2644 = vmatpush1.msra.mxu0 0.0
  %2645 = vmatprep.subr.mxu0 0.0
  %2646 = vmatpush1.msra.mxu0 0.0
  %2647 = vmatprep.subr.mxu0 0.0
  %2648 = vmatpush1.msra.mxu0 0.0
  %2649 = vmatprep.subr.mxu0 0.0
  %2650 = vmatpush1.msra.mxu0 0.0
  %2651 = vmatprep.subr.mxu0 0.0
  %2652 = vmatpush1.msra.mxu0 0.0
  %2653 = vmatprep.subr.mxu0 0.0
  %2654 = vmatpush1.msra.mxu0 0.0
  %2655 = vmatprep.subr.mxu0 0.0
  %2656 = vmatpush1.msra.mxu0 0.0
  %2657 = vmatprep.subr.mxu0 0.0
  %2658 = vmatpush1.msra.mxu0 0.0
  %2659 = vmatprep.subr.mxu0 0.0
  %2660 = vmatpush1.msra.mxu0 0.0
  %2661 = vmatprep.subr.mxu0 0.0
  %2662 = vmatpush1.msra.mxu0 0.0
  %2663 = vmatprep.subr.mxu0 0.0
  %2664 = vmatpush1.msra.mxu0 0.0
  %2665 = vmatprep.subr.mxu0 0.0
  %2666 = vmatpush1.msra.mxu0 0.0
  %2667 = vmatprep.subr.mxu0 0.0
  %2668 = vmatpush1.msra.mxu0 0.0
  %2669 = vmatprep.subr.mxu0 0.0
  %2670 = vmatpush1.msra.mxu0 0.0
  %2671 = vmatprep.subr.mxu0 0.0
  %2672 = vmatpush1.msra.mxu0 0.0
  %2673 = vmatprep.subr.mxu0 0.0
  %2674 = vmatpush1.msra.mxu0 0.0
  %2675 = vmatprep.subr.mxu0 0.0
  %2676 = vmatpush1.msra.mxu0 0.0
  %2677 = vmatprep.subr.mxu0 0.0
  %2678 = vmatpush1.msra.mxu0 0.0
  %2679 = vmatprep.subr.mxu0 0.0
  %2680 = vmatpush1.msra.mxu0 0.0
  %2681 = vmatprep.subr.mxu0 0.0
  %2682 = vmatpush1.msra.mxu0 0.0
  %2683 = vmatprep.mubr.f32.mxu0 0.0
  %2684 = vmatmul.mubr.f32.gmra.mrb[0].mxu0 %v2611
  %v2685 = vpop.f32.mrb[0].mxu0
  %v2686 = vadd.f32 %v2608, %v2685
  %v2687 = vpop.f32.mrb[0].mxu0
  %2688 = vmatprep.mubr.f32.mxu0 0.0
  %2689 = vmatmul.mubr.f32.gmra.mrb[0].mxu0 %v2614
  %v2690 = vpop.f32.mrb[0].mxu0
  %v2691 = vadd.f32 %v2608, %v2690
  %v2692 = vpop.f32.mrb[0].mxu0
  %2693 = vdwg.mxu0
  %2694 = vst.msk [vmem:[%s18] sm:$0xff] %vm71, %v2686
  %2695 = vst.msk [vmem:[%s18 + $0x8] sm:$0xff] %vm71, %v2691
  // Predicated region
  $region74: #{tpu_custom_call.1} parent=0 // pred_check
    _
  $region75: #{tpu_custom_call.1} parent=0 // pred_check_branch
    %2697 = sbr.rel (0) target = $region77
  $region76: #{tpu_custom_call.1} parent=0 // pred_region
    _
  $region77: #{tpu_custom_call.1} parent=0 // pred_fallthru
    _
  // Predicated region
  $region78: #{tpu_custom_call.1} parent=0 // pred_check
    _
  $region79: #{tpu_custom_call.1} parent=0 // pred_check_branch
    %2699 = sbr.rel (0) target = $region81
  $region80: #{tpu_custom_call.1} parent=0 // pred_region
    _
  $region81: #{tpu_custom_call.1} parent=0 // pred_fallthru
    _

</llo_original>
